<compile_context>
chip_gen: v5e
topology: v5e:2x2
jax: 0.10.0
libtpu: 0.0.40
codegen_flags: <defaults>
</compile_context>

<pallas_src>
import functools
import math

import jax
import jax.numpy as jnp
from jax.experimental import pallas as pl
from jax.experimental.pallas import tpu as pltpu

# ----------------------- synthetic config (stands in for cfg) ----------------
IN_DIM = 16                   # in_dim
NUM_HEADS = 2                 # cfg.MODEL.GRID_ATTENTION.DIM_REDUCE_FACTOR
PROJ_DIM = IN_DIM // NUM_HEADS
MAX_FRAME_COUNT = 4           # cfg.INPUT.MAX_FRAME_COUNT
H_MAX = 8                     # cfg.INPUT.MAX_SIZE_TRAIN // stride
W_MAX = 8
POSITIONAL_ENCODING = "LearnedRelative"   # or "Sinusoidal"

# example sizes
N, T, H, W = 2, 3, 8, 8


# ------------------------------- Pallas kernel --------------------------------
def _grid_attn_fused_kernel(x2_ref, w2_ref, rel_ref, sel_ref, out_ref, *,
                            nh, pd, K):
    # x2  : (1, 2*Cin+1, THW)   [xq ; xk ; ones] channels-first slab, THW lanes
    # w2  : (2*Cin, 2*Cin+1)    blockdiag(wq, wk) with the bias column appended
    # rel : (1, Cin, K, THW)    temporal + spatial relative embeddings,
    #                           self-exclusion / per-query shift baked in
    # sel : (THW, K*THW)        0/1 key selection matrix (time / row / col)
    # out : (1, nh, K, THW)     softmax-ed attention weights
    cin = nh * pd
    thw = x2_ref.shape[-1]

    # ---- fused 1x1x1 Conv3d projections: ONE MXU push (biases folded) --------
    proj = jnp.dot(w2_ref[...], x2_ref[0],
                   preferred_element_type=jnp.float32)          # (2*Cin, THW)
    pk = proj[cin:]                                             # (Cin, THW)

    # ---- criss-cross key broadcast for ALL heads / ALL K key groups at once --
    kbro = jnp.dot(pk, sel_ref[...],
                   preferred_element_type=jnp.float32)          # (Cin, K*THW)
    # one lane->sublane relayout per sample (was a transpose per head before)
    kbro = kbro.reshape(cin, K, thw)                            # (Cin, K, THW)

    # ---- per-head energies, accumulated over the pd contraction --------------
    # already in the final K ordering (time | h-excl-self | w-excl-self), so no
    # concatenate / where-masks / transposes are needed.
    for m in range(nh):
        energy = None
        for c in range(pd):
            cf = m * pd + c
            q_c = proj[cf:cf + 1]                               # (1, THW) query channel
            term = q_c * (kbro[cf] + rel_ref[0, cf])            # (K, THW)
            energy = term if energy is None else energy + term

        # ---- softmax over K on the lane-dense slab; one wide store per head --
        mx = jnp.max(energy, axis=0, keepdims=True)
        p = jnp.exp(energy - mx)
        inv = pl.reciprocal(jnp.sum(p, axis=0, keepdims=True), approx=False)
        out_ref[0, m] = p * inv


def _grid_attention(x2, w2, rel, sel, *, nh, K):
    n, c2, thw = x2.shape
    cin = rel.shape[1]
    pd = cin // nh
    kernel = functools.partial(_grid_attn_fused_kernel, nh=nh, pd=pd, K=K)
    return pl.pallas_call(
        kernel,
        out_shape=jax.ShapeDtypeStruct((n, nh, K, thw), jnp.float32),
        grid_spec=pltpu.PrefetchScalarGridSpec(
            num_scalar_prefetch=0,
            grid=(n,),            # one step per sample; parallel -> v7x megacore
            in_specs=[
                pl.BlockSpec((1, c2, thw), lambda b: (b, 0, 0)),
                pl.BlockSpec((2 * cin, c2), lambda b: (0, 0)),
                pl.BlockSpec((1, cin, K, thw), lambda b: (b, 0, 0, 0)),
                pl.BlockSpec((thw, K * thw), lambda b: (0, 0)),
            ],
            out_specs=pl.BlockSpec((1, nh, K, thw), lambda b: (b, 0, 0, 0)),
        ),
        compiler_params=pltpu.CompilerParams(
            dimension_semantics=("parallel",)),
    )(x2, w2, rel, sel)


# ------------------------------- glue / module -------------------------------
def _sinusoidal_pe(max_len, d_model):
    position = jnp.arange(max_len, dtype=jnp.float32)[:, None]
    div_term = jnp.exp(
        jnp.arange(0, d_model, 2, dtype=jnp.float32) * (-math.log(100.0) / d_model)
    )
    pe = jnp.zeros((max_len, d_model), jnp.float32)
    pe = pe.at[:, 0::2].set(jnp.sin(position * div_term))
    pe = pe.at[:, 1::2].set(jnp.cos(position * div_term))
    return pe


def init_params(rng):
    ks = jax.random.split(rng, 7)
    params = {
        # conv weights stored as (Cout, Cin) for the in-kernel W @ x matmul
        "wq": 0.1 * jax.random.normal(ks[0], (IN_DIM, IN_DIM), jnp.float32),
        "bq": 0.1 * jax.random.normal(ks[1], (IN_DIM,), jnp.float32),
        "wk": 0.1 * jax.random.normal(ks[2], (IN_DIM, IN_DIM), jnp.float32),
        "bk": 0.1 * jax.random.normal(ks[3], (IN_DIM,), jnp.float32),
        # EMBEDDING_INITIALIZATION == 'Normal'
        "x_embeddings": jax.random.normal(ks[4], (2 * W_MAX - 1, PROJ_DIM), jnp.float32),
        "y_embeddings": jax.random.normal(ks[5], (2 * H_MAX - 1, PROJ_DIM), jnp.float32),
    }
    if POSITIONAL_ENCODING == "Sinusoidal":
        params["t_emb_pe"] = _sinusoidal_pe(2 * MAX_FRAME_COUNT - 1, PROJ_DIM)
    else:  # 'LearnedRelative'
        params["t_embeddings"] = jax.random.normal(
            ks[6], (2 * MAX_FRAME_COUNT - 1, PROJ_DIM), jnp.float32
        )
    return params


def grid_attention_weight_forward(params, query, key, frm_indices):
    """query, key: (n, c, t, h, w) float32 (PyTorch NCDHW).  frm_indices: (n, t).
    Returns attn: (n, num_heads, t+h+w-2, t, h, w) float32."""
    n, c, t, h, w = query.shape
    assert c == IN_DIM and c % NUM_HEADS == 0 and h <= H_MAX and w <= W_MAX
    nh = NUM_HEADS
    pd = c // nh
    hw = h * w
    thw = t * hw
    K = t + h + w - 2
    assert frm_indices.shape == (n, t)

    # torch does query.float()/key.float(); projection is fused in-kernel, so
    # NCDHW only needs a reshape.  Biases are folded via a trailing ones row.
    xq = query.astype(jnp.float32).reshape(n, c, thw)
    xk = key.astype(jnp.float32).reshape(n, c, thw)
    ones = jnp.ones((n, 1, thw), jnp.float32)
    x2 = jnp.concatenate([xq, xk, ones], axis=1)                 # (n, 2c+1, thw)

    zcc = jnp.zeros((c, c), jnp.float32)
    w2 = jnp.concatenate([
        jnp.concatenate([params["wq"], zcc, params["bq"][:, None]], axis=1),
        jnp.concatenate([zcc, params["wk"], params["bk"][:, None]], axis=1),
    ], axis=0).astype(jnp.float32)                               # (2c, 2c+1)

    # ---- relative temporal embeddings, pre-expanded to the T*HW lane axis ----
    t_emb = params["t_emb_pe"] if POSITIONAL_ENCODING == "Sinusoidal" else params["t_embeddings"]
    # TODO(synk): reproduces torch's frm_indices.repeat(num_heads, 1) row
    # pairing with the view(n*num_heads, ...) attention batch ordering verbatim.
    frm = jnp.tile(frm_indices.astype(jnp.int32), (nh, 1)).reshape(n, nh, t)
    rel_idx = jnp.clip(frm[:, :, :, None] - frm[:, :, None, :] + (MAX_FRAME_COUNT - 1),
                       0, 2 * MAX_FRAME_COUNT - 2)
    rt = t_emb[rel_idx].astype(jnp.float32)                      # (n, nh, s, tq, pd)
    rel_t = jnp.transpose(rt, (0, 1, 4, 2, 3))                   # (n, nh, pd, s, tq)
    rel_t = jnp.broadcast_to(rel_t[..., None], (n, nh, pd, t, t, hw))
    rel_t = rel_t.reshape(n, c, t, thw)                          # (n, Cin, T, THW)

    # ---- relative y/x embeddings with the self row/col EXCLUSION baked in ----
    i_q = jnp.arange(hw) // w
    j_q = jnp.arange(hw) % w
    gg_h = jnp.arange(h - 1)[:, None]
    row_key = gg_h + (gg_h >= i_q[None, :]).astype(jnp.int32)    # (h-1, hw)
    rel_h = params["y_embeddings"][row_key - i_q[None, :] + (H_MAX - 1)]
    rel_h = jnp.transpose(rel_h, (2, 0, 1))                      # (pd, h-1, hw)
    gg_w = jnp.arange(w - 1)[:, None]
    col_key = gg_w + (gg_w >= j_q[None, :]).astype(jnp.int32)    # (w-1, hw)
    rel_w = params["x_embeddings"][col_key - j_q[None, :] + (W_MAX - 1)]
    rel_w = jnp.transpose(rel_w, (2, 0, 1))                      # (pd, w-1, hw)
    rel_sp = jnp.concatenate([rel_h, rel_w], axis=1)             # (pd, h+w-2, hw)
    rel_sp = jnp.broadcast_to(rel_sp[:, :, None, :], (pd, h + w - 2, t, hw))
    rel_sp = rel_sp.reshape(pd, h + w - 2, thw)
    rel_sp = jnp.broadcast_to(rel_sp[None, None], (n, nh, pd, h + w - 2, thw))
    rel_sp = rel_sp.reshape(n, c, h + w - 2, thw)

    rel = jnp.concatenate([rel_t, rel_sp], axis=2)               # (n, Cin, K, THW)

    # ---- 0/1 key-selection matrix: K = t time groups (self incl.), then
    #      (h-1) key rows / (w-1) key cols with the self entry excluded --------
    t_of = jnp.arange(thw) // hw
    p_of = jnp.arange(thw) % hw
    i_of = p_of // w
    j_of = p_of % w
    key_t = jnp.arange(t)[:, None] * hw + p_of[None, :]                     # (t, thw)
    row_k = gg_h + (gg_h >= i_of[None, :]).astype(jnp.int32)                # (h-1, thw)
    key_h = t_of[None, :] * hw + row_k * w + j_of[None, :]
    col_k = gg_w + (gg_w >= j_of[None, :]).astype(jnp.int32)                # (w-1, thw)
    key_w = t_of[None, :] * hw + i_of[None, :] * w + col_k
    key_idx = jnp.concatenate([key_t, key_h, key_w], axis=0)                # (K, thw)
    sel = (jnp.arange(thw)[:, None, None] == key_idx[None]).astype(jnp.float32)
    sel = sel.reshape(thw, K * thw)
    # TODO(synk): sel is O((t*h*w)^2 * K) bytes; for production spatial sizes
    # replace the selection matmul with strided row/col DMA gathers and keep
    # the loop-invariant operands single-buffered.

    attn = _grid_attention(x2, w2, rel, sel, nh=nh, K=K)         # (n, nh, K, thw)

    # pure reshape (no transpose) back to the PyTorch output layout
    return attn.reshape(n, nh, K, t, h, w)


# ------------------------------ pure-JAX reference ---------------------------
def _reference_forward(params, query, key, frm_indices):
    with jax.default_matmul_precision("float32"):
        n, c, t, h, w = query.shape
        nh = NUM_HEADS
        pd = c // nh
        pq = jnp.einsum('oc,ncthw->nothw', params["wq"], query) \
            + params["bq"][None, :, None, None, None]
        pk = jnp.einsum('oc,ncthw->nothw', params["wk"], key) \
            + params["bk"][None, :, None, None, None]
        pq = pq.reshape(n, nh, pd, t, h, w)
        pk = pk.reshape(n, nh, pd, t, h, w)

        t_emb = params["t_emb_pe"] if POSITIONAL_ENCODING == "Sinusoidal" else params["t_embeddings"]
        frm = jnp.tile(frm_indices.astype(jnp.int32), (nh, 1)).reshape(n, nh, t)
        rel_idx = jnp.clip(frm[:, :, :, None] - frm[:, :, None, :] + (MAX_FRAME_COUNT - 1),
                           0, 2 * MAX_FRAME_COUNT - 2)
        rt = t_emb[rel_idx]                                            # (n, nh, s, t, pd)
        gy = jnp.arange(h)[:, None] - jnp.arange(h)[None, :] + (H_MAX - 1)
        rey = params["y_embeddings"][gy]                               # (g, i, pd)
        gx = jnp.arange(w)[:, None] - jnp.arange(w)[None, :] + (W_MAX - 1)
        rex = params["x_embeddings"][gx]                               # (g, j, pd)

        e_t = jnp.einsum('bmctij,bmcsij->bmstij', pq, pk) \
            + jnp.einsum('bmctij,bmstc->bmstij', pq, rt)
        e_h = jnp.einsum('bmctij,bmctgj->bmgtij', pq, pk) \
            + jnp.einsum('bmctij,gic->bmgtij', pq, rey)
        e_w = jnp.einsum('bmctij,bmctig->bmgtij', pq, pk) \
            + jnp.einsum('bmctij,gjc->bmgtij', pq, rex)

        cond_h = jnp.arange(h - 1)[:, None, None, None] < jnp.arange(h)[None, None, :, None]
        e_h_c = jnp.where(cond_h, e_h[:, :, :h - 1], e_h[:, :, 1:])
        cond_w = jnp.arange(w - 1)[:, None, None, None] < jnp.arange(w)[None, None, None, :]
        e_w_c = jnp.where(cond_w, e_w[:, :, :w - 1], e_w[:, :, 1:])

        energy = jnp.concatenate([e_t, e_h_c, e_w_c], axis=2)
        return jax.nn.softmax(energy, axis=2)


if __name__ == "__main__":
    rng = jax.random.PRNGKey(0)
    kp, kq, kk = jax.random.split(rng, 3)
    params = init_params(kp)

    query = jax.random.normal(kq, (N, IN_DIM, T, H, W), jnp.float32)
    key = jax.random.normal(kk, (N, IN_DIM, T, H, W), jnp.float32)
    frm_indices = jnp.array([[0, 1, 2], [0, 2, 3]], jnp.int32)      # (N, T)

    attn = grid_attention_weight_forward(params, query, key, frm_indices)
    attn = jax.block_until_ready(attn)

    K = T + H + W - 2
    assert attn.shape == (N, NUM_HEADS, K, T, H, W), attn.shape
    assert attn.dtype == jnp.float32
    # softmax over the K axis must sum to 1 (exact reciprocal -> tight atol)
    sums = jnp.sum(attn, axis=2)
    assert bool(jnp.allclose(sums, 1.0, atol=1e-3)), "softmax normalization failed"
    # element-wise check against the pure-JAX reference of the same convention
    ref = _reference_forward(params, query.astype(jnp.float32),
                             key.astype(jnp.float32), frm_indices)
    assert bool(jnp.allclose(attn, ref, atol=1e-2, rtol=1e-2)), "mismatch vs reference"

    print("KERNEL_OK")
</pallas_src>

<mosaic_0001>
module attributes {stable_mosaic.version = 11 : i64} {
  func.func @_grid_attn_fused_kernel(%arg0: i32, %arg1: memref<1x33x192xf32, #tpu.memory_space<vmem>>, %arg2: memref<32x33xf32, #tpu.memory_space<vmem>>, %arg3: memref<1x16x17x192xf32, #tpu.memory_space<vmem>>, %arg4: memref<192x3264xf32, #tpu.memory_space<vmem>>, %arg5: memref<1x2x17x192xf32, #tpu.memory_space<vmem>>) attributes {dimension_semantics = [#tpu.dimension_semantics<parallel>], iteration_bounds = array<i64: 2>, scalar_prefetch = 0 : i64, scratch_operands = 0 : i64, tpu.core_type = #tpu.core_type<tc>, window_params = [{transform_indices = @transform_0, window_bounds = array<i64: 1, 33, 192>}, {pipeline_mode = #tpu.pipeline_mode<synchronous>, transform_indices = @transform_1, window_bounds = array<i64: 32, 33>}, {transform_indices = @transform_2, window_bounds = array<i64: 1, 16, 17, 192>}, {pipeline_mode = #tpu.pipeline_mode<synchronous>, transform_indices = @transform_3, window_bounds = array<i64: 192, 3264>}, {transform_indices = @transform_4, window_bounds = array<i64: 1, 2, 17, 192>}]} {
    %c0 = arith.constant 0 : index
    %c0_0 = arith.constant 0 : index
    %0 = vector.load %arg2[%c0, %c0_0] : memref<32x33xf32, #tpu.memory_space<vmem>>, vector<32x33xf32>
    %c0_1 = arith.constant 0 : index
    %c0_2 = arith.constant 0 : index
    %c0_3 = arith.constant 0 : index
    %1 = vector.load %arg1[%c0_1, %c0_2, %c0_3] : memref<1x33x192xf32, #tpu.memory_space<vmem>>, vector<1x33x192xf32>
    %2 = vector.shape_cast %1 : vector<1x33x192xf32> to vector<33x192xf32>
    %cst = arith.constant dense<0.000000e+00> : vector<32x192xf32>
    %3 = tpu.matmul %0, %2, %cst {dimension_numbers = #tpu.dot_dimension_numbers<[1], [0], [0], [1], [0, 0, 1, 1], [], []>} : vector<32x33xf32>, vector<33x192xf32>, vector<32x192xf32> -> vector<32x192xf32>
    %4 = vector.extract_strided_slice %3 {offsets = [16, 0], sizes = [16, 192], strides = [1, 1]} : vector<32x192xf32> to vector<16x192xf32>
    %c0_4 = arith.constant 0 : index
    %c0_5 = arith.constant 0 : index
    %5 = vector.load %arg4[%c0_4, %c0_5] : memref<192x3264xf32, #tpu.memory_space<vmem>>, vector<192x3264xf32>
    %cst_6 = arith.constant dense<0.000000e+00> : vector<16x3264xf32>
    %6 = tpu.matmul %4, %5, %cst_6 {dimension_numbers = #tpu.dot_dimension_numbers<[1], [0], [0], [1], [0, 0, 1, 1], [], []>} : vector<16x192xf32>, vector<192x3264xf32>, vector<16x3264xf32> -> vector<16x3264xf32>
    %7 = vector.shape_cast %6 : vector<16x3264xf32> to vector<16x17x192xf32>
    %8 = vector.extract_strided_slice %3 {offsets = [0, 0], sizes = [1, 192], strides = [1, 1]} : vector<32x192xf32> to vector<1x192xf32>
    %9 = vector.extract_strided_slice %7 {offsets = [0, 0, 0], sizes = [1, 17, 192], strides = [1, 1, 1]} : vector<16x17x192xf32> to vector<1x17x192xf32>
    %10 = vector.shape_cast %9 : vector<1x17x192xf32> to vector<17x192xf32>
    %c0_7 = arith.constant 0 : index
    %c0_8 = arith.constant 0 : index
    %c0_9 = arith.constant 0 : index
    %c0_10 = arith.constant 0 : index
    %11 = vector.load %arg3[%c0_7, %c0_8, %c0_9, %c0_10] : memref<1x16x17x192xf32, #tpu.memory_space<vmem>>, vector<1x1x17x192xf32>
    %12 = vector.shape_cast %11 : vector<1x1x17x192xf32> to vector<17x192xf32>
    %13 = arith.addf %10, %12 : vector<17x192xf32>
    %14 = vector.broadcast %8 : vector<1x192xf32> to vector<17x192xf32>
    %15 = arith.mulf %14, %13 : vector<17x192xf32>
    %16 = vector.extract_strided_slice %3 {offsets = [1, 0], sizes = [1, 192], strides = [1, 1]} : vector<32x192xf32> to vector<1x192xf32>
    %17 = vector.extract_strided_slice %7 {offsets = [1, 0, 0], sizes = [1, 17, 192], strides = [1, 1, 1]} : vector<16x17x192xf32> to vector<1x17x192xf32>
    %18 = vector.shape_cast %17 : vector<1x17x192xf32> to vector<17x192xf32>
    %c0_11 = arith.constant 0 : index
    %c1 = arith.constant 1 : index
    %c0_12 = arith.constant 0 : index
    %c0_13 = arith.constant 0 : index
    %19 = vector.load %arg3[%c0_11, %c1, %c0_12, %c0_13] : memref<1x16x17x192xf32, #tpu.memory_space<vmem>>, vector<1x1x17x192xf32>
    %20 = vector.shape_cast %19 : vector<1x1x17x192xf32> to vector<17x192xf32>
    %21 = arith.addf %18, %20 : vector<17x192xf32>
    %22 = vector.broadcast %16 : vector<1x192xf32> to vector<17x192xf32>
    %23 = arith.mulf %22, %21 : vector<17x192xf32>
    %24 = arith.addf %15, %23 : vector<17x192xf32>
    %25 = vector.extract_strided_slice %3 {offsets = [2, 0], sizes = [1, 192], strides = [1, 1]} : vector<32x192xf32> to vector<1x192xf32>
    %26 = vector.extract_strided_slice %7 {offsets = [2, 0, 0], sizes = [1, 17, 192], strides = [1, 1, 1]} : vector<16x17x192xf32> to vector<1x17x192xf32>
    %27 = vector.shape_cast %26 : vector<1x17x192xf32> to vector<17x192xf32>
    %c0_14 = arith.constant 0 : index
    %c2 = arith.constant 2 : index
    %c0_15 = arith.constant 0 : index
    %c0_16 = arith.constant 0 : index
    %28 = vector.load %arg3[%c0_14, %c2, %c0_15, %c0_16] : memref<1x16x17x192xf32, #tpu.memory_space<vmem>>, vector<1x1x17x192xf32>
    %29 = vector.shape_cast %28 : vector<1x1x17x192xf32> to vector<17x192xf32>
    %30 = arith.addf %27, %29 : vector<17x192xf32>
    %31 = vector.broadcast %25 : vector<1x192xf32> to vector<17x192xf32>
    %32 = arith.mulf %31, %30 : vector<17x192xf32>
    %33 = arith.addf %24, %32 : vector<17x192xf32>
    %34 = vector.extract_strided_slice %3 {offsets = [3, 0], sizes = [1, 192], strides = [1, 1]} : vector<32x192xf32> to vector<1x192xf32>
    %35 = vector.extract_strided_slice %7 {offsets = [3, 0, 0], sizes = [1, 17, 192], strides = [1, 1, 1]} : vector<16x17x192xf32> to vector<1x17x192xf32>
    %36 = vector.shape_cast %35 : vector<1x17x192xf32> to vector<17x192xf32>
    %c0_17 = arith.constant 0 : index
    %c3 = arith.constant 3 : index
    %c0_18 = arith.constant 0 : index
    %c0_19 = arith.constant 0 : index
    %37 = vector.load %arg3[%c0_17, %c3, %c0_18, %c0_19] : memref<1x16x17x192xf32, #tpu.memory_space<vmem>>, vector<1x1x17x192xf32>
    %38 = vector.shape_cast %37 : vector<1x1x17x192xf32> to vector<17x192xf32>
    %39 = arith.addf %36, %38 : vector<17x192xf32>
    %40 = vector.broadcast %34 : vector<1x192xf32> to vector<17x192xf32>
    %41 = arith.mulf %40, %39 : vector<17x192xf32>
    %42 = arith.addf %33, %41 : vector<17x192xf32>
    %43 = vector.extract_strided_slice %3 {offsets = [4, 0], sizes = [1, 192], strides = [1, 1]} : vector<32x192xf32> to vector<1x192xf32>
    %44 = vector.extract_strided_slice %7 {offsets = [4, 0, 0], sizes = [1, 17, 192], strides = [1, 1, 1]} : vector<16x17x192xf32> to vector<1x17x192xf32>
    %45 = vector.shape_cast %44 : vector<1x17x192xf32> to vector<17x192xf32>
    %c0_20 = arith.constant 0 : index
    %c4 = arith.constant 4 : index
    %c0_21 = arith.constant 0 : index
    %c0_22 = arith.constant 0 : index
    %46 = vector.load %arg3[%c0_20, %c4, %c0_21, %c0_22] : memref<1x16x17x192xf32, #tpu.memory_space<vmem>>, vector<1x1x17x192xf32>
    %47 = vector.shape_cast %46 : vector<1x1x17x192xf32> to vector<17x192xf32>
    %48 = arith.addf %45, %47 : vector<17x192xf32>
    %49 = vector.broadcast %43 : vector<1x192xf32> to vector<17x192xf32>
    %50 = arith.mulf %49, %48 : vector<17x192xf32>
    %51 = arith.addf %42, %50 : vector<17x192xf32>
    %52 = vector.extract_strided_slice %3 {offsets = [5, 0], sizes = [1, 192], strides = [1, 1]} : vector<32x192xf32> to vector<1x192xf32>
    %53 = vector.extract_strided_slice %7 {offsets = [5, 0, 0], sizes = [1, 17, 192], strides = [1, 1, 1]} : vector<16x17x192xf32> to vector<1x17x192xf32>
    %54 = vector.shape_cast %53 : vector<1x17x192xf32> to vector<17x192xf32>
    %c0_23 = arith.constant 0 : index
    %c5 = arith.constant 5 : index
    %c0_24 = arith.constant 0 : index
    %c0_25 = arith.constant 0 : index
    %55 = vector.load %arg3[%c0_23, %c5, %c0_24, %c0_25] : memref<1x16x17x192xf32, #tpu.memory_space<vmem>>, vector<1x1x17x192xf32>
    %56 = vector.shape_cast %55 : vector<1x1x17x192xf32> to vector<17x192xf32>
    %57 = arith.addf %54, %56 : vector<17x192xf32>
    %58 = vector.broadcast %52 : vector<1x192xf32> to vector<17x192xf32>
    %59 = arith.mulf %58, %57 : vector<17x192xf32>
    %60 = arith.addf %51, %59 : vector<17x192xf32>
    %61 = vector.extract_strided_slice %3 {offsets = [6, 0], sizes = [1, 192], strides = [1, 1]} : vector<32x192xf32> to vector<1x192xf32>
    %62 = vector.extract_strided_slice %7 {offsets = [6, 0, 0], sizes = [1, 17, 192], strides = [1, 1, 1]} : vector<16x17x192xf32> to vector<1x17x192xf32>
    %63 = vector.shape_cast %62 : vector<1x17x192xf32> to vector<17x192xf32>
    %c0_26 = arith.constant 0 : index
    %c6 = arith.constant 6 : index
    %c0_27 = arith.constant 0 : index
    %c0_28 = arith.constant 0 : index
    %64 = vector.load %arg3[%c0_26, %c6, %c0_27, %c0_28] : memref<1x16x17x192xf32, #tpu.memory_space<vmem>>, vector<1x1x17x192xf32>
    %65 = vector.shape_cast %64 : vector<1x1x17x192xf32> to vector<17x192xf32>
    %66 = arith.addf %63, %65 : vector<17x192xf32>
    %67 = vector.broadcast %61 : vector<1x192xf32> to vector<17x192xf32>
    %68 = arith.mulf %67, %66 : vector<17x192xf32>
    %69 = arith.addf %60, %68 : vector<17x192xf32>
    %70 = vector.extract_strided_slice %3 {offsets = [7, 0], sizes = [1, 192], strides = [1, 1]} : vector<32x192xf32> to vector<1x192xf32>
    %71 = vector.extract_strided_slice %7 {offsets = [7, 0, 0], sizes = [1, 17, 192], strides = [1, 1, 1]} : vector<16x17x192xf32> to vector<1x17x192xf32>
    %72 = vector.shape_cast %71 : vector<1x17x192xf32> to vector<17x192xf32>
    %c0_29 = arith.constant 0 : index
    %c7 = arith.constant 7 : index
    %c0_30 = arith.constant 0 : index
    %c0_31 = arith.constant 0 : index
    %73 = vector.load %arg3[%c0_29, %c7, %c0_30, %c0_31] : memref<1x16x17x192xf32, #tpu.memory_space<vmem>>, vector<1x1x17x192xf32>
    %74 = vector.shape_cast %73 : vector<1x1x17x192xf32> to vector<17x192xf32>
    %75 = arith.addf %72, %74 : vector<17x192xf32>
    %76 = vector.broadcast %70 : vector<1x192xf32> to vector<17x192xf32>
    %77 = arith.mulf %76, %75 : vector<17x192xf32>
    %78 = arith.addf %69, %77 : vector<17x192xf32>
    %cst_32 = arith.constant dense<0xFF800000> : vector<192xf32>
    %79 = vector.multi_reduction <maximumf>, %78, %cst_32 [0] : vector<17x192xf32> to vector<192xf32>
    %80 = vector.shape_cast %79 : vector<192xf32> to vector<1x192xf32>
    %81 = vector.broadcast %80 : vector<1x192xf32> to vector<17x192xf32>
    %82 = arith.subf %78, %81 : vector<17x192xf32>
    %83 = math.exp %82 : vector<17x192xf32>
    %cst_33 = arith.constant dense<0.000000e+00> : vector<192xf32>
    %84 = vector.multi_reduction <add>, %83, %cst_33 [0] : vector<17x192xf32> to vector<192xf32>
    %85 = vector.shape_cast %84 : vector<192xf32> to vector<1x192xf32>
    %86 = tpu.reciprocal %85 : vector<1x192xf32> -> vector<1x192xf32>
    %87 = vector.broadcast %86 : vector<1x192xf32> to vector<17x192xf32>
    %88 = arith.mulf %83, %87 : vector<17x192xf32>
    %c0_34 = arith.constant 0 : index
    %c0_35 = arith.constant 0 : index
    %c0_36 = arith.constant 0 : index
    %c0_37 = arith.constant 0 : index
    %89 = vector.load %arg5[%c0_34, %c0_35, %c0_36, %c0_37] : memref<1x2x17x192xf32, #tpu.memory_space<vmem>>, vector<1x1x17x192xf32>
    %90 = vector.shape_cast %89 : vector<1x1x17x192xf32> to vector<17x192xf32>
    %91 = vector.shape_cast %88 : vector<17x192xf32> to vector<1x1x17x192xf32>
    tpu.vector_store %arg5[%c0_34, %c0_35, %c0_36, %c0_37], %91 {strides = array<i32>} : memref<1x2x17x192xf32, #tpu.memory_space<vmem>>, vector<1x1x17x192xf32>,
    %92 = vector.extract_strided_slice %3 {offsets = [8, 0], sizes = [1, 192], strides = [1, 1]} : vector<32x192xf32> to vector<1x192xf32>
    %93 = vector.extract_strided_slice %7 {offsets = [8, 0, 0], sizes = [1, 17, 192], strides = [1, 1, 1]} : vector<16x17x192xf32> to vector<1x17x192xf32>
    %94 = vector.shape_cast %93 : vector<1x17x192xf32> to vector<17x192xf32>
    %c0_38 = arith.constant 0 : index
    %c8 = arith.constant 8 : index
    %c0_39 = arith.constant 0 : index
    %c0_40 = arith.constant 0 : index
    %95 = vector.load %arg3[%c0_38, %c8, %c0_39, %c0_40] : memref<1x16x17x192xf32, #tpu.memory_space<vmem>>, vector<1x1x17x192xf32>
    %96 = vector.shape_cast %95 : vector<1x1x17x192xf32> to vector<17x192xf32>
    %97 = arith.addf %94, %96 : vector<17x192xf32>
    %98 = vector.broadcast %92 : vector<1x192xf32> to vector<17x192xf32>
    %99 = arith.mulf %98, %97 : vector<17x192xf32>
    %100 = vector.extract_strided_slice %3 {offsets = [9, 0], sizes = [1, 192], strides = [1, 1]} : vector<32x192xf32> to vector<1x192xf32>
    %101 = vector.extract_strided_slice %7 {offsets = [9, 0, 0], sizes = [1, 17, 192], strides = [1, 1, 1]} : vector<16x17x192xf32> to vector<1x17x192xf32>
    %102 = vector.shape_cast %101 : vector<1x17x192xf32> to vector<17x192xf32>
    %c0_41 = arith.constant 0 : index
    %c9 = arith.constant 9 : index
    %c0_42 = arith.constant 0 : index
    %c0_43 = arith.constant 0 : index
    %103 = vector.load %arg3[%c0_41, %c9, %c0_42, %c0_43] : memref<1x16x17x192xf32, #tpu.memory_space<vmem>>, vector<1x1x17x192xf32>
    %104 = vector.shape_cast %103 : vector<1x1x17x192xf32> to vector<17x192xf32>
    %105 = arith.addf %102, %104 : vector<17x192xf32>
    %106 = vector.broadcast %100 : vector<1x192xf32> to vector<17x192xf32>
    %107 = arith.mulf %106, %105 : vector<17x192xf32>
    %108 = arith.addf %99, %107 : vector<17x192xf32>
    %109 = vector.extract_strided_slice %3 {offsets = [10, 0], sizes = [1, 192], strides = [1, 1]} : vector<32x192xf32> to vector<1x192xf32>
    %110 = vector.extract_strided_slice %7 {offsets = [10, 0, 0], sizes = [1, 17, 192], strides = [1, 1, 1]} : vector<16x17x192xf32> to vector<1x17x192xf32>
    %111 = vector.shape_cast %110 : vector<1x17x192xf32> to vector<17x192xf32>
    %c0_44 = arith.constant 0 : index
    %c10 = arith.constant 10 : index
    %c0_45 = arith.constant 0 : index
    %c0_46 = arith.constant 0 : index
    %112 = vector.load %arg3[%c0_44, %c10, %c0_45, %c0_46] : memref<1x16x17x192xf32, #tpu.memory_space<vmem>>, vector<1x1x17x192xf32>
    %113 = vector.shape_cast %112 : vector<1x1x17x192xf32> to vector<17x192xf32>
    %114 = arith.addf %111, %113 : vector<17x192xf32>
    %115 = vector.broadcast %109 : vector<1x192xf32> to vector<17x192xf32>
    %116 = arith.mulf %115, %114 : vector<17x192xf32>
    %117 = arith.addf %108, %116 : vector<17x192xf32>
    %118 = vector.extract_strided_slice %3 {offsets = [11, 0], sizes = [1, 192], strides = [1, 1]} : vector<32x192xf32> to vector<1x192xf32>
    %119 = vector.extract_strided_slice %7 {offsets = [11, 0, 0], sizes = [1, 17, 192], strides = [1, 1, 1]} : vector<16x17x192xf32> to vector<1x17x192xf32>
    %120 = vector.shape_cast %119 : vector<1x17x192xf32> to vector<17x192xf32>
    %c0_47 = arith.constant 0 : index
    %c11 = arith.constant 11 : index
    %c0_48 = arith.constant 0 : index
    %c0_49 = arith.constant 0 : index
    %121 = vector.load %arg3[%c0_47, %c11, %c0_48, %c0_49] : memref<1x16x17x192xf32, #tpu.memory_space<vmem>>, vector<1x1x17x192xf32>
    %122 = vector.shape_cast %121 : vector<1x1x17x192xf32> to vector<17x192xf32>
    %123 = arith.addf %120, %122 : vector<17x192xf32>
    %124 = vector.broadcast %118 : vector<1x192xf32> to vector<17x192xf32>
    %125 = arith.mulf %124, %123 : vector<17x192xf32>
    %126 = arith.addf %117, %125 : vector<17x192xf32>
    %127 = vector.extract_strided_slice %3 {offsets = [12, 0], sizes = [1, 192], strides = [1, 1]} : vector<32x192xf32> to vector<1x192xf32>
    %128 = vector.extract_strided_slice %7 {offsets = [12, 0, 0], sizes = [1, 17, 192], strides = [1, 1, 1]} : vector<16x17x192xf32> to vector<1x17x192xf32>
    %129 = vector.shape_cast %128 : vector<1x17x192xf32> to vector<17x192xf32>
    %c0_50 = arith.constant 0 : index
    %c12 = arith.constant 12 : index
    %c0_51 = arith.constant 0 : index
    %c0_52 = arith.constant 0 : index
    %130 = vector.load %arg3[%c0_50, %c12, %c0_51, %c0_52] : memref<1x16x17x192xf32, #tpu.memory_space<vmem>>, vector<1x1x17x192xf32>
    %131 = vector.shape_cast %130 : vector<1x1x17x192xf32> to vector<17x192xf32>
    %132 = arith.addf %129, %131 : vector<17x192xf32>
    %133 = vector.broadcast %127 : vector<1x192xf32> to vector<17x192xf32>
    %134 = arith.mulf %133, %132 : vector<17x192xf32>
    %135 = arith.addf %126, %134 : vector<17x192xf32>
    %136 = vector.extract_strided_slice %3 {offsets = [13, 0], sizes = [1, 192], strides = [1, 1]} : vector<32x192xf32> to vector<1x192xf32>
    %137 = vector.extract_strided_slice %7 {offsets = [13, 0, 0], sizes = [1, 17, 192], strides = [1, 1, 1]} : vector<16x17x192xf32> to vector<1x17x192xf32>
    %138 = vector.shape_cast %137 : vector<1x17x192xf32> to vector<17x192xf32>
    %c0_53 = arith.constant 0 : index
    %c13 = arith.constant 13 : index
    %c0_54 = arith.constant 0 : index
    %c0_55 = arith.constant 0 : index
    %139 = vector.load %arg3[%c0_53, %c13, %c0_54, %c0_55] : memref<1x16x17x192xf32, #tpu.memory_space<vmem>>, vector<1x1x17x192xf32>
    %140 = vector.shape_cast %139 : vector<1x1x17x192xf32> to vector<17x192xf32>
    %141 = arith.addf %138, %140 : vector<17x192xf32>
    %142 = vector.broadcast %136 : vector<1x192xf32> to vector<17x192xf32>
    %143 = arith.mulf %142, %141 : vector<17x192xf32>
    %144 = arith.addf %135, %143 : vector<17x192xf32>
    %145 = vector.extract_strided_slice %3 {offsets = [14, 0], sizes = [1, 192], strides = [1, 1]} : vector<32x192xf32> to vector<1x192xf32>
    %146 = vector.extract_strided_slice %7 {offsets = [14, 0, 0], sizes = [1, 17, 192], strides = [1, 1, 1]} : vector<16x17x192xf32> to vector<1x17x192xf32>
    %147 = vector.shape_cast %146 : vector<1x17x192xf32> to vector<17x192xf32>
    %c0_56 = arith.constant 0 : index
    %c14 = arith.constant 14 : index
    %c0_57 = arith.constant 0 : index
    %c0_58 = arith.constant 0 : index
    %148 = vector.load %arg3[%c0_56, %c14, %c0_57, %c0_58] : memref<1x16x17x192xf32, #tpu.memory_space<vmem>>, vector<1x1x17x192xf32>
    %149 = vector.shape_cast %148 : vector<1x1x17x192xf32> to vector<17x192xf32>
    %150 = arith.addf %147, %149 : vector<17x192xf32>
    %151 = vector.broadcast %145 : vector<1x192xf32> to vector<17x192xf32>
    %152 = arith.mulf %151, %150 : vector<17x192xf32>
    %153 = arith.addf %144, %152 : vector<17x192xf32>
    %154 = vector.extract_strided_slice %3 {offsets = [15, 0], sizes = [1, 192], strides = [1, 1]} : vector<32x192xf32> to vector<1x192xf32>
    %155 = vector.extract_strided_slice %7 {offsets = [15, 0, 0], sizes = [1, 17, 192], strides = [1, 1, 1]} : vector<16x17x192xf32> to vector<1x17x192xf32>
    %156 = vector.shape_cast %155 : vector<1x17x192xf32> to vector<17x192xf32>
    %c0_59 = arith.constant 0 : index
    %c15 = arith.constant 15 : index
    %c0_60 = arith.constant 0 : index
    %c0_61 = arith.constant 0 : index
    %157 = vector.load %arg3[%c0_59, %c15, %c0_60, %c0_61] : memref<1x16x17x192xf32, #tpu.memory_space<vmem>>, vector<1x1x17x192xf32>
    %158 = vector.shape_cast %157 : vector<1x1x17x192xf32> to vector<17x192xf32>
    %159 = arith.addf %156, %158 : vector<17x192xf32>
    %160 = vector.broadcast %154 : vector<1x192xf32> to vector<17x192xf32>
    %161 = arith.mulf %160, %159 : vector<17x192xf32>
    %162 = arith.addf %153, %161 : vector<17x192xf32>
    %cst_62 = arith.constant dense<0xFF800000> : vector<192xf32>
    %163 = vector.multi_reduction <maximumf>, %162, %cst_62 [0] : vector<17x192xf32> to vector<192xf32>
    %164 = vector.shape_cast %163 : vector<192xf32> to vector<1x192xf32>
    %165 = vector.broadcast %164 : vector<1x192xf32> to vector<17x192xf32>
    %166 = arith.subf %162, %165 : vector<17x192xf32>
    %167 = math.exp %166 : vector<17x192xf32>
    %cst_63 = arith.constant dense<0.000000e+00> : vector<192xf32>
    %168 = vector.multi_reduction <add>, %167, %cst_63 [0] : vector<17x192xf32> to vector<192xf32>
    %169 = vector.shape_cast %168 : vector<192xf32> to vector<1x192xf32>
    %170 = tpu.reciprocal %169 : vector<1x192xf32> -> vector<1x192xf32>
    %171 = vector.broadcast %170 : vector<1x192xf32> to vector<17x192xf32>
    %172 = arith.mulf %167, %171 : vector<17x192xf32>
    %c0_64 = arith.constant 0 : index
    %c1_65 = arith.constant 1 : index
    %c0_66 = arith.constant 0 : index
    %c0_67 = arith.constant 0 : index
    %173 = vector.load %arg5[%c0_64, %c1_65, %c0_66, %c0_67] : memref<1x2x17x192xf32, #tpu.memory_space<vmem>>, vector<1x1x17x192xf32>
    %174 = vector.shape_cast %173 : vector<1x1x17x192xf32> to vector<17x192xf32>
    %175 = vector.shape_cast %172 : vector<17x192xf32> to vector<1x1x17x192xf32>
    tpu.vector_store %arg5[%c0_64, %c1_65, %c0_66, %c0_67], %175 {strides = array<i32>} : memref<1x2x17x192xf32, #tpu.memory_space<vmem>>, vector<1x1x17x192xf32>,
    return
  }
  func.func @transform_0(%arg0: i32) -> (i32, i32, i32) {
    %c0_i32 = arith.constant 0 : i32
    %c0_i32_0 = arith.constant 0 : i32
    %c0_i32_1 = arith.constant 0 : i32
    return %arg0, %c0_i32, %c0_i32_0 : i32, i32, i32
  }
  func.func @transform_1(%arg0: i32) -> (i32, i32) {
    %c0_i32 = arith.constant 0 : i32
    %c0_i32_0 = arith.constant 0 : i32
    %c0_i32_1 = arith.constant 0 : i32
    return %c0_i32, %c0_i32_0 : i32, i32
  }
  func.func @transform_2(%arg0: i32) -> (i32, i32, i32, i32) {
    %c0_i32 = arith.constant 0 : i32
    %c0_i32_0 = arith.constant 0 : i32
    %c0_i32_1 = arith.constant 0 : i32
    %c0_i32_2 = arith.constant 0 : i32
    return %arg0, %c0_i32, %c0_i32_0, %c0_i32_1 : i32, i32, i32, i32
  }
  func.func @transform_3(%arg0: i32) -> (i32, i32) {
    %c0_i32 = arith.constant 0 : i32
    %c0_i32_0 = arith.constant 0 : i32
    %c0_i32_1 = arith.constant 0 : i32
    return %c0_i32, %c0_i32_0 : i32, i32
  }
  func.func @transform_4(%arg0: i32) -> (i32, i32, i32, i32) {
    %c0_i32 = arith.constant 0 : i32
    %c0_i32_0 = arith.constant 0 : i32
    %c0_i32_1 = arith.constant 0 : i32
    %c0_i32_2 = arith.constant 0 : i32
    return %arg0, %c0_i32, %c0_i32_0, %c0_i32_1 : i32, i32, i32, i32
  }
}

</mosaic_0001>

<llo_original>
// kernel: tpu_custom_call.1
$region0: #{tpu_custom_call.1}
  #allocation0 [shape = 'u32[]', space=smem, size = 0x4, offset = 0x4, fixed_abs, tag = 'smem constant byte address 0x4 - core index']
  #allocation1 [shape = 'u32[72,128]{1,0:T(1,128)}', space=vmem, size = 0x9000, scoped, tag = 'internal scratch']
  %s0 = inlined_call_operand.vmem [shape: f32[2,33,192], index: 0, kind: input, shape index: {}]
  %s1 = inlined_call_operand.hbm [shape: f32[32,33], index: 1, kind: input, shape index: {}]
  %s2 = inlined_call_operand.vmem [shape: f32[2,16,17,192], index: 2, kind: input, shape index: {}]
  %s3 = inlined_call_operand.hbm [shape: f32[192,3264], index: 3, kind: input, shape index: {}]
  %s4 = inlined_call_operand.vmem [shape: f32[2,2,17,192], index: 4, kind: output, shape index: {}]
  %s5 = sld [smem:[#allocation0]]
  $region57: #{tpu_custom_call.1} parent=0
    _
  %s7 = ssub.s32 1, %s5
  %s8 = scalar_select 0, %s7, %s5
  $region1: #{tpu_custom_call.1} parent=0
    #allocation2 [shape = 'u8[16384]{0}', space=vmem, size = 0x4000, scoped, tag = 'input window, operand 1, single buffered']
    #allocation3 [shape = 's32[2]{0}', space=sflag, size = 0x8, scoped, tag = 'scoped memory for tpu_custom_call.1']
    #allocation4 [shape = 'u8[2555904]{0}', space=vmem, size = 0x270000, scoped, tag = 'input window, operand 3, single buffered']
    #allocation5 [shape = 's32[1]{0}', space=sflag, size = 0x4, scoped, tag = 'scoped memory for tpu_custom_call.1']
    %9 = vsyncpa [#allocation3], 0
    %10 = vsyncpa [#allocation5], 0
    loop: start=0, step=1, limit=4
    $region2: #{tpu_custom_call.1} parent=1 // loop_pre_header
      _
    $region3: #{tpu_custom_call.1} parent=1 // loop_header
      %s12 = sphi 0, %s16
      %p13 = scmp.ge.s32.totalorder %s12, 4
      %s22 = sphi 0, %s24
      %s25 = sphi 0, %s22
      %s26 = sphi 0, %s25
      %s42 = sphi 0, %s26
      %s46 = sphi 0, %s46
      %s48 = sphi 0, %s46
      %s49 = sphi 0, %s48
      %s63 = sphi 0, %s49
      %s69 = sphi 0, %s71
      %s72 = sphi 0, %s69
      %s73 = sphi 0, %s72
      %s89 = sphi 0, %s73
      %s93 = sphi 0, %s93
      %s95 = sphi 0, %s93
      %s96 = sphi 0, %s95
      %s110 = sphi 0, %s96
      %s116 = sphi 0, %s118
      %s119 = sphi 0, %s116
      %s120 = sphi 0, %s119
      %s136 = sphi 0, %s120
    $region4: #{tpu_custom_call.1} parent=1 // loop_header_branch
      %15 = sbr.rel (%p13) target = $region8
    $region5: #{tpu_custom_call.1} parent=1 // loop_body
      %s17 = ssub.s32 %s12, 1
      %s18 = ssub.s32 %s12, 2
      %s19 = sadd.s32 %s12, 1
      %s20 = ssub.s32 %s12, %s19
      %p21 = scmp.eq.s32.totalorder %s20, 0
      %s23 = sadd.s32 %s22, 1
      %s24 = scalar_select %p21, %s22, %s23
      %p27 = pneg %p21
      %p28 = scmp.eq.s32.totalorder %s12, 1
      %p29 = por %p27, %p28
      %p30 = scmp.ne.s32.totalorder %s22, %s25
      %p31 = scmp.eq.s32.totalorder %s12, 0
      %p32 = por %p30, %p31
      %p33 = scmp.ne.s32.totalorder %s22, %s25
      %p34 = scmp.eq.s32.totalorder %s17, 1
      %p35 = por %p33, %p34
      %p36 = scmp.ne.s32.totalorder %s25, %s26
      %p37 = scmp.eq.s32.totalorder %s17, 0
      %p38 = por %p36, %p37
      %p39 = scmp.ne.s32.totalorder %s25, %s26
      %p40 = scmp.eq.s32.totalorder %s18, 1
      %p41 = por %p39, %p40
      %p43 = scmp.ne.s32.totalorder %s26, %s42
      %p44 = scmp.eq.s32.totalorder %s18, 0
      %p45 = por %p43, %p44
      %s47 = sadd.s32 %s46, 1
      %p50 = scmp.eq.s32.totalorder %s12, 1
      %p51 = scmp.ne.s32.totalorder %s46, %s48
      %p52 = scmp.eq.s32.totalorder %s12, 0
      %p53 = por %p51, %p52
      %p54 = scmp.ne.s32.totalorder %s46, %s48
      %p55 = scmp.eq.s32.totalorder %s17, 1
      %p56 = por %p54, %p55
      %p57 = scmp.ne.s32.totalorder %s48, %s49
      %p58 = scmp.eq.s32.totalorder %s17, 0
      %p59 = por %p57, %p58
      %p60 = scmp.ne.s32.totalorder %s48, %s49
      %p61 = scmp.eq.s32.totalorder %s18, 1
      %p62 = por %p60, %p61
      %p64 = scmp.ne.s32.totalorder %s49, %s63
      %p65 = scmp.eq.s32.totalorder %s18, 0
      %p66 = por %p64, %p65
      %s67 = ssub.s32 %s12, %s19
      %p68 = scmp.eq.s32.totalorder %s67, 0
      %s70 = sadd.s32 %s69, 1
      %s71 = scalar_select %p68, %s69, %s70
      %p74 = pneg %p68
      %p75 = scmp.eq.s32.totalorder %s12, 1
      %p76 = por %p74, %p75
      %p77 = scmp.ne.s32.totalorder %s69, %s72
      %p78 = scmp.eq.s32.totalorder %s12, 0
      %p79 = por %p77, %p78
      %p80 = scmp.ne.s32.totalorder %s69, %s72
      %p81 = scmp.eq.s32.totalorder %s17, 1
      %p82 = por %p80, %p81
      %p83 = scmp.ne.s32.totalorder %s72, %s73
      %p84 = scmp.eq.s32.totalorder %s17, 0
      %p85 = por %p83, %p84
      %p86 = scmp.ne.s32.totalorder %s72, %s73
      %p87 = scmp.eq.s32.totalorder %s18, 1
      %p88 = por %p86, %p87
      %p90 = scmp.ne.s32.totalorder %s73, %s89
      %p91 = scmp.eq.s32.totalorder %s18, 0
      %p92 = por %p90, %p91
      %s94 = sadd.s32 %s93, 1
      %p97 = scmp.eq.s32.totalorder %s12, 1
      %p98 = scmp.ne.s32.totalorder %s93, %s95
      %p99 = scmp.eq.s32.totalorder %s12, 0
      %p100 = por %p98, %p99
      %p101 = scmp.ne.s32.totalorder %s93, %s95
      %p102 = scmp.eq.s32.totalorder %s17, 1
      %p103 = por %p101, %p102
      %p104 = scmp.ne.s32.totalorder %s95, %s96
      %p105 = scmp.eq.s32.totalorder %s17, 0
      %p106 = por %p104, %p105
      %p107 = scmp.ne.s32.totalorder %s95, %s96
      %p108 = scmp.eq.s32.totalorder %s18, 1
      %p109 = por %p107, %p108
      %p111 = scmp.ne.s32.totalorder %s96, %s110
      %p112 = scmp.eq.s32.totalorder %s18, 0
      %p113 = por %p111, %p112
      %s114 = ssub.s32 %s12, %s19
      %p115 = scmp.eq.s32.totalorder %s114, 0
      %s117 = sadd.s32 %s116, 1
      %s118 = scalar_select %p115, %s116, %s117
      %p121 = pneg %p115
      %p122 = scmp.eq.s32.totalorder %s12, 1
      %p123 = por %p121, %p122
      %p124 = scmp.ne.s32.totalorder %s116, %s119
      %p125 = scmp.eq.s32.totalorder %s12, 0
      %p126 = por %p124, %p125
      %p127 = scmp.ne.s32.totalorder %s116, %s119
      %p128 = scmp.eq.s32.totalorder %s17, 1
      %p129 = por %p127, %p128
      %p130 = scmp.ne.s32.totalorder %s119, %s120
      %p131 = scmp.eq.s32.totalorder %s17, 0
      %p132 = por %p130, %p131
      %p133 = scmp.ne.s32.totalorder %s119, %s120
      %p134 = scmp.eq.s32.totalorder %s18, 1
      %p135 = por %p133, %p134
      %p137 = scmp.ne.s32.totalorder %s120, %s136
      %p138 = scmp.eq.s32.totalorder %s18, 0
      %p139 = por %p137, %p138
      %p140 = scmp.le.s32.totalorder 1, %s12
      %p141 = scmp.lt.s32.totalorder %s12, 3
      %p142 = pnand %p140, %p141
      %p143 = pneg %p142
      // Predicated region
      $region9: #{tpu_custom_call.1} parent=5 // pred_check
        _
      $region10: #{tpu_custom_call.1} parent=5 // pred_check_branch
        %145 = sbr.rel (%p142) target = $region12
      $region11: #{tpu_custom_call.1} parent=5 // pred_region
        %s146 = ssub.s32 %s12, 1
        // Predicated region
        $region13: #{tpu_custom_call.1} parent=11 // pred_check
          %p147 = pneg %p59
        $region14: #{tpu_custom_call.1} parent=11 // pred_check_branch
          %149 = sbr.rel (%p147) target = $region16
        $region15: #{tpu_custom_call.1} parent=11 // pred_region
          %151 = vsyncadd [#allocation3], 0
          %s152 = sshll.u32 %s1, 4
          %s153 = int_to_ptr.hbm [resolvable:$true] %s152
          %s154 = sshll.u32 [#allocation2], 4
          %s155 = int_to_ptr.vmem [resolvable:$true] %s154
          %160 = dma.hbm_to_vmem [thread:$0]  %s153, 512, %s155, [#allocation3], 128, 128, 8
        $region16: #{tpu_custom_call.1} parent=11 // pred_fallthru
          _
        // Predicated region
        $region17: #{tpu_custom_call.1} parent=11 // pred_check
          %p161 = pneg %p106
        $region18: #{tpu_custom_call.1} parent=11 // pred_check_branch
          %163 = sbr.rel (%p161) target = $region20
        $region19: #{tpu_custom_call.1} parent=11 // pred_region
          %165 = vsyncadd [#allocation5], 0
          %s166 = sshll.u32 %s3, 4
          %s167 = int_to_ptr.hbm [resolvable:$true] %s166
          %s168 = sshll.u32 [#allocation4], 4
          %s169 = int_to_ptr.vmem [resolvable:$true] %s168
          %174 = dma.hbm_to_vmem [thread:$0]  %s167, 79872, %s169, [#allocation5], 3328, 3328, 208
        $region20: #{tpu_custom_call.1} parent=11 // pred_fallthru
          _
      $region12: #{tpu_custom_call.1} parent=5 // pred_fallthru
        _
      %p175 = scmp.lt.s32.totalorder %s12, 2
      // Predicated region
      $region21: #{tpu_custom_call.1} parent=5 // pred_check
        %p176 = pneg %p175
      $region22: #{tpu_custom_call.1} parent=5 // pred_check_branch
        %178 = sbr.rel (%p176) target = $region24
      $region23: #{tpu_custom_call.1} parent=5 // pred_region
        // Predicated region
        $region25: #{tpu_custom_call.1} parent=23 // pred_check
          %p179 = pneg %p32
        $region26: #{tpu_custom_call.1} parent=23 // pred_check_branch
          %181 = sbr.rel (%p179) target = $region28
        $region27: #{tpu_custom_call.1} parent=23 // pred_region
          %p182 = scmp.lt.s32.totalorder %s12, 1
          %s183 = scalar_select %p182, %s12, 1
          %s184 = smul.addr %s183, 10
          %s185 = smul.addr %s184, 8
          %s186 = scalar_lea.vmem %s0, %s185
        $region28: #{tpu_custom_call.1} parent=23 // pred_fallthru
          _
        // Predicated region
        $region29: #{tpu_custom_call.1} parent=23 // pred_check
          %p187 = pneg %p79
        $region30: #{tpu_custom_call.1} parent=23 // pred_check_branch
          %189 = sbr.rel (%p187) target = $region32
        $region31: #{tpu_custom_call.1} parent=23 // pred_region
          %p190 = scmp.lt.s32.totalorder %s12, 1
          %s191 = scalar_select %p190, %s12, 1
          %s192 = smul.addr %s191, 96
          %s193 = smul.addr %s192, 8
          %s194 = scalar_lea.vmem %s2, %s193
        $region32: #{tpu_custom_call.1} parent=23 // pred_fallthru
          _
      $region24: #{tpu_custom_call.1} parent=5 // pred_fallthru
        _
      %p195 = scmp.le.s32.totalorder 1, %s12
      %p196 = scmp.lt.s32.totalorder %s12, 3
      %p197 = pnand %p195, %p196
      %p198 = pneg %p197
      // Predicated region
      $region33: #{tpu_custom_call.1} parent=5 // pred_check
        _
      $region34: #{tpu_custom_call.1} parent=5 // pred_check_branch
        %200 = sbr.rel (%p197) target = $region36
      $region35: #{tpu_custom_call.1} parent=5 // pred_region
        %s201 = ssub.s32 %s12, 1
        // Predicated region
        $region37: #{tpu_custom_call.1} parent=35 // pred_check
          %p202 = pneg %p59
        $region38: #{tpu_custom_call.1} parent=35 // pred_check_branch
          %204 = sbr.rel (%p202) target = $region40
        $region39: #{tpu_custom_call.1} parent=35 // pred_region
          %206 = dma.done [#allocation3], 512
        $region40: #{tpu_custom_call.1} parent=35 // pred_fallthru
          _
        // Predicated region
        $region41: #{tpu_custom_call.1} parent=35 // pred_check
          %p207 = pneg %p106
        $region42: #{tpu_custom_call.1} parent=35 // pred_check_branch
          %209 = sbr.rel (%p207) target = $region44
        $region43: #{tpu_custom_call.1} parent=35 // pred_region
          %211 = dma.done [#allocation5], 79872
        $region44: #{tpu_custom_call.1} parent=35 // pred_fallthru
          _
        %p212 = scmp.lt.s32.totalorder %s17, 1
        %s213 = scalar_select %p212, %s17, 1
        %s214 = smul.addr %s213, 10
        %s215 = smul.addr %s214, 8
        %s216 = scalar_lea.vmem %s0, %s215
        %p217 = pneg %p38
        %p218 = pneg %p35
        %p219 = pneg %p59
        %p220 = pneg %p56
        %p221 = scmp.lt.s32.totalorder %s17, 1
        %s222 = scalar_select %p221, %s17, 1
        %s223 = smul.addr %s222, 96
        %s224 = smul.addr %s223, 8
        %s225 = scalar_lea.vmem %s2, %s224
        %p226 = pneg %p85
        %p227 = pneg %p82
        %p228 = pneg %p106
        %p229 = pneg %p103
        %p230 = pneg %p132
        %p231 = pneg %p129
        %p232 = scmp.lt.s32.totalorder %s17, 1
        %s233 = scalar_select %p232, %s17, 1
        %s234 = smul.addr %s233, 12
        %s235 = smul.addr %s234, 8
        %s236 = scalar_lea.vmem %s4, %s235
        %p237 = scmp.lt.s32.totalorder %s17, 1
        %s238 = scalar_select %p237, %s17, 1
        %s239 = smul.addr %s238, 10
        %s240 = smul.addr %s239, 8
        %s241 = scalar_lea.vmem %s0, %s240
        %p242 = scmp.lt.s32.totalorder %s17, 1
        %s243 = scalar_select %p242, %s17, 1
        %s244 = smul.addr %s243, 96
        %s245 = smul.addr %s244, 8
        %s246 = scalar_lea.vmem %s2, %s245
        %p247 = scmp.lt.s32.totalorder %s17, 1
        %s248 = scalar_select %p247, %s17, 1
        %s249 = smul.addr %s248, 12
        %s250 = smul.addr %s249, 8
        %s251 = scalar_lea.vmem %s4, %s250
        %v252 = vld [vmem:[#allocation2] sm:$0xff]
        %v253 = vld [vmem:[#allocation2 + $0x8] sm:$0xff]
        %v254 = vld [vmem:[#allocation2 + $0x10] sm:$0xff]
        %v255 = vld [vmem:[#allocation2 + $0x18] sm:$0xff]
        %v256 = vld [vmem:[%s241] sm:$0xff]
        %v257 = vld [vmem:[%s241 + $0x8] sm:$0xff]
        %v258 = vld [vmem:[%s241 + $0x10] sm:$0xff]
        %v259 = vld [vmem:[%s241 + $0x18] sm:$0xff]
        %v260 = vld [vmem:[%s241 + $0x20] sm:$0xff]
        %v261 = vld [vmem:[%s241 + $0x28] sm:$0xff]
        %v262 = vld [vmem:[%s241 + $0x30] sm:$0xff]
        %v263 = vld [vmem:[%s241 + $0x38] sm:$0xff]
        %v264 = vld [vmem:[%s241 + $0x40] sm:$0x1]
        %v265 = vld [vmem:[%s241 + $0x48] sm:$0x1]
        %vm266 = vcmask 269312
        %v268 = vsel %vm266, %v252, 0
        %v271 = vsel %vm266, %v253, 0
        %v274 = vsel %vm266, %v254, 0
        %v277 = vsel %vm266, %v255, 0
        %vm279 = vcmask 1040384
        %v281 = vsel %vm279, %v264, 0
        %v284 = vsel %vm279, %v265, 0
        %286 = vmatpush.msra.mxu0 0.0
        %287 = vmatpush.msra.mxu0 0.0
        %288 = vmatpush.msra.mxu0 0.0
        %289 = vmatpush.msra.mxu0 0.0
        %290 = vmatpush.msra.mxu0 0.0
        %291 = vmatpush.msra.mxu0 0.0
        %292 = vmatpush.msra.mxu0 0.0
        %293 = vmatpush.msra.mxu0 0.0
        %294 = vmatpush.msra.mxu0 0.0
        %295 = vmatpush.msra.mxu0 0.0
        %296 = vmatpush.msra.mxu0 0.0
        %297 = vmatpush.msra.mxu0 %v281
        %298 = vmatpush.msra.mxu0 %v262
        %299 = vmatpush.msra.mxu0 %v260
        %300 = vmatpush.msra.mxu0 %v258
        %301 = vmatpush.msra.mxu0 %v256
        %302 = vmatmul.f32.gmra.mxu0 %v268
        %v303 = vpop.f32.mrf.mxu0
        %v304 = vadd.f32 0.0, %v303
        %305 = vmatmul.f32.gmra.mxu0 %v271
        %v306 = vpop.f32.mrf.mxu0
        %v307 = vadd.f32 0.0, %v306
        %308 = vmatmul.f32.gmra.mxu0 %v274
        %v309 = vpop.f32.mrf.mxu0
        %v310 = vadd.f32 0.0, %v309
        %311 = vmatmul.f32.gmra.mxu0 %v277
        %v312 = vpop.f32.mrf.mxu0
        %v313 = vadd.f32 0.0, %v312
        %314 = vdwg.mxu0
        %315 = vmatpush.msra.mxu0 0.0
        %316 = vmatpush.msra.mxu0 0.0
        %317 = vmatpush.msra.mxu0 0.0
        %318 = vmatpush.msra.mxu0 0.0
        %319 = vmatpush.msra.mxu0 0.0
        %320 = vmatpush.msra.mxu0 0.0
        %321 = vmatpush.msra.mxu0 0.0
        %322 = vmatpush.msra.mxu0 0.0
        %323 = vmatpush.msra.mxu0 0.0
        %324 = vmatpush.msra.mxu0 0.0
        %325 = vmatpush.msra.mxu0 0.0
        %326 = vmatpush.msra.mxu0 %v284
        %327 = vmatpush.msra.mxu0 %v263
        %328 = vmatpush.msra.mxu0 %v261
        %329 = vmatpush.msra.mxu0 %v259
        %330 = vmatpush.msra.mxu0 %v257
        %331 = vmatmul.f32.gmra.mxu0 %v268
        %v332 = vpop.f32.mrf.mxu0
        %v333 = vadd.f32 0.0, %v332
        %334 = vmatmul.f32.gmra.mxu0 %v271
        %v335 = vpop.f32.mrf.mxu0
        %v336 = vadd.f32 0.0, %v335
        %337 = vmatmul.f32.gmra.mxu0 %v274
        %v338 = vpop.f32.mrf.mxu0
        %v339 = vadd.f32 0.0, %v338
        %340 = vmatmul.f32.gmra.mxu0 %v277
        %v341 = vpop.f32.mrf.mxu0
        %v342 = vadd.f32 0.0, %v341
        %343 = vdwg.mxu0
        %v344 = vld [vmem:[#allocation4] sm:$0xff]
        %v345 = vld [vmem:[#allocation4 + $0x8] sm:$0xff]
        %v346 = vld [vmem:[#allocation4 + $0x10] sm:$0xff]
        %v347 = vld [vmem:[#allocation4 + $0x18] sm:$0xff]
        %v348 = vld [vmem:[#allocation4 + $0x20] sm:$0xff]
        %v349 = vld [vmem:[#allocation4 + $0x28] sm:$0xff]
        %v350 = vld [vmem:[#allocation4 + $0x30] sm:$0xff]
        %v351 = vld [vmem:[#allocation4 + $0x38] sm:$0xff]
        %v352 = vld [vmem:[#allocation4 + $0x40] sm:$0xff]
        %v353 = vld [vmem:[#allocation4 + $0x48] sm:$0xff]
        %v354 = vld [vmem:[#allocation4 + $0x50] sm:$0xff]
        %v355 = vld [vmem:[#allocation4 + $0x58] sm:$0xff]
        %v356 = vld [vmem:[#allocation4 + $0x60] sm:$0xff]
        %v357 = vld [vmem:[#allocation4 + $0x68] sm:$0xff]
        %v358 = vld [vmem:[#allocation4 + $0x70] sm:$0xff]
        %v359 = vld [vmem:[#allocation4 + $0x78] sm:$0xff]
        %v360 = vld [vmem:[#allocation4 + $0x80] sm:$0xff]
        %v361 = vld [vmem:[#allocation4 + $0x88] sm:$0xff]
        %v362 = vld [vmem:[#allocation4 + $0x90] sm:$0xff]
        %v363 = vld [vmem:[#allocation4 + $0x98] sm:$0xff]
        %v364 = vld [vmem:[#allocation4 + $0xa0] sm:$0xff]
        %v365 = vld [vmem:[#allocation4 + $0xa8] sm:$0xff]
        %v366 = vld [vmem:[#allocation4 + $0xb0] sm:$0xff]
        %v367 = vld [vmem:[#allocation4 + $0xb8] sm:$0xff]
        %v368 = vld [vmem:[#allocation4 + $0xc0] sm:$0xff]
        %v369 = vld [vmem:[#allocation4 + $0xc8] sm:$0xff]
        %v370 = vld [vmem:[#allocation4 + $0xd0] sm:$0xff]
        %v371 = vld [vmem:[#allocation4 + $0xd8] sm:$0xff]
        %v372 = vld [vmem:[#allocation4 + $0xe0] sm:$0xff]
        %v373 = vld [vmem:[#allocation4 + $0xe8] sm:$0xff]
        %v374 = vld [vmem:[#allocation4 + $0xf0] sm:$0xff]
        %v375 = vld [vmem:[#allocation4 + $0xf8] sm:$0xff]
        %v376 = vld [vmem:[#allocation4 + $0x100] sm:$0xff]
        %v377 = vld [vmem:[#allocation4 + $0x108] sm:$0xff]
        %v378 = vld [vmem:[#allocation4 + $0x110] sm:$0xff]
        %v379 = vld [vmem:[#allocation4 + $0x118] sm:$0xff]
        %v380 = vld [vmem:[#allocation4 + $0x120] sm:$0xff]
        %v381 = vld [vmem:[#allocation4 + $0x128] sm:$0xff]
        %v382 = vld [vmem:[#allocation4 + $0x130] sm:$0xff]
        %v383 = vld [vmem:[#allocation4 + $0x138] sm:$0xff]
        %v384 = vld [vmem:[#allocation4 + $0x140] sm:$0xff]
        %v385 = vld [vmem:[#allocation4 + $0x148] sm:$0xff]
        %v386 = vld [vmem:[#allocation4 + $0x150] sm:$0xff]
        %v387 = vld [vmem:[#allocation4 + $0x158] sm:$0xff]
        %v388 = vld [vmem:[#allocation4 + $0x160] sm:$0xff]
        %v389 = vld [vmem:[#allocation4 + $0x168] sm:$0xff]
        %v390 = vld [vmem:[#allocation4 + $0x170] sm:$0xff]
        %v391 = vld [vmem:[#allocation4 + $0x178] sm:$0xff]
        %v392 = vld [vmem:[#allocation4 + $0x180] sm:$0xff]
        %v393 = vld [vmem:[#allocation4 + $0x188] sm:$0xff]
        %v394 = vld [vmem:[#allocation4 + $0x190] sm:$0xff]
        %v395 = vld [vmem:[#allocation4 + $0x198] sm:$0xff]
        %v396 = vld [vmem:[#allocation4 + $0x1a0] sm:$0xff]
        %v397 = vld [vmem:[#allocation4 + $0x1a8] sm:$0xff]
        %v398 = vld [vmem:[#allocation4 + $0x1b0] sm:$0xff]
        %v399 = vld [vmem:[#allocation4 + $0x1b8] sm:$0xff]
        %v400 = vld [vmem:[#allocation4 + $0x1c0] sm:$0xff]
        %v401 = vld [vmem:[#allocation4 + $0x1c8] sm:$0xff]
        %v402 = vld [vmem:[#allocation4 + $0x1d0] sm:$0xff]
        %v403 = vld [vmem:[#allocation4 + $0x1d8] sm:$0xff]
        %v404 = vld [vmem:[#allocation4 + $0x1e0] sm:$0xff]
        %v405 = vld [vmem:[#allocation4 + $0x1e8] sm:$0xff]
        %v406 = vld [vmem:[#allocation4 + $0x1f0] sm:$0xff]
        %v407 = vld [vmem:[#allocation4 + $0x1f8] sm:$0xff]
        %v408 = vld [vmem:[#allocation4 + $0x200] sm:$0xff]
        %v409 = vld [vmem:[#allocation4 + $0x208] sm:$0xff]
        %v410 = vld [vmem:[#allocation4 + $0x210] sm:$0xff]
        %v411 = vld [vmem:[#allocation4 + $0x218] sm:$0xff]
        %v412 = vld [vmem:[#allocation4 + $0x220] sm:$0xff]
        %v413 = vld [vmem:[#allocation4 + $0x228] sm:$0xff]
        %v414 = vld [vmem:[#allocation4 + $0x230] sm:$0xff]
        %v415 = vld [vmem:[#allocation4 + $0x238] sm:$0xff]
        %v416 = vld [vmem:[#allocation4 + $0x240] sm:$0xff]
        %v417 = vld [vmem:[#allocation4 + $0x248] sm:$0xff]
        %v418 = vld [vmem:[#allocation4 + $0x250] sm:$0xff]
        %v419 = vld [vmem:[#allocation4 + $0x258] sm:$0xff]
        %v420 = vld [vmem:[#allocation4 + $0x260] sm:$0xff]
        %v421 = vld [vmem:[#allocation4 + $0x268] sm:$0xff]
        %v422 = vld [vmem:[#allocation4 + $0x270] sm:$0xff]
        %v423 = vld [vmem:[#allocation4 + $0x278] sm:$0xff]
        %v424 = vld [vmem:[#allocation4 + $0x280] sm:$0xff]
        %v425 = vld [vmem:[#allocation4 + $0x288] sm:$0xff]
        %v426 = vld [vmem:[#allocation4 + $0x290] sm:$0xff]
        %v427 = vld [vmem:[#allocation4 + $0x298] sm:$0xff]
        %v428 = vld [vmem:[#allocation4 + $0x2a0] sm:$0xff]
        %v429 = vld [vmem:[#allocation4 + $0x2a8] sm:$0xff]
        %v430 = vld [vmem:[#allocation4 + $0x2b0] sm:$0xff]
        %v431 = vld [vmem:[#allocation4 + $0x2b8] sm:$0xff]
        %v432 = vld [vmem:[#allocation4 + $0x2c0] sm:$0xff]
        %v433 = vld [vmem:[#allocation4 + $0x2c8] sm:$0xff]
        %v434 = vld [vmem:[#allocation4 + $0x2d0] sm:$0xff]
        %v435 = vld [vmem:[#allocation4 + $0x2d8] sm:$0xff]
        %v436 = vld [vmem:[#allocation4 + $0x2e0] sm:$0xff]
        %v437 = vld [vmem:[#allocation4 + $0x2e8] sm:$0xff]
        %v438 = vld [vmem:[#allocation4 + $0x2f0] sm:$0xff]
        %v439 = vld [vmem:[#allocation4 + $0x2f8] sm:$0xff]
        %v440 = vld [vmem:[#allocation4 + $0x300] sm:$0xff]
        %v441 = vld [vmem:[#allocation4 + $0x308] sm:$0xff]
        %v442 = vld [vmem:[#allocation4 + $0x310] sm:$0xff]
        %v443 = vld [vmem:[#allocation4 + $0x318] sm:$0xff]
        %v444 = vld [vmem:[#allocation4 + $0x320] sm:$0xff]
        %v445 = vld [vmem:[#allocation4 + $0x328] sm:$0xff]
        %v446 = vld [vmem:[#allocation4 + $0x330] sm:$0xff]
        %v447 = vld [vmem:[#allocation4 + $0x338] sm:$0xff]
        %v448 = vld [vmem:[#allocation4 + $0x340] sm:$0xff]
        %v449 = vld [vmem:[#allocation4 + $0x348] sm:$0xff]
        %v450 = vld [vmem:[#allocation4 + $0x350] sm:$0xff]
        %v451 = vld [vmem:[#allocation4 + $0x358] sm:$0xff]
        %v452 = vld [vmem:[#allocation4 + $0x360] sm:$0xff]
        %v453 = vld [vmem:[#allocation4 + $0x368] sm:$0xff]
        %v454 = vld [vmem:[#allocation4 + $0x370] sm:$0xff]
        %v455 = vld [vmem:[#allocation4 + $0x378] sm:$0xff]
        %v456 = vld [vmem:[#allocation4 + $0x380] sm:$0xff]
        %v457 = vld [vmem:[#allocation4 + $0x388] sm:$0xff]
        %v458 = vld [vmem:[#allocation4 + $0x390] sm:$0xff]
        %v459 = vld [vmem:[#allocation4 + $0x398] sm:$0xff]
        %v460 = vld [vmem:[#allocation4 + $0x3a0] sm:$0xff]
        %v461 = vld [vmem:[#allocation4 + $0x3a8] sm:$0xff]
        %v462 = vld [vmem:[#allocation4 + $0x3b0] sm:$0xff]
        %v463 = vld [vmem:[#allocation4 + $0x3b8] sm:$0xff]
        %v464 = vld [vmem:[#allocation4 + $0x3c0] sm:$0xff]
        %v465 = vld [vmem:[#allocation4 + $0x3c8] sm:$0xff]
        %v466 = vld [vmem:[#allocation4 + $0x3d0] sm:$0xff]
        %v467 = vld [vmem:[#allocation4 + $0x3d8] sm:$0xff]
        %v468 = vld [vmem:[#allocation4 + $0x3e0] sm:$0xff]
        %v469 = vld [vmem:[#allocation4 + $0x3e8] sm:$0xff]
        %v470 = vld [vmem:[#allocation4 + $0x3f0] sm:$0xff]
        %v471 = vld [vmem:[#allocation4 + $0x3f8] sm:$0xff]
        %v472 = vld [vmem:[#allocation4 + $0x400] sm:$0xff]
        %v473 = vld [vmem:[#allocation4 + $0x408] sm:$0xff]
        %v474 = vld [vmem:[#allocation4 + $0x410] sm:$0xff]
        %v475 = vld [vmem:[#allocation4 + $0x418] sm:$0xff]
        %v476 = vld [vmem:[#allocation4 + $0x420] sm:$0xff]
        %v477 = vld [vmem:[#allocation4 + $0x428] sm:$0xff]
        %v478 = vld [vmem:[#allocation4 + $0x430] sm:$0xff]
        %v479 = vld [vmem:[#allocation4 + $0x438] sm:$0xff]
        %v480 = vld [vmem:[#allocation4 + $0x440] sm:$0xff]
        %v481 = vld [vmem:[#allocation4 + $0x448] sm:$0xff]
        %v482 = vld [vmem:[#allocation4 + $0x450] sm:$0xff]
        %v483 = vld [vmem:[#allocation4 + $0x458] sm:$0xff]
        %v484 = vld [vmem:[#allocation4 + $0x460] sm:$0xff]
        %v485 = vld [vmem:[#allocation4 + $0x468] sm:$0xff]
        %v486 = vld [vmem:[#allocation4 + $0x470] sm:$0xff]
        %v487 = vld [vmem:[#allocation4 + $0x478] sm:$0xff]
        %v488 = vld [vmem:[#allocation4 + $0x480] sm:$0xff]
        %v489 = vld [vmem:[#allocation4 + $0x488] sm:$0xff]
        %v490 = vld [vmem:[#allocation4 + $0x490] sm:$0xff]
        %v491 = vld [vmem:[#allocation4 + $0x498] sm:$0xff]
        %v492 = vld [vmem:[#allocation4 + $0x4a0] sm:$0xff]
        %v493 = vld [vmem:[#allocation4 + $0x4a8] sm:$0xff]
        %v494 = vld [vmem:[#allocation4 + $0x4b0] sm:$0xff]
        %v495 = vld [vmem:[#allocation4 + $0x4b8] sm:$0xff]
        %v496 = vld [vmem:[#allocation4 + $0x4c0] sm:$0xff]
        %v497 = vld [vmem:[#allocation4 + $0x4c8] sm:$0xff]
        %v498 = vld [vmem:[#allocation4 + $0x4d0] sm:$0xff]
        %v499 = vld [vmem:[#allocation4 + $0x4d8] sm:$0xff]
        %v500 = vld [vmem:[#allocation4 + $0x4e0] sm:$0xff]
        %v501 = vld [vmem:[#allocation4 + $0x4e8] sm:$0xff]
        %v502 = vld [vmem:[#allocation4 + $0x4f0] sm:$0xff]
        %v503 = vld [vmem:[#allocation4 + $0x4f8] sm:$0xff]
        %v504 = vld [vmem:[#allocation4 + $0x500] sm:$0xff]
        %v505 = vld [vmem:[#allocation4 + $0x508] sm:$0xff]
        %v506 = vld [vmem:[#allocation4 + $0x510] sm:$0xff]
        %v507 = vld [vmem:[#allocation4 + $0x518] sm:$0xff]
        %v508 = vld [vmem:[#allocation4 + $0x520] sm:$0xff]
        %v509 = vld [vmem:[#allocation4 + $0x528] sm:$0xff]
        %v510 = vld [vmem:[#allocation4 + $0x530] sm:$0xff]
        %v511 = vld [vmem:[#allocation4 + $0x538] sm:$0xff]
        %v512 = vld [vmem:[#allocation4 + $0x540] sm:$0xff]
        %v513 = vld [vmem:[#allocation4 + $0x548] sm:$0xff]
        %v514 = vld [vmem:[#allocation4 + $0x550] sm:$0xff]
        %v515 = vld [vmem:[#allocation4 + $0x558] sm:$0xff]
        %v516 = vld [vmem:[#allocation4 + $0x560] sm:$0xff]
        %v517 = vld [vmem:[#allocation4 + $0x568] sm:$0xff]
        %v518 = vld [vmem:[#allocation4 + $0x570] sm:$0xff]
        %v519 = vld [vmem:[#allocation4 + $0x578] sm:$0xff]
        %v520 = vld [vmem:[#allocation4 + $0x580] sm:$0xff]
        %v521 = vld [vmem:[#allocation4 + $0x588] sm:$0xff]
        %v522 = vld [vmem:[#allocation4 + $0x590] sm:$0xff]
        %v523 = vld [vmem:[#allocation4 + $0x598] sm:$0xff]
        %v524 = vld [vmem:[#allocation4 + $0x5a0] sm:$0xff]
        %v525 = vld [vmem:[#allocation4 + $0x5a8] sm:$0xff]
        %v526 = vld [vmem:[#allocation4 + $0x5b0] sm:$0xff]
        %v527 = vld [vmem:[#allocation4 + $0x5b8] sm:$0xff]
        %v528 = vld [vmem:[#allocation4 + $0x5c0] sm:$0xff]
        %v529 = vld [vmem:[#allocation4 + $0x5c8] sm:$0xff]
        %v530 = vld [vmem:[#allocation4 + $0x5d0] sm:$0xff]
        %v531 = vld [vmem:[#allocation4 + $0x5d8] sm:$0xff]
        %v532 = vld [vmem:[#allocation4 + $0x5e0] sm:$0xff]
        %v533 = vld [vmem:[#allocation4 + $0x5e8] sm:$0xff]
        %v534 = vld [vmem:[#allocation4 + $0x5f0] sm:$0xff]
        %v535 = vld [vmem:[#allocation4 + $0x5f8] sm:$0xff]
        %v536 = vld [vmem:[#allocation4 + $0x600] sm:$0xff]
        %v537 = vld [vmem:[#allocation4 + $0x608] sm:$0xff]
        %v538 = vld [vmem:[#allocation4 + $0x610] sm:$0xff]
        %v539 = vld [vmem:[#allocation4 + $0x618] sm:$0xff]
        %v540 = vld [vmem:[#allocation4 + $0x620] sm:$0xff]
        %v541 = vld [vmem:[#allocation4 + $0x628] sm:$0xff]
        %v542 = vld [vmem:[#allocation4 + $0x630] sm:$0xff]
        %v543 = vld [vmem:[#allocation4 + $0x638] sm:$0xff]
        %v544 = vld [vmem:[#allocation4 + $0x640] sm:$0xff]
        %v545 = vld [vmem:[#allocation4 + $0x648] sm:$0xff]
        %v546 = vld [vmem:[#allocation4 + $0x650] sm:$0xff]
        %v547 = vld [vmem:[#allocation4 + $0x658] sm:$0xff]
        %v548 = vld [vmem:[#allocation4 + $0x660] sm:$0xff]
        %v549 = vld [vmem:[#allocation4 + $0x668] sm:$0xff]
        %v550 = vld [vmem:[#allocation4 + $0x670] sm:$0xff]
        %v551 = vld [vmem:[#allocation4 + $0x678] sm:$0xff]
        %v552 = vld [vmem:[#allocation4 + $0x680] sm:$0xff]
        %v553 = vld [vmem:[#allocation4 + $0x688] sm:$0xff]
        %v554 = vld [vmem:[#allocation4 + $0x690] sm:$0xff]
        %v555 = vld [vmem:[#allocation4 + $0x698] sm:$0xff]
        %v556 = vld [vmem:[#allocation4 + $0x6a0] sm:$0xff]
        %v557 = vld [vmem:[#allocation4 + $0x6a8] sm:$0xff]
        %v558 = vld [vmem:[#allocation4 + $0x6b0] sm:$0xff]
        %v559 = vld [vmem:[#allocation4 + $0x6b8] sm:$0xff]
        %v560 = vld [vmem:[#allocation4 + $0x6c0] sm:$0xff]
        %v561 = vld [vmem:[#allocation4 + $0x6c8] sm:$0xff]
        %v562 = vld [vmem:[#allocation4 + $0x6d0] sm:$0xff]
        %v563 = vld [vmem:[#allocation4 + $0x6d8] sm:$0xff]
        %v564 = vld [vmem:[#allocation4 + $0x6e0] sm:$0xff]
        %v565 = vld [vmem:[#allocation4 + $0x6e8] sm:$0xff]
        %v566 = vld [vmem:[#allocation4 + $0x6f0] sm:$0xff]
        %v567 = vld [vmem:[#allocation4 + $0x6f8] sm:$0xff]
        %v568 = vld [vmem:[#allocation4 + $0x700] sm:$0xff]
        %v569 = vld [vmem:[#allocation4 + $0x708] sm:$0xff]
        %v570 = vld [vmem:[#allocation4 + $0x710] sm:$0xff]
        %v571 = vld [vmem:[#allocation4 + $0x718] sm:$0xff]
        %v572 = vld [vmem:[#allocation4 + $0x720] sm:$0xff]
        %v573 = vld [vmem:[#allocation4 + $0x728] sm:$0xff]
        %v574 = vld [vmem:[#allocation4 + $0x730] sm:$0xff]
        %v575 = vld [vmem:[#allocation4 + $0x738] sm:$0xff]
        %v576 = vld [vmem:[#allocation4 + $0x740] sm:$0xff]
        %v577 = vld [vmem:[#allocation4 + $0x748] sm:$0xff]
        %v578 = vld [vmem:[#allocation4 + $0x750] sm:$0xff]
        %v579 = vld [vmem:[#allocation4 + $0x758] sm:$0xff]
        %v580 = vld [vmem:[#allocation4 + $0x760] sm:$0xff]
        %v581 = vld [vmem:[#allocation4 + $0x768] sm:$0xff]
        %v582 = vld [vmem:[#allocation4 + $0x770] sm:$0xff]
        %v583 = vld [vmem:[#allocation4 + $0x778] sm:$0xff]
        %v584 = vld [vmem:[#allocation4 + $0x780] sm:$0xff]
        %v585 = vld [vmem:[#allocation4 + $0x788] sm:$0xff]
        %v586 = vld [vmem:[#allocation4 + $0x790] sm:$0xff]
        %v587 = vld [vmem:[#allocation4 + $0x798] sm:$0xff]
        %v588 = vld [vmem:[#allocation4 + $0x7a0] sm:$0xff]
        %v589 = vld [vmem:[#allocation4 + $0x7a8] sm:$0xff]
        %v590 = vld [vmem:[#allocation4 + $0x7b0] sm:$0xff]
        %v591 = vld [vmem:[#allocation4 + $0x7b8] sm:$0xff]
        %v592 = vld [vmem:[#allocation4 + $0x7c0] sm:$0xff]
        %v593 = vld [vmem:[#allocation4 + $0x7c8] sm:$0xff]
        %v594 = vld [vmem:[#allocation4 + $0x7d0] sm:$0xff]
        %v595 = vld [vmem:[#allocation4 + $0x7d8] sm:$0xff]
        %v596 = vld [vmem:[#allocation4 + $0x7e0] sm:$0xff]
        %v597 = vld [vmem:[#allocation4 + $0x7e8] sm:$0xff]
        %v598 = vld [vmem:[#allocation4 + $0x7f0] sm:$0xff]
        %v599 = vld [vmem:[#allocation4 + $0x7f8] sm:$0xff]
        %v600 = vld [vmem:[#allocation4 + $0x800] sm:$0xff]
        %v601 = vld [vmem:[#allocation4 + $0x808] sm:$0xff]
        %v602 = vld [vmem:[#allocation4 + $0x810] sm:$0xff]
        %v603 = vld [vmem:[#allocation4 + $0x818] sm:$0xff]
        %v604 = vld [vmem:[#allocation4 + $0x820] sm:$0xff]
        %v605 = vld [vmem:[#allocation4 + $0x828] sm:$0xff]
        %v606 = vld [vmem:[#allocation4 + $0x830] sm:$0xff]
        %v607 = vld [vmem:[#allocation4 + $0x838] sm:$0xff]
        %v608 = vld [vmem:[#allocation4 + $0x840] sm:$0xff]
        %v609 = vld [vmem:[#allocation4 + $0x848] sm:$0xff]
        %v610 = vld [vmem:[#allocation4 + $0x850] sm:$0xff]
        %v611 = vld [vmem:[#allocation4 + $0x858] sm:$0xff]
        %v612 = vld [vmem:[#allocation4 + $0x860] sm:$0xff]
        %v613 = vld [vmem:[#allocation4 + $0x868] sm:$0xff]
        %v614 = vld [vmem:[#allocation4 + $0x870] sm:$0xff]
        %v615 = vld [vmem:[#allocation4 + $0x878] sm:$0xff]
        %v616 = vld [vmem:[#allocation4 + $0x880] sm:$0xff]
        %v617 = vld [vmem:[#allocation4 + $0x888] sm:$0xff]
        %v618 = vld [vmem:[#allocation4 + $0x890] sm:$0xff]
        %v619 = vld [vmem:[#allocation4 + $0x898] sm:$0xff]
        %v620 = vld [vmem:[#allocation4 + $0x8a0] sm:$0xff]
        %v621 = vld [vmem:[#allocation4 + $0x8a8] sm:$0xff]
        %v622 = vld [vmem:[#allocation4 + $0x8b0] sm:$0xff]
        %v623 = vld [vmem:[#allocation4 + $0x8b8] sm:$0xff]
        %v624 = vld [vmem:[#allocation4 + $0x8c0] sm:$0xff]
        %v625 = vld [vmem:[#allocation4 + $0x8c8] sm:$0xff]
        %v626 = vld [vmem:[#allocation4 + $0x8d0] sm:$0xff]
        %v627 = vld [vmem:[#allocation4 + $0x8d8] sm:$0xff]
        %v628 = vld [vmem:[#allocation4 + $0x8e0] sm:$0xff]
        %v629 = vld [vmem:[#allocation4 + $0x8e8] sm:$0xff]
        %v630 = vld [vmem:[#allocation4 + $0x8f0] sm:$0xff]
        %v631 = vld [vmem:[#allocation4 + $0x8f8] sm:$0xff]
        %v632 = vld [vmem:[#allocation4 + $0x900] sm:$0xff]
        %v633 = vld [vmem:[#allocation4 + $0x908] sm:$0xff]
        %v634 = vld [vmem:[#allocation4 + $0x910] sm:$0xff]
        %v635 = vld [vmem:[#allocation4 + $0x918] sm:$0xff]
        %v636 = vld [vmem:[#allocation4 + $0x920] sm:$0xff]
        %v637 = vld [vmem:[#allocation4 + $0x928] sm:$0xff]
        %v638 = vld [vmem:[#allocation4 + $0x930] sm:$0xff]
        %v639 = vld [vmem:[#allocation4 + $0x938] sm:$0xff]
        %v640 = vld [vmem:[#allocation4 + $0x940] sm:$0xff]
        %v641 = vld [vmem:[#allocation4 + $0x948] sm:$0xff]
        %v642 = vld [vmem:[#allocation4 + $0x950] sm:$0xff]
        %v643 = vld [vmem:[#allocation4 + $0x958] sm:$0xff]
        %v644 = vld [vmem:[#allocation4 + $0x960] sm:$0xff]
        %v645 = vld [vmem:[#allocation4 + $0x968] sm:$0xff]
        %v646 = vld [vmem:[#allocation4 + $0x970] sm:$0xff]
        %v647 = vld [vmem:[#allocation4 + $0x978] sm:$0xff]
        %v648 = vld [vmem:[#allocation4 + $0x980] sm:$0xff]
        %v649 = vld [vmem:[#allocation4 + $0x988] sm:$0xff]
        %v650 = vld [vmem:[#allocation4 + $0x990] sm:$0xff]
        %v651 = vld [vmem:[#allocation4 + $0x998] sm:$0xff]
        %v652 = vld [vmem:[#allocation4 + $0x9a0] sm:$0xff]
        %v653 = vld [vmem:[#allocation4 + $0x9a8] sm:$0xff]
        %v654 = vld [vmem:[#allocation4 + $0x9b0] sm:$0xff]
        %v655 = vld [vmem:[#allocation4 + $0x9b8] sm:$0xff]
        %v656 = vld [vmem:[#allocation4 + $0x9c0] sm:$0xff]
        %v657 = vld [vmem:[#allocation4 + $0x9c8] sm:$0xff]
        %v658 = vld [vmem:[#allocation4 + $0x9d0] sm:$0xff]
        %v659 = vld [vmem:[#allocation4 + $0x9d8] sm:$0xff]
        %v660 = vld [vmem:[#allocation4 + $0x9e0] sm:$0xff]
        %v661 = vld [vmem:[#allocation4 + $0x9e8] sm:$0xff]
        %v662 = vld [vmem:[#allocation4 + $0x9f0] sm:$0xff]
        %v663 = vld [vmem:[#allocation4 + $0x9f8] sm:$0xff]
        %v664 = vld [vmem:[#allocation4 + $0xa00] sm:$0xff]
        %v665 = vld [vmem:[#allocation4 + $0xa08] sm:$0xff]
        %v666 = vld [vmem:[#allocation4 + $0xa10] sm:$0xff]
        %v667 = vld [vmem:[#allocation4 + $0xa18] sm:$0xff]
        %v668 = vld [vmem:[#allocation4 + $0xa20] sm:$0xff]
        %v669 = vld [vmem:[#allocation4 + $0xa28] sm:$0xff]
        %v670 = vld [vmem:[#allocation4 + $0xa30] sm:$0xff]
        %v671 = vld [vmem:[#allocation4 + $0xa38] sm:$0xff]
        %v672 = vld [vmem:[#allocation4 + $0xa40] sm:$0xff]
        %v673 = vld [vmem:[#allocation4 + $0xa48] sm:$0xff]
        %v674 = vld [vmem:[#allocation4 + $0xa50] sm:$0xff]
        %v675 = vld [vmem:[#allocation4 + $0xa58] sm:$0xff]
        %v676 = vld [vmem:[#allocation4 + $0xa60] sm:$0xff]
        %v677 = vld [vmem:[#allocation4 + $0xa68] sm:$0xff]
        %v678 = vld [vmem:[#allocation4 + $0xa70] sm:$0xff]
        %v679 = vld [vmem:[#allocation4 + $0xa78] sm:$0xff]
        %v680 = vld [vmem:[#allocation4 + $0xa80] sm:$0xff]
        %v681 = vld [vmem:[#allocation4 + $0xa88] sm:$0xff]
        %v682 = vld [vmem:[#allocation4 + $0xa90] sm:$0xff]
        %v683 = vld [vmem:[#allocation4 + $0xa98] sm:$0xff]
        %v684 = vld [vmem:[#allocation4 + $0xaa0] sm:$0xff]
        %v685 = vld [vmem:[#allocation4 + $0xaa8] sm:$0xff]
        %v686 = vld [vmem:[#allocation4 + $0xab0] sm:$0xff]
        %v687 = vld [vmem:[#allocation4 + $0xab8] sm:$0xff]
        %v688 = vld [vmem:[#allocation4 + $0xac0] sm:$0xff]
        %v689 = vld [vmem:[#allocation4 + $0xac8] sm:$0xff]
        %v690 = vld [vmem:[#allocation4 + $0xad0] sm:$0xff]
        %v691 = vld [vmem:[#allocation4 + $0xad8] sm:$0xff]
        %v692 = vld [vmem:[#allocation4 + $0xae0] sm:$0xff]
        %v693 = vld [vmem:[#allocation4 + $0xae8] sm:$0xff]
        %v694 = vld [vmem:[#allocation4 + $0xaf0] sm:$0xff]
        %v695 = vld [vmem:[#allocation4 + $0xaf8] sm:$0xff]
        %v696 = vld [vmem:[#allocation4 + $0xb00] sm:$0xff]
        %v697 = vld [vmem:[#allocation4 + $0xb08] sm:$0xff]
        %v698 = vld [vmem:[#allocation4 + $0xb10] sm:$0xff]
        %v699 = vld [vmem:[#allocation4 + $0xb18] sm:$0xff]
        %v700 = vld [vmem:[#allocation4 + $0xb20] sm:$0xff]
        %v701 = vld [vmem:[#allocation4 + $0xb28] sm:$0xff]
        %v702 = vld [vmem:[#allocation4 + $0xb30] sm:$0xff]
        %v703 = vld [vmem:[#allocation4 + $0xb38] sm:$0xff]
        %v704 = vld [vmem:[#allocation4 + $0xb40] sm:$0xff]
        %v705 = vld [vmem:[#allocation4 + $0xb48] sm:$0xff]
        %v706 = vld [vmem:[#allocation4 + $0xb50] sm:$0xff]
        %v707 = vld [vmem:[#allocation4 + $0xb58] sm:$0xff]
        %v708 = vld [vmem:[#allocation4 + $0xb60] sm:$0xff]
        %v709 = vld [vmem:[#allocation4 + $0xb68] sm:$0xff]
        %v710 = vld [vmem:[#allocation4 + $0xb70] sm:$0xff]
        %v711 = vld [vmem:[#allocation4 + $0xb78] sm:$0xff]
        %v712 = vld [vmem:[#allocation4 + $0xb80] sm:$0xff]
        %v713 = vld [vmem:[#allocation4 + $0xb88] sm:$0xff]
        %v714 = vld [vmem:[#allocation4 + $0xb90] sm:$0xff]
        %v715 = vld [vmem:[#allocation4 + $0xb98] sm:$0xff]
        %v716 = vld [vmem:[#allocation4 + $0xba0] sm:$0xff]
        %v717 = vld [vmem:[#allocation4 + $0xba8] sm:$0xff]
        %v718 = vld [vmem:[#allocation4 + $0xbb0] sm:$0xff]
        %v719 = vld [vmem:[#allocation4 + $0xbb8] sm:$0xff]
        %v720 = vld [vmem:[#allocation4 + $0xbc0] sm:$0xff]
        %v721 = vld [vmem:[#allocation4 + $0xbc8] sm:$0xff]
        %v722 = vld [vmem:[#allocation4 + $0xbd0] sm:$0xff]
        %v723 = vld [vmem:[#allocation4 + $0xbd8] sm:$0xff]
        %v724 = vld [vmem:[#allocation4 + $0xbe0] sm:$0xff]
        %v725 = vld [vmem:[#allocation4 + $0xbe8] sm:$0xff]
        %v726 = vld [vmem:[#allocation4 + $0xbf0] sm:$0xff]
        %v727 = vld [vmem:[#allocation4 + $0xbf8] sm:$0xff]
        %v728 = vld [vmem:[#allocation4 + $0xc00] sm:$0xff]
        %v729 = vld [vmem:[#allocation4 + $0xc08] sm:$0xff]
        %v730 = vld [vmem:[#allocation4 + $0xc10] sm:$0xff]
        %v731 = vld [vmem:[#allocation4 + $0xc18] sm:$0xff]
        %v732 = vld [vmem:[#allocation4 + $0xc20] sm:$0xff]
        %v733 = vld [vmem:[#allocation4 + $0xc28] sm:$0xff]
        %v734 = vld [vmem:[#allocation4 + $0xc30] sm:$0xff]
        %v735 = vld [vmem:[#allocation4 + $0xc38] sm:$0xff]
        %v736 = vld [vmem:[#allocation4 + $0xc40] sm:$0xff]
        %v737 = vld [vmem:[#allocation4 + $0xc48] sm:$0xff]
        %v738 = vld [vmem:[#allocation4 + $0xc50] sm:$0xff]
        %v739 = vld [vmem:[#allocation4 + $0xc58] sm:$0xff]
        %v740 = vld [vmem:[#allocation4 + $0xc60] sm:$0xff]
        %v741 = vld [vmem:[#allocation4 + $0xc68] sm:$0xff]
        %v742 = vld [vmem:[#allocation4 + $0xc70] sm:$0xff]
        %v743 = vld [vmem:[#allocation4 + $0xc78] sm:$0xff]
        %v744 = vld [vmem:[#allocation4 + $0xc80] sm:$0xff]
        %v745 = vld [vmem:[#allocation4 + $0xc88] sm:$0xff]
        %v746 = vld [vmem:[#allocation4 + $0xc90] sm:$0xff]
        %v747 = vld [vmem:[#allocation4 + $0xc98] sm:$0xff]
        %v748 = vld [vmem:[#allocation4 + $0xca0] sm:$0xff]
        %v749 = vld [vmem:[#allocation4 + $0xca8] sm:$0xff]
        %v750 = vld [vmem:[#allocation4 + $0xcb0] sm:$0xff]
        %v751 = vld [vmem:[#allocation4 + $0xcb8] sm:$0xff]
        %v752 = vld [vmem:[#allocation4 + $0xcc0] sm:$0xff]
        %v753 = vld [vmem:[#allocation4 + $0xcc8] sm:$0xff]
        %v754 = vld [vmem:[#allocation4 + $0xcd0] sm:$0xff]
        %v755 = vld [vmem:[#allocation4 + $0xcd8] sm:$0xff]
        %v756 = vld [vmem:[#allocation4 + $0xce0] sm:$0xff]
        %v757 = vld [vmem:[#allocation4 + $0xce8] sm:$0xff]
        %v758 = vld [vmem:[#allocation4 + $0xcf0] sm:$0xff]
        %v759 = vld [vmem:[#allocation4 + $0xcf8] sm:$0xff]
        %v760 = vld [vmem:[#allocation4 + $0xd00] sm:$0xff]
        %v761 = vld [vmem:[#allocation4 + $0xd08] sm:$0xff]
        %v762 = vld [vmem:[#allocation4 + $0xd10] sm:$0xff]
        %v763 = vld [vmem:[#allocation4 + $0xd18] sm:$0xff]
        %v764 = vld [vmem:[#allocation4 + $0xd20] sm:$0xff]
        %v765 = vld [vmem:[#allocation4 + $0xd28] sm:$0xff]
        %v766 = vld [vmem:[#allocation4 + $0xd30] sm:$0xff]
        %v767 = vld [vmem:[#allocation4 + $0xd38] sm:$0xff]
        %v768 = vld [vmem:[#allocation4 + $0xd40] sm:$0xff]
        %v769 = vld [vmem:[#allocation4 + $0xd48] sm:$0xff]
        %v770 = vld [vmem:[#allocation4 + $0xd50] sm:$0xff]
        %v771 = vld [vmem:[#allocation4 + $0xd58] sm:$0xff]
        %v772 = vld [vmem:[#allocation4 + $0xd60] sm:$0xff]
        %v773 = vld [vmem:[#allocation4 + $0xd68] sm:$0xff]
        %v774 = vld [vmem:[#allocation4 + $0xd70] sm:$0xff]
        %v775 = vld [vmem:[#allocation4 + $0xd78] sm:$0xff]
        %v776 = vld [vmem:[#allocation4 + $0xd80] sm:$0xff]
        %v777 = vld [vmem:[#allocation4 + $0xd88] sm:$0xff]
        %v778 = vld [vmem:[#allocation4 + $0xd90] sm:$0xff]
        %v779 = vld [vmem:[#allocation4 + $0xd98] sm:$0xff]
        %v780 = vld [vmem:[#allocation4 + $0xda0] sm:$0xff]
        %v781 = vld [vmem:[#allocation4 + $0xda8] sm:$0xff]
        %v782 = vld [vmem:[#allocation4 + $0xdb0] sm:$0xff]
        %v783 = vld [vmem:[#allocation4 + $0xdb8] sm:$0xff]
        %v784 = vld [vmem:[#allocation4 + $0xdc0] sm:$0xff]
        %v785 = vld [vmem:[#allocation4 + $0xdc8] sm:$0xff]
        %v786 = vld [vmem:[#allocation4 + $0xdd0] sm:$0xff]
        %v787 = vld [vmem:[#allocation4 + $0xdd8] sm:$0xff]
        %v788 = vld [vmem:[#allocation4 + $0xde0] sm:$0xff]
        %v789 = vld [vmem:[#allocation4 + $0xde8] sm:$0xff]
        %v790 = vld [vmem:[#allocation4 + $0xdf0] sm:$0xff]
        %v791 = vld [vmem:[#allocation4 + $0xdf8] sm:$0xff]
        %v792 = vld [vmem:[#allocation4 + $0xe00] sm:$0xff]
        %v793 = vld [vmem:[#allocation4 + $0xe08] sm:$0xff]
        %v794 = vld [vmem:[#allocation4 + $0xe10] sm:$0xff]
        %v795 = vld [vmem:[#allocation4 + $0xe18] sm:$0xff]
        %v796 = vld [vmem:[#allocation4 + $0xe20] sm:$0xff]
        %v797 = vld [vmem:[#allocation4 + $0xe28] sm:$0xff]
        %v798 = vld [vmem:[#allocation4 + $0xe30] sm:$0xff]
        %v799 = vld [vmem:[#allocation4 + $0xe38] sm:$0xff]
        %v800 = vld [vmem:[#allocation4 + $0xe40] sm:$0xff]
        %v801 = vld [vmem:[#allocation4 + $0xe48] sm:$0xff]
        %v802 = vld [vmem:[#allocation4 + $0xe50] sm:$0xff]
        %v803 = vld [vmem:[#allocation4 + $0xe58] sm:$0xff]
        %v804 = vld [vmem:[#allocation4 + $0xe60] sm:$0xff]
        %v805 = vld [vmem:[#allocation4 + $0xe68] sm:$0xff]
        %v806 = vld [vmem:[#allocation4 + $0xe70] sm:$0xff]
        %v807 = vld [vmem:[#allocation4 + $0xe78] sm:$0xff]
        %v808 = vld [vmem:[#allocation4 + $0xe80] sm:$0xff]
        %v809 = vld [vmem:[#allocation4 + $0xe88] sm:$0xff]
        %v810 = vld [vmem:[#allocation4 + $0xe90] sm:$0xff]
        %v811 = vld [vmem:[#allocation4 + $0xe98] sm:$0xff]
        %v812 = vld [vmem:[#allocation4 + $0xea0] sm:$0xff]
        %v813 = vld [vmem:[#allocation4 + $0xea8] sm:$0xff]
        %v814 = vld [vmem:[#allocation4 + $0xeb0] sm:$0xff]
        %v815 = vld [vmem:[#allocation4 + $0xeb8] sm:$0xff]
        %v816 = vld [vmem:[#allocation4 + $0xec0] sm:$0xff]
        %v817 = vld [vmem:[#allocation4 + $0xec8] sm:$0xff]
        %v818 = vld [vmem:[#allocation4 + $0xed0] sm:$0xff]
        %v819 = vld [vmem:[#allocation4 + $0xed8] sm:$0xff]
        %v820 = vld [vmem:[#allocation4 + $0xee0] sm:$0xff]
        %v821 = vld [vmem:[#allocation4 + $0xee8] sm:$0xff]
        %v822 = vld [vmem:[#allocation4 + $0xef0] sm:$0xff]
        %v823 = vld [vmem:[#allocation4 + $0xef8] sm:$0xff]
        %v824 = vld [vmem:[#allocation4 + $0xf00] sm:$0xff]
        %v825 = vld [vmem:[#allocation4 + $0xf08] sm:$0xff]
        %v826 = vld [vmem:[#allocation4 + $0xf10] sm:$0xff]
        %v827 = vld [vmem:[#allocation4 + $0xf18] sm:$0xff]
        %v828 = vld [vmem:[#allocation4 + $0xf20] sm:$0xff]
        %v829 = vld [vmem:[#allocation4 + $0xf28] sm:$0xff]
        %v830 = vld [vmem:[#allocation4 + $0xf30] sm:$0xff]
        %v831 = vld [vmem:[#allocation4 + $0xf38] sm:$0xff]
        %v832 = vld [vmem:[#allocation4 + $0xf40] sm:$0xff]
        %v833 = vld [vmem:[#allocation4 + $0xf48] sm:$0xff]
        %v834 = vld [vmem:[#allocation4 + $0xf50] sm:$0xff]
        %v835 = vld [vmem:[#allocation4 + $0xf58] sm:$0xff]
        %v836 = vld [vmem:[#allocation4 + $0xf60] sm:$0xff]
        %v837 = vld [vmem:[#allocation4 + $0xf68] sm:$0xff]
        %v838 = vld [vmem:[#allocation4 + $0xf70] sm:$0xff]
        %v839 = vld [vmem:[#allocation4 + $0xf78] sm:$0xff]
        %v840 = vld [vmem:[#allocation4 + $0xf80] sm:$0xff]
        %v841 = vld [vmem:[#allocation4 + $0xf88] sm:$0xff]
        %v842 = vld [vmem:[#allocation4 + $0xf90] sm:$0xff]
        %v843 = vld [vmem:[#allocation4 + $0xf98] sm:$0xff]
        %v844 = vld [vmem:[#allocation4 + $0xfa0] sm:$0xff]
        %v845 = vld [vmem:[#allocation4 + $0xfa8] sm:$0xff]
        %v846 = vld [vmem:[#allocation4 + $0xfb0] sm:$0xff]
        %v847 = vld [vmem:[#allocation4 + $0xfb8] sm:$0xff]
        %v848 = vld [vmem:[#allocation4 + $0xfc0] sm:$0xff]
        %v849 = vld [vmem:[#allocation4 + $0xfc8] sm:$0xff]
        %v850 = vld [vmem:[#allocation4 + $0xfd0] sm:$0xff]
        %v851 = vld [vmem:[#allocation4 + $0xfd8] sm:$0xff]
        %v852 = vld [vmem:[#allocation4 + $0xfe0] sm:$0xff]
        %v853 = vld [vmem:[#allocation4 + $0xfe8] sm:$0xff]
        %v854 = vld [vmem:[#allocation4 + $0xff0] sm:$0xff]
        %v855 = vld [vmem:[#allocation4 + $0xff8] sm:$0xff]
        %v856 = vld [vmem:[#allocation4 + $0x1000] sm:$0xff]
        %v857 = vld [vmem:[#allocation4 + $0x1008] sm:$0xff]
        %v858 = vld [vmem:[#allocation4 + $0x1010] sm:$0xff]
        %v859 = vld [vmem:[#allocation4 + $0x1018] sm:$0xff]
        %v860 = vld [vmem:[#allocation4 + $0x1020] sm:$0xff]
        %v861 = vld [vmem:[#allocation4 + $0x1028] sm:$0xff]
        %v862 = vld [vmem:[#allocation4 + $0x1030] sm:$0xff]
        %v863 = vld [vmem:[#allocation4 + $0x1038] sm:$0xff]
        %v864 = vld [vmem:[#allocation4 + $0x1040] sm:$0xff]
        %v865 = vld [vmem:[#allocation4 + $0x1048] sm:$0xff]
        %v866 = vld [vmem:[#allocation4 + $0x1050] sm:$0xff]
        %v867 = vld [vmem:[#allocation4 + $0x1058] sm:$0xff]
        %v868 = vld [vmem:[#allocation4 + $0x1060] sm:$0xff]
        %v869 = vld [vmem:[#allocation4 + $0x1068] sm:$0xff]
        %v870 = vld [vmem:[#allocation4 + $0x1070] sm:$0xff]
        %v871 = vld [vmem:[#allocation4 + $0x1078] sm:$0xff]
        %v872 = vld [vmem:[#allocation4 + $0x1080] sm:$0xff]
        %v873 = vld [vmem:[#allocation4 + $0x1088] sm:$0xff]
        %v874 = vld [vmem:[#allocation4 + $0x1090] sm:$0xff]
        %v875 = vld [vmem:[#allocation4 + $0x1098] sm:$0xff]
        %v876 = vld [vmem:[#allocation4 + $0x10a0] sm:$0xff]
        %v877 = vld [vmem:[#allocation4 + $0x10a8] sm:$0xff]
        %v878 = vld [vmem:[#allocation4 + $0x10b0] sm:$0xff]
        %v879 = vld [vmem:[#allocation4 + $0x10b8] sm:$0xff]
        %v880 = vld [vmem:[#allocation4 + $0x10c0] sm:$0xff]
        %v881 = vld [vmem:[#allocation4 + $0x10c8] sm:$0xff]
        %v882 = vld [vmem:[#allocation4 + $0x10d0] sm:$0xff]
        %v883 = vld [vmem:[#allocation4 + $0x10d8] sm:$0xff]
        %v884 = vld [vmem:[#allocation4 + $0x10e0] sm:$0xff]
        %v885 = vld [vmem:[#allocation4 + $0x10e8] sm:$0xff]
        %v886 = vld [vmem:[#allocation4 + $0x10f0] sm:$0xff]
        %v887 = vld [vmem:[#allocation4 + $0x10f8] sm:$0xff]
        %v888 = vld [vmem:[#allocation4 + $0x1100] sm:$0xff]
        %v889 = vld [vmem:[#allocation4 + $0x1108] sm:$0xff]
        %v890 = vld [vmem:[#allocation4 + $0x1110] sm:$0xff]
        %v891 = vld [vmem:[#allocation4 + $0x1118] sm:$0xff]
        %v892 = vld [vmem:[#allocation4 + $0x1120] sm:$0xff]
        %v893 = vld [vmem:[#allocation4 + $0x1128] sm:$0xff]
        %v894 = vld [vmem:[#allocation4 + $0x1130] sm:$0xff]
        %v895 = vld [vmem:[#allocation4 + $0x1138] sm:$0xff]
        %v896 = vld [vmem:[#allocation4 + $0x1140] sm:$0xff]
        %v897 = vld [vmem:[#allocation4 + $0x1148] sm:$0xff]
        %v898 = vld [vmem:[#allocation4 + $0x1150] sm:$0xff]
        %v899 = vld [vmem:[#allocation4 + $0x1158] sm:$0xff]
        %v900 = vld [vmem:[#allocation4 + $0x1160] sm:$0xff]
        %v901 = vld [vmem:[#allocation4 + $0x1168] sm:$0xff]
        %v902 = vld [vmem:[#allocation4 + $0x1170] sm:$0xff]
        %v903 = vld [vmem:[#allocation4 + $0x1178] sm:$0xff]
        %v904 = vld [vmem:[#allocation4 + $0x1180] sm:$0xff]
        %v905 = vld [vmem:[#allocation4 + $0x1188] sm:$0xff]
        %v906 = vld [vmem:[#allocation4 + $0x1190] sm:$0xff]
        %v907 = vld [vmem:[#allocation4 + $0x1198] sm:$0xff]
        %v908 = vld [vmem:[#allocation4 + $0x11a0] sm:$0xff]
        %v909 = vld [vmem:[#allocation4 + $0x11a8] sm:$0xff]
        %v910 = vld [vmem:[#allocation4 + $0x11b0] sm:$0xff]
        %v911 = vld [vmem:[#allocation4 + $0x11b8] sm:$0xff]
        %v912 = vld [vmem:[#allocation4 + $0x11c0] sm:$0xff]
        %v913 = vld [vmem:[#allocation4 + $0x11c8] sm:$0xff]
        %v914 = vld [vmem:[#allocation4 + $0x11d0] sm:$0xff]
        %v915 = vld [vmem:[#allocation4 + $0x11d8] sm:$0xff]
        %v916 = vld [vmem:[#allocation4 + $0x11e0] sm:$0xff]
        %v917 = vld [vmem:[#allocation4 + $0x11e8] sm:$0xff]
        %v918 = vld [vmem:[#allocation4 + $0x11f0] sm:$0xff]
        %v919 = vld [vmem:[#allocation4 + $0x11f8] sm:$0xff]
        %v920 = vld [vmem:[#allocation4 + $0x1200] sm:$0xff]
        %v921 = vld [vmem:[#allocation4 + $0x1208] sm:$0xff]
        %v922 = vld [vmem:[#allocation4 + $0x1210] sm:$0xff]
        %v923 = vld [vmem:[#allocation4 + $0x1218] sm:$0xff]
        %v924 = vld [vmem:[#allocation4 + $0x1220] sm:$0xff]
        %v925 = vld [vmem:[#allocation4 + $0x1228] sm:$0xff]
        %v926 = vld [vmem:[#allocation4 + $0x1230] sm:$0xff]
        %v927 = vld [vmem:[#allocation4 + $0x1238] sm:$0xff]
        %v928 = vld [vmem:[#allocation4 + $0x1240] sm:$0xff]
        %v929 = vld [vmem:[#allocation4 + $0x1248] sm:$0xff]
        %v930 = vld [vmem:[#allocation4 + $0x1250] sm:$0xff]
        %v931 = vld [vmem:[#allocation4 + $0x1258] sm:$0xff]
        %v932 = vld [vmem:[#allocation4 + $0x1260] sm:$0xff]
        %v933 = vld [vmem:[#allocation4 + $0x1268] sm:$0xff]
        %v934 = vld [vmem:[#allocation4 + $0x1270] sm:$0xff]
        %v935 = vld [vmem:[#allocation4 + $0x1278] sm:$0xff]
        %v936 = vld [vmem:[#allocation4 + $0x1280] sm:$0xff]
        %v937 = vld [vmem:[#allocation4 + $0x1288] sm:$0xff]
        %v938 = vld [vmem:[#allocation4 + $0x1290] sm:$0xff]
        %v939 = vld [vmem:[#allocation4 + $0x1298] sm:$0xff]
        %v940 = vld [vmem:[#allocation4 + $0x12a0] sm:$0xff]
        %v941 = vld [vmem:[#allocation4 + $0x12a8] sm:$0xff]
        %v942 = vld [vmem:[#allocation4 + $0x12b0] sm:$0xff]
        %v943 = vld [vmem:[#allocation4 + $0x12b8] sm:$0xff]
        %v944 = vld [vmem:[#allocation4 + $0x12c0] sm:$0xff]
        %v945 = vld [vmem:[#allocation4 + $0x12c8] sm:$0xff]
        %v946 = vld [vmem:[#allocation4 + $0x12d0] sm:$0xff]
        %v947 = vld [vmem:[#allocation4 + $0x12d8] sm:$0xff]
        %v948 = vld [vmem:[#allocation4 + $0x12e0] sm:$0xff]
        %v949 = vld [vmem:[#allocation4 + $0x12e8] sm:$0xff]
        %v950 = vld [vmem:[#allocation4 + $0x12f0] sm:$0xff]
        %v951 = vld [vmem:[#allocation4 + $0x12f8] sm:$0xff]
        %v952 = vld [vmem:[#allocation4 + $0x1300] sm:$0xff]
        %v953 = vld [vmem:[#allocation4 + $0x1308] sm:$0xff]
        %v954 = vld [vmem:[#allocation4 + $0x1310] sm:$0xff]
        %v955 = vld [vmem:[#allocation4 + $0x1318] sm:$0xff]
        %v956 = vld [vmem:[#allocation4 + $0x1320] sm:$0xff]
        %v957 = vld [vmem:[#allocation4 + $0x1328] sm:$0xff]
        %v958 = vld [vmem:[#allocation4 + $0x1330] sm:$0xff]
        %v959 = vld [vmem:[#allocation4 + $0x1338] sm:$0xff]
        %v960 = vld [vmem:[#allocation4 + $0x1340] sm:$0xff]
        %v961 = vld [vmem:[#allocation4 + $0x1348] sm:$0xff]
        %v962 = vld [vmem:[#allocation4 + $0x1350] sm:$0xff]
        %v963 = vld [vmem:[#allocation4 + $0x1358] sm:$0xff]
        %v964 = vld [vmem:[#allocation4 + $0x1360] sm:$0xff]
        %v965 = vld [vmem:[#allocation4 + $0x1368] sm:$0xff]
        %v966 = vld [vmem:[#allocation4 + $0x1370] sm:$0xff]
        %v967 = vld [vmem:[#allocation4 + $0x1378] sm:$0xff]
        %vm968 = vcmask 523264
        %v970 = vsel %vm968, %v339, 0
        %v973 = vsel %vm968, %v342, 0
        %975 = vmatpush.msra.mxu0 %v734
        %976 = vmatpush.msra.mxu0 %v708
        %977 = vmatpush.msra.mxu0 %v682
        %978 = vmatpush.msra.mxu0 %v656
        %979 = vmatpush.msra.mxu0 %v630
        %980 = vmatpush.msra.mxu0 %v604
        %981 = vmatpush.msra.mxu0 %v578
        %982 = vmatpush.msra.mxu0 %v552
        %983 = vmatpush.msra.mxu0 %v526
        %984 = vmatpush.msra.mxu0 %v500
        %985 = vmatpush.msra.mxu0 %v474
        %986 = vmatpush.msra.mxu0 %v448
        %987 = vmatpush.msra.mxu0 %v422
        %988 = vmatpush.msra.mxu0 %v396
        %989 = vmatpush.msra.mxu0 %v370
        %990 = vmatpush.msra.mxu0 %v344
        %991 = vmatmul.f32.gmra.mxu0 %v310
        %v992 = vpop.f32.mrf.mxu0
        %v993 = vadd.f32 0.0, %v992
        %994 = vmatmul.f32.gmra.mxu0 %v313
        %v995 = vpop.f32.mrf.mxu0
        %v996 = vadd.f32 0.0, %v995
        %997 = vdwg.mxu0
        %998 = vmatpush.msra.mxu0 0.0
        %999 = vmatpush.msra.mxu0 0.0
        %1000 = vmatpush.msra.mxu0 0.0
        %1001 = vmatpush.msra.mxu0 0.0
        %1002 = vmatpush.msra.mxu0 0.0
        %1003 = vmatpush.msra.mxu0 0.0
        %1004 = vmatpush.msra.mxu0 0.0
        %1005 = vmatpush.msra.mxu0 0.0
        %1006 = vmatpush.msra.mxu0 %v942
        %1007 = vmatpush.msra.mxu0 %v916
        %1008 = vmatpush.msra.mxu0 %v890
        %1009 = vmatpush.msra.mxu0 %v864
        %1010 = vmatpush.msra.mxu0 %v838
        %1011 = vmatpush.msra.mxu0 %v812
        %1012 = vmatpush.msra.mxu0 %v786
        %1013 = vmatpush.msra.mxu0 %v760
        %1014 = vmatmul.f32.gmra.mxu0 %v970
        %v1015 = vpop.f32.mrf.mxu0
        %v1016 = vadd.f32 %v993, %v1015
        %1017 = vmatmul.f32.gmra.mxu0 %v973
        %v1018 = vpop.f32.mrf.mxu0
        %v1019 = vadd.f32 %v996, %v1018
        %1020 = vdwg.mxu0
        %1021 = vmatpush.msra.mxu0 %v735
        %1022 = vmatpush.msra.mxu0 %v709
        %1023 = vmatpush.msra.mxu0 %v683
        %1024 = vmatpush.msra.mxu0 %v657
        %1025 = vmatpush.msra.mxu0 %v631
        %1026 = vmatpush.msra.mxu0 %v605
        %1027 = vmatpush.msra.mxu0 %v579
        %1028 = vmatpush.msra.mxu0 %v553
        %1029 = vmatpush.msra.mxu0 %v527
        %1030 = vmatpush.msra.mxu0 %v501
        %1031 = vmatpush.msra.mxu0 %v475
        %1032 = vmatpush.msra.mxu0 %v449
        %1033 = vmatpush.msra.mxu0 %v423
        %1034 = vmatpush.msra.mxu0 %v397
        %1035 = vmatpush.msra.mxu0 %v371
        %1036 = vmatpush.msra.mxu0 %v345
        %1037 = vmatmul.f32.gmra.mxu0 %v310
        %v1038 = vpop.f32.mrf.mxu0
        %v1039 = vadd.f32 0.0, %v1038
        %1040 = vmatmul.f32.gmra.mxu0 %v313
        %v1041 = vpop.f32.mrf.mxu0
        %v1042 = vadd.f32 0.0, %v1041
        %1043 = vdwg.mxu0
        %1044 = vmatpush.msra.mxu0 0.0
        %1045 = vmatpush.msra.mxu0 0.0
        %1046 = vmatpush.msra.mxu0 0.0
        %1047 = vmatpush.msra.mxu0 0.0
        %1048 = vmatpush.msra.mxu0 0.0
        %1049 = vmatpush.msra.mxu0 0.0
        %1050 = vmatpush.msra.mxu0 0.0
        %1051 = vmatpush.msra.mxu0 0.0
        %1052 = vmatpush.msra.mxu0 %v943
        %1053 = vmatpush.msra.mxu0 %v917
        %1054 = vmatpush.msra.mxu0 %v891
        %1055 = vmatpush.msra.mxu0 %v865
        %1056 = vmatpush.msra.mxu0 %v839
        %1057 = vmatpush.msra.mxu0 %v813
        %1058 = vmatpush.msra.mxu0 %v787
        %1059 = vmatpush.msra.mxu0 %v761
        %1060 = vmatmul.f32.gmra.mxu0 %v970
        %v1061 = vpop.f32.mrf.mxu0
        %v1062 = vadd.f32 %v1039, %v1061
        %1063 = vmatmul.f32.gmra.mxu0 %v973
        %v1064 = vpop.f32.mrf.mxu0
        %v1065 = vadd.f32 %v1042, %v1064
        %1066 = vdwg.mxu0
        %1067 = vmatpush.msra.mxu0 %v736
        %1068 = vmatpush.msra.mxu0 %v710
        %1069 = vmatpush.msra.mxu0 %v684
        %1070 = vmatpush.msra.mxu0 %v658
        %1071 = vmatpush.msra.mxu0 %v632
        %1072 = vmatpush.msra.mxu0 %v606
        %1073 = vmatpush.msra.mxu0 %v580
        %1074 = vmatpush.msra.mxu0 %v554
        %1075 = vmatpush.msra.mxu0 %v528
        %1076 = vmatpush.msra.mxu0 %v502
        %1077 = vmatpush.msra.mxu0 %v476
        %1078 = vmatpush.msra.mxu0 %v450
        %1079 = vmatpush.msra.mxu0 %v424
        %1080 = vmatpush.msra.mxu0 %v398
        %1081 = vmatpush.msra.mxu0 %v372
        %1082 = vmatpush.msra.mxu0 %v346
        %1083 = vmatmul.f32.gmra.mxu0 %v310
        %v1084 = vpop.f32.mrf.mxu0
        %v1085 = vadd.f32 0.0, %v1084
        %1086 = vmatmul.f32.gmra.mxu0 %v313
        %v1087 = vpop.f32.mrf.mxu0
        %v1088 = vadd.f32 0.0, %v1087
        %1089 = vdwg.mxu0
        %1090 = vmatpush.msra.mxu0 0.0
        %1091 = vmatpush.msra.mxu0 0.0
        %1092 = vmatpush.msra.mxu0 0.0
        %1093 = vmatpush.msra.mxu0 0.0
        %1094 = vmatpush.msra.mxu0 0.0
        %1095 = vmatpush.msra.mxu0 0.0
        %1096 = vmatpush.msra.mxu0 0.0
        %1097 = vmatpush.msra.mxu0 0.0
        %1098 = vmatpush.msra.mxu0 %v944
        %1099 = vmatpush.msra.mxu0 %v918
        %1100 = vmatpush.msra.mxu0 %v892
        %1101 = vmatpush.msra.mxu0 %v866
        %1102 = vmatpush.msra.mxu0 %v840
        %1103 = vmatpush.msra.mxu0 %v814
        %1104 = vmatpush.msra.mxu0 %v788
        %1105 = vmatpush.msra.mxu0 %v762
        %1106 = vmatmul.f32.gmra.mxu0 %v970
        %v1107 = vpop.f32.mrf.mxu0
        %v1108 = vadd.f32 %v1085, %v1107
        %1109 = vmatmul.f32.gmra.mxu0 %v973
        %v1110 = vpop.f32.mrf.mxu0
        %v1111 = vadd.f32 %v1088, %v1110
        %1112 = vdwg.mxu0
        %1113 = vmatpush.msra.mxu0 %v737
        %1114 = vmatpush.msra.mxu0 %v711
        %1115 = vmatpush.msra.mxu0 %v685
        %1116 = vmatpush.msra.mxu0 %v659
        %1117 = vmatpush.msra.mxu0 %v633
        %1118 = vmatpush.msra.mxu0 %v607
        %1119 = vmatpush.msra.mxu0 %v581
        %1120 = vmatpush.msra.mxu0 %v555
        %1121 = vmatpush.msra.mxu0 %v529
        %1122 = vmatpush.msra.mxu0 %v503
        %1123 = vmatpush.msra.mxu0 %v477
        %1124 = vmatpush.msra.mxu0 %v451
        %1125 = vmatpush.msra.mxu0 %v425
        %1126 = vmatpush.msra.mxu0 %v399
        %1127 = vmatpush.msra.mxu0 %v373
        %1128 = vmatpush.msra.mxu0 %v347
        %1129 = vmatmul.f32.gmra.mxu0 %v310
        %v1130 = vpop.f32.mrf.mxu0
        %v1131 = vadd.f32 0.0, %v1130
        %1132 = vmatmul.f32.gmra.mxu0 %v313
        %v1133 = vpop.f32.mrf.mxu0
        %v1134 = vadd.f32 0.0, %v1133
        %1135 = vdwg.mxu0
        %1136 = vmatpush.msra.mxu0 0.0
        %1137 = vmatpush.msra.mxu0 0.0
        %1138 = vmatpush.msra.mxu0 0.0
        %1139 = vmatpush.msra.mxu0 0.0
        %1140 = vmatpush.msra.mxu0 0.0
        %1141 = vmatpush.msra.mxu0 0.0
        %1142 = vmatpush.msra.mxu0 0.0
        %1143 = vmatpush.msra.mxu0 0.0
        %1144 = vmatpush.msra.mxu0 %v945
        %1145 = vmatpush.msra.mxu0 %v919
        %1146 = vmatpush.msra.mxu0 %v893
        %1147 = vmatpush.msra.mxu0 %v867
        %1148 = vmatpush.msra.mxu0 %v841
        %1149 = vmatpush.msra.mxu0 %v815
        %1150 = vmatpush.msra.mxu0 %v789
        %1151 = vmatpush.msra.mxu0 %v763
        %1152 = vmatmul.f32.gmra.mxu0 %v970
        %v1153 = vpop.f32.mrf.mxu0
        %v1154 = vadd.f32 %v1131, %v1153
        %1155 = vmatmul.f32.gmra.mxu0 %v973
        %v1156 = vpop.f32.mrf.mxu0
        %v1157 = vadd.f32 %v1134, %v1156
        %1158 = vdwg.mxu0
        %1159 = vmatpush.msra.mxu0 %v738
        %1160 = vmatpush.msra.mxu0 %v712
        %1161 = vmatpush.msra.mxu0 %v686
        %1162 = vmatpush.msra.mxu0 %v660
        %1163 = vmatpush.msra.mxu0 %v634
        %1164 = vmatpush.msra.mxu0 %v608
        %1165 = vmatpush.msra.mxu0 %v582
        %1166 = vmatpush.msra.mxu0 %v556
        %1167 = vmatpush.msra.mxu0 %v530
        %1168 = vmatpush.msra.mxu0 %v504
        %1169 = vmatpush.msra.mxu0 %v478
        %1170 = vmatpush.msra.mxu0 %v452
        %1171 = vmatpush.msra.mxu0 %v426
        %1172 = vmatpush.msra.mxu0 %v400
        %1173 = vmatpush.msra.mxu0 %v374
        %1174 = vmatpush.msra.mxu0 %v348
        %1175 = vmatmul.f32.gmra.mxu0 %v310
        %v1176 = vpop.f32.mrf.mxu0
        %v1177 = vadd.f32 0.0, %v1176
        %1178 = vmatmul.f32.gmra.mxu0 %v313
        %v1179 = vpop.f32.mrf.mxu0
        %v1180 = vadd.f32 0.0, %v1179
        %1181 = vdwg.mxu0
        %1182 = vmatpush.msra.mxu0 0.0
        %1183 = vmatpush.msra.mxu0 0.0
        %1184 = vmatpush.msra.mxu0 0.0
        %1185 = vmatpush.msra.mxu0 0.0
        %1186 = vmatpush.msra.mxu0 0.0
        %1187 = vmatpush.msra.mxu0 0.0
        %1188 = vmatpush.msra.mxu0 0.0
        %1189 = vmatpush.msra.mxu0 0.0
        %1190 = vmatpush.msra.mxu0 %v946
        %1191 = vmatpush.msra.mxu0 %v920
        %1192 = vmatpush.msra.mxu0 %v894
        %1193 = vmatpush.msra.mxu0 %v868
        %1194 = vmatpush.msra.mxu0 %v842
        %1195 = vmatpush.msra.mxu0 %v816
        %1196 = vmatpush.msra.mxu0 %v790
        %1197 = vmatpush.msra.mxu0 %v764
        %1198 = vmatmul.f32.gmra.mxu0 %v970
        %v1199 = vpop.f32.mrf.mxu0
        %v1200 = vadd.f32 %v1177, %v1199
        %1201 = vmatmul.f32.gmra.mxu0 %v973
        %v1202 = vpop.f32.mrf.mxu0
        %v1203 = vadd.f32 %v1180, %v1202
        %1204 = vdwg.mxu0
        %1205 = vmatpush.msra.mxu0 %v739
        %1206 = vmatpush.msra.mxu0 %v713
        %1207 = vmatpush.msra.mxu0 %v687
        %1208 = vmatpush.msra.mxu0 %v661
        %1209 = vmatpush.msra.mxu0 %v635
        %1210 = vmatpush.msra.mxu0 %v609
        %1211 = vmatpush.msra.mxu0 %v583
        %1212 = vmatpush.msra.mxu0 %v557
        %1213 = vmatpush.msra.mxu0 %v531
        %1214 = vmatpush.msra.mxu0 %v505
        %1215 = vmatpush.msra.mxu0 %v479
        %1216 = vmatpush.msra.mxu0 %v453
        %1217 = vmatpush.msra.mxu0 %v427
        %1218 = vmatpush.msra.mxu0 %v401
        %1219 = vmatpush.msra.mxu0 %v375
        %1220 = vmatpush.msra.mxu0 %v349
        %1221 = vmatmul.f32.gmra.mxu0 %v310
        %v1222 = vpop.f32.mrf.mxu0
        %v1223 = vadd.f32 0.0, %v1222
        %1224 = vmatmul.f32.gmra.mxu0 %v313
        %v1225 = vpop.f32.mrf.mxu0
        %v1226 = vadd.f32 0.0, %v1225
        %1227 = vdwg.mxu0
        %1228 = vmatpush.msra.mxu0 0.0
        %1229 = vmatpush.msra.mxu0 0.0
        %1230 = vmatpush.msra.mxu0 0.0
        %1231 = vmatpush.msra.mxu0 0.0
        %1232 = vmatpush.msra.mxu0 0.0
        %1233 = vmatpush.msra.mxu0 0.0
        %1234 = vmatpush.msra.mxu0 0.0
        %1235 = vmatpush.msra.mxu0 0.0
        %1236 = vmatpush.msra.mxu0 %v947
        %1237 = vmatpush.msra.mxu0 %v921
        %1238 = vmatpush.msra.mxu0 %v895
        %1239 = vmatpush.msra.mxu0 %v869
        %1240 = vmatpush.msra.mxu0 %v843
        %1241 = vmatpush.msra.mxu0 %v817
        %1242 = vmatpush.msra.mxu0 %v791
        %1243 = vmatpush.msra.mxu0 %v765
        %1244 = vmatmul.f32.gmra.mxu0 %v970
        %v1245 = vpop.f32.mrf.mxu0
        %v1246 = vadd.f32 %v1223, %v1245
        %1247 = vmatmul.f32.gmra.mxu0 %v973
        %v1248 = vpop.f32.mrf.mxu0
        %v1249 = vadd.f32 %v1226, %v1248
        %1250 = vdwg.mxu0
        %1251 = vmatpush.msra.mxu0 %v740
        %1252 = vmatpush.msra.mxu0 %v714
        %1253 = vmatpush.msra.mxu0 %v688
        %1254 = vmatpush.msra.mxu0 %v662
        %1255 = vmatpush.msra.mxu0 %v636
        %1256 = vmatpush.msra.mxu0 %v610
        %1257 = vmatpush.msra.mxu0 %v584
        %1258 = vmatpush.msra.mxu0 %v558
        %1259 = vmatpush.msra.mxu0 %v532
        %1260 = vmatpush.msra.mxu0 %v506
        %1261 = vmatpush.msra.mxu0 %v480
        %1262 = vmatpush.msra.mxu0 %v454
        %1263 = vmatpush.msra.mxu0 %v428
        %1264 = vmatpush.msra.mxu0 %v402
        %1265 = vmatpush.msra.mxu0 %v376
        %1266 = vmatpush.msra.mxu0 %v350
        %1267 = vmatmul.f32.gmra.mxu0 %v310
        %v1268 = vpop.f32.mrf.mxu0
        %v1269 = vadd.f32 0.0, %v1268
        %1270 = vmatmul.f32.gmra.mxu0 %v313
        %v1271 = vpop.f32.mrf.mxu0
        %v1272 = vadd.f32 0.0, %v1271
        %1273 = vdwg.mxu0
        %1274 = vmatpush.msra.mxu0 0.0
        %1275 = vmatpush.msra.mxu0 0.0
        %1276 = vmatpush.msra.mxu0 0.0
        %1277 = vmatpush.msra.mxu0 0.0
        %1278 = vmatpush.msra.mxu0 0.0
        %1279 = vmatpush.msra.mxu0 0.0
        %1280 = vmatpush.msra.mxu0 0.0
        %1281 = vmatpush.msra.mxu0 0.0
        %1282 = vmatpush.msra.mxu0 %v948
        %1283 = vmatpush.msra.mxu0 %v922
        %1284 = vmatpush.msra.mxu0 %v896
        %1285 = vmatpush.msra.mxu0 %v870
        %1286 = vmatpush.msra.mxu0 %v844
        %1287 = vmatpush.msra.mxu0 %v818
        %1288 = vmatpush.msra.mxu0 %v792
        %1289 = vmatpush.msra.mxu0 %v766
        %1290 = vmatmul.f32.gmra.mxu0 %v970
        %v1291 = vpop.f32.mrf.mxu0
        %v1292 = vadd.f32 %v1269, %v1291
        %1293 = vmatmul.f32.gmra.mxu0 %v973
        %v1294 = vpop.f32.mrf.mxu0
        %v1295 = vadd.f32 %v1272, %v1294
        %1296 = vdwg.mxu0
        %1297 = vmatpush.msra.mxu0 %v741
        %1298 = vmatpush.msra.mxu0 %v715
        %1299 = vmatpush.msra.mxu0 %v689
        %1300 = vmatpush.msra.mxu0 %v663
        %1301 = vmatpush.msra.mxu0 %v637
        %1302 = vmatpush.msra.mxu0 %v611
        %1303 = vmatpush.msra.mxu0 %v585
        %1304 = vmatpush.msra.mxu0 %v559
        %1305 = vmatpush.msra.mxu0 %v533
        %1306 = vmatpush.msra.mxu0 %v507
        %1307 = vmatpush.msra.mxu0 %v481
        %1308 = vmatpush.msra.mxu0 %v455
        %1309 = vmatpush.msra.mxu0 %v429
        %1310 = vmatpush.msra.mxu0 %v403
        %1311 = vmatpush.msra.mxu0 %v377
        %1312 = vmatpush.msra.mxu0 %v351
        %1313 = vmatmul.f32.gmra.mxu0 %v310
        %v1314 = vpop.f32.mrf.mxu0
        %v1315 = vadd.f32 0.0, %v1314
        %1316 = vmatmul.f32.gmra.mxu0 %v313
        %v1317 = vpop.f32.mrf.mxu0
        %v1318 = vadd.f32 0.0, %v1317
        %1319 = vdwg.mxu0
        %1320 = vmatpush.msra.mxu0 0.0
        %1321 = vmatpush.msra.mxu0 0.0
        %1322 = vmatpush.msra.mxu0 0.0
        %1323 = vmatpush.msra.mxu0 0.0
        %1324 = vmatpush.msra.mxu0 0.0
        %1325 = vmatpush.msra.mxu0 0.0
        %1326 = vmatpush.msra.mxu0 0.0
        %1327 = vmatpush.msra.mxu0 0.0
        %1328 = vmatpush.msra.mxu0 %v949
        %1329 = vmatpush.msra.mxu0 %v923
        %1330 = vmatpush.msra.mxu0 %v897
        %1331 = vmatpush.msra.mxu0 %v871
        %1332 = vmatpush.msra.mxu0 %v845
        %1333 = vmatpush.msra.mxu0 %v819
        %1334 = vmatpush.msra.mxu0 %v793
        %1335 = vmatpush.msra.mxu0 %v767
        %1336 = vmatmul.f32.gmra.mxu0 %v970
        %v1337 = vpop.f32.mrf.mxu0
        %v1338 = vadd.f32 %v1315, %v1337
        %1339 = vmatmul.f32.gmra.mxu0 %v973
        %v1340 = vpop.f32.mrf.mxu0
        %v1341 = vadd.f32 %v1318, %v1340
        %1342 = vdwg.mxu0
        %1343 = vmatpush.msra.mxu0 %v742
        %1344 = vmatpush.msra.mxu0 %v716
        %1345 = vmatpush.msra.mxu0 %v690
        %1346 = vmatpush.msra.mxu0 %v664
        %1347 = vmatpush.msra.mxu0 %v638
        %1348 = vmatpush.msra.mxu0 %v612
        %1349 = vmatpush.msra.mxu0 %v586
        %1350 = vmatpush.msra.mxu0 %v560
        %1351 = vmatpush.msra.mxu0 %v534
        %1352 = vmatpush.msra.mxu0 %v508
        %1353 = vmatpush.msra.mxu0 %v482
        %1354 = vmatpush.msra.mxu0 %v456
        %1355 = vmatpush.msra.mxu0 %v430
        %1356 = vmatpush.msra.mxu0 %v404
        %1357 = vmatpush.msra.mxu0 %v378
        %1358 = vmatpush.msra.mxu0 %v352
        %1359 = vmatmul.f32.gmra.mxu0 %v310
        %v1360 = vpop.f32.mrf.mxu0
        %v1361 = vadd.f32 0.0, %v1360
        %1362 = vmatmul.f32.gmra.mxu0 %v313
        %v1363 = vpop.f32.mrf.mxu0
        %v1364 = vadd.f32 0.0, %v1363
        %1365 = vdwg.mxu0
        %1366 = vmatpush.msra.mxu0 0.0
        %1367 = vmatpush.msra.mxu0 0.0
        %1368 = vmatpush.msra.mxu0 0.0
        %1369 = vmatpush.msra.mxu0 0.0
        %1370 = vmatpush.msra.mxu0 0.0
        %1371 = vmatpush.msra.mxu0 0.0
        %1372 = vmatpush.msra.mxu0 0.0
        %1373 = vmatpush.msra.mxu0 0.0
        %1374 = vmatpush.msra.mxu0 %v950
        %1375 = vmatpush.msra.mxu0 %v924
        %1376 = vmatpush.msra.mxu0 %v898
        %1377 = vmatpush.msra.mxu0 %v872
        %1378 = vmatpush.msra.mxu0 %v846
        %1379 = vmatpush.msra.mxu0 %v820
        %1380 = vmatpush.msra.mxu0 %v794
        %1381 = vmatpush.msra.mxu0 %v768
        %1382 = vmatmul.f32.gmra.mxu0 %v970
        %v1383 = vpop.f32.mrf.mxu0
        %v1384 = vadd.f32 %v1361, %v1383
        %1385 = vmatmul.f32.gmra.mxu0 %v973
        %v1386 = vpop.f32.mrf.mxu0
        %v1387 = vadd.f32 %v1364, %v1386
        %1388 = vdwg.mxu0
        %1389 = vmatpush.msra.mxu0 %v743
        %1390 = vmatpush.msra.mxu0 %v717
        %1391 = vmatpush.msra.mxu0 %v691
        %1392 = vmatpush.msra.mxu0 %v665
        %1393 = vmatpush.msra.mxu0 %v639
        %1394 = vmatpush.msra.mxu0 %v613
        %1395 = vmatpush.msra.mxu0 %v587
        %1396 = vmatpush.msra.mxu0 %v561
        %1397 = vmatpush.msra.mxu0 %v535
        %1398 = vmatpush.msra.mxu0 %v509
        %1399 = vmatpush.msra.mxu0 %v483
        %1400 = vmatpush.msra.mxu0 %v457
        %1401 = vmatpush.msra.mxu0 %v431
        %1402 = vmatpush.msra.mxu0 %v405
        %1403 = vmatpush.msra.mxu0 %v379
        %1404 = vmatpush.msra.mxu0 %v353
        %1405 = vmatmul.f32.gmra.mxu0 %v310
        %v1406 = vpop.f32.mrf.mxu0
        %v1407 = vadd.f32 0.0, %v1406
        %1408 = vmatmul.f32.gmra.mxu0 %v313
        %v1409 = vpop.f32.mrf.mxu0
        %v1410 = vadd.f32 0.0, %v1409
        %1411 = vdwg.mxu0
        %1412 = vmatpush.msra.mxu0 0.0
        %1413 = vmatpush.msra.mxu0 0.0
        %1414 = vmatpush.msra.mxu0 0.0
        %1415 = vmatpush.msra.mxu0 0.0
        %1416 = vmatpush.msra.mxu0 0.0
        %1417 = vmatpush.msra.mxu0 0.0
        %1418 = vmatpush.msra.mxu0 0.0
        %1419 = vmatpush.msra.mxu0 0.0
        %1420 = vmatpush.msra.mxu0 %v951
        %1421 = vmatpush.msra.mxu0 %v925
        %1422 = vmatpush.msra.mxu0 %v899
        %1423 = vmatpush.msra.mxu0 %v873
        %1424 = vmatpush.msra.mxu0 %v847
        %1425 = vmatpush.msra.mxu0 %v821
        %1426 = vmatpush.msra.mxu0 %v795
        %1427 = vmatpush.msra.mxu0 %v769
        %1428 = vmatmul.f32.gmra.mxu0 %v970
        %v1429 = vpop.f32.mrf.mxu0
        %v1430 = vadd.f32 %v1407, %v1429
        %1431 = vmatmul.f32.gmra.mxu0 %v973
        %v1432 = vpop.f32.mrf.mxu0
        %v1433 = vadd.f32 %v1410, %v1432
        %1434 = vdwg.mxu0
        %1435 = vmatpush.msra.mxu0 %v744
        %1436 = vmatpush.msra.mxu0 %v718
        %1437 = vmatpush.msra.mxu0 %v692
        %1438 = vmatpush.msra.mxu0 %v666
        %1439 = vmatpush.msra.mxu0 %v640
        %1440 = vmatpush.msra.mxu0 %v614
        %1441 = vmatpush.msra.mxu0 %v588
        %1442 = vmatpush.msra.mxu0 %v562
        %1443 = vmatpush.msra.mxu0 %v536
        %1444 = vmatpush.msra.mxu0 %v510
        %1445 = vmatpush.msra.mxu0 %v484
        %1446 = vmatpush.msra.mxu0 %v458
        %1447 = vmatpush.msra.mxu0 %v432
        %1448 = vmatpush.msra.mxu0 %v406
        %1449 = vmatpush.msra.mxu0 %v380
        %1450 = vmatpush.msra.mxu0 %v354
        %1451 = vmatmul.f32.gmra.mxu0 %v310
        %v1452 = vpop.f32.mrf.mxu0
        %v1453 = vadd.f32 0.0, %v1452
        %1454 = vmatmul.f32.gmra.mxu0 %v313
        %v1455 = vpop.f32.mrf.mxu0
        %v1456 = vadd.f32 0.0, %v1455
        %1457 = vdwg.mxu0
        %1458 = vmatpush.msra.mxu0 0.0
        %1459 = vmatpush.msra.mxu0 0.0
        %1460 = vmatpush.msra.mxu0 0.0
        %1461 = vmatpush.msra.mxu0 0.0
        %1462 = vmatpush.msra.mxu0 0.0
        %1463 = vmatpush.msra.mxu0 0.0
        %1464 = vmatpush.msra.mxu0 0.0
        %1465 = vmatpush.msra.mxu0 0.0
        %1466 = vmatpush.msra.mxu0 %v952
        %1467 = vmatpush.msra.mxu0 %v926
        %1468 = vmatpush.msra.mxu0 %v900
        %1469 = vmatpush.msra.mxu0 %v874
        %1470 = vmatpush.msra.mxu0 %v848
        %1471 = vmatpush.msra.mxu0 %v822
        %1472 = vmatpush.msra.mxu0 %v796
        %1473 = vmatpush.msra.mxu0 %v770
        %1474 = vmatmul.f32.gmra.mxu0 %v970
        %v1475 = vpop.f32.mrf.mxu0
        %v1476 = vadd.f32 %v1453, %v1475
        %1477 = vmatmul.f32.gmra.mxu0 %v973
        %v1478 = vpop.f32.mrf.mxu0
        %v1479 = vadd.f32 %v1456, %v1478
        %1480 = vdwg.mxu0
        %1481 = vmatpush.msra.mxu0 %v745
        %1482 = vmatpush.msra.mxu0 %v719
        %1483 = vmatpush.msra.mxu0 %v693
        %1484 = vmatpush.msra.mxu0 %v667
        %1485 = vmatpush.msra.mxu0 %v641
        %1486 = vmatpush.msra.mxu0 %v615
        %1487 = vmatpush.msra.mxu0 %v589
        %1488 = vmatpush.msra.mxu0 %v563
        %1489 = vmatpush.msra.mxu0 %v537
        %1490 = vmatpush.msra.mxu0 %v511
        %1491 = vmatpush.msra.mxu0 %v485
        %1492 = vmatpush.msra.mxu0 %v459
        %1493 = vmatpush.msra.mxu0 %v433
        %1494 = vmatpush.msra.mxu0 %v407
        %1495 = vmatpush.msra.mxu0 %v381
        %1496 = vmatpush.msra.mxu0 %v355
        %1497 = vmatmul.f32.gmra.mxu0 %v310
        %v1498 = vpop.f32.mrf.mxu0
        %v1499 = vadd.f32 0.0, %v1498
        %1500 = vmatmul.f32.gmra.mxu0 %v313
        %v1501 = vpop.f32.mrf.mxu0
        %v1502 = vadd.f32 0.0, %v1501
        %1503 = vdwg.mxu0
        %1504 = vmatpush.msra.mxu0 0.0
        %1505 = vmatpush.msra.mxu0 0.0
        %1506 = vmatpush.msra.mxu0 0.0
        %1507 = vmatpush.msra.mxu0 0.0
        %1508 = vmatpush.msra.mxu0 0.0
        %1509 = vmatpush.msra.mxu0 0.0
        %1510 = vmatpush.msra.mxu0 0.0
        %1511 = vmatpush.msra.mxu0 0.0
        %1512 = vmatpush.msra.mxu0 %v953
        %1513 = vmatpush.msra.mxu0 %v927
        %1514 = vmatpush.msra.mxu0 %v901
        %1515 = vmatpush.msra.mxu0 %v875
        %1516 = vmatpush.msra.mxu0 %v849
        %1517 = vmatpush.msra.mxu0 %v823
        %1518 = vmatpush.msra.mxu0 %v797
        %1519 = vmatpush.msra.mxu0 %v771
        %1520 = vmatmul.f32.gmra.mxu0 %v970
        %v1521 = vpop.f32.mrf.mxu0
        %v1522 = vadd.f32 %v1499, %v1521
        %1523 = vmatmul.f32.gmra.mxu0 %v973
        %v1524 = vpop.f32.mrf.mxu0
        %v1525 = vadd.f32 %v1502, %v1524
        %1526 = vdwg.mxu0
        %1527 = vmatpush.msra.mxu0 %v746
        %1528 = vmatpush.msra.mxu0 %v720
        %1529 = vmatpush.msra.mxu0 %v694
        %1530 = vmatpush.msra.mxu0 %v668
        %1531 = vmatpush.msra.mxu0 %v642
        %1532 = vmatpush.msra.mxu0 %v616
        %1533 = vmatpush.msra.mxu0 %v590
        %1534 = vmatpush.msra.mxu0 %v564
        %1535 = vmatpush.msra.mxu0 %v538
        %1536 = vmatpush.msra.mxu0 %v512
        %1537 = vmatpush.msra.mxu0 %v486
        %1538 = vmatpush.msra.mxu0 %v460
        %1539 = vmatpush.msra.mxu0 %v434
        %1540 = vmatpush.msra.mxu0 %v408
        %1541 = vmatpush.msra.mxu0 %v382
        %1542 = vmatpush.msra.mxu0 %v356
        %1543 = vmatmul.f32.gmra.mxu0 %v310
        %v1544 = vpop.f32.mrf.mxu0
        %v1545 = vadd.f32 0.0, %v1544
        %1546 = vmatmul.f32.gmra.mxu0 %v313
        %v1547 = vpop.f32.mrf.mxu0
        %v1548 = vadd.f32 0.0, %v1547
        %1549 = vdwg.mxu0
        %1550 = vmatpush.msra.mxu0 0.0
        %1551 = vmatpush.msra.mxu0 0.0
        %1552 = vmatpush.msra.mxu0 0.0
        %1553 = vmatpush.msra.mxu0 0.0
        %1554 = vmatpush.msra.mxu0 0.0
        %1555 = vmatpush.msra.mxu0 0.0
        %1556 = vmatpush.msra.mxu0 0.0
        %1557 = vmatpush.msra.mxu0 0.0
        %1558 = vmatpush.msra.mxu0 %v954
        %1559 = vmatpush.msra.mxu0 %v928
        %1560 = vmatpush.msra.mxu0 %v902
        %1561 = vmatpush.msra.mxu0 %v876
        %1562 = vmatpush.msra.mxu0 %v850
        %1563 = vmatpush.msra.mxu0 %v824
        %1564 = vmatpush.msra.mxu0 %v798
        %1565 = vmatpush.msra.mxu0 %v772
        %1566 = vmatmul.f32.gmra.mxu0 %v970
        %v1567 = vpop.f32.mrf.mxu0
        %v1568 = vadd.f32 %v1545, %v1567
        %1569 = vmatmul.f32.gmra.mxu0 %v973
        %v1570 = vpop.f32.mrf.mxu0
        %v1571 = vadd.f32 %v1548, %v1570
        %1572 = vdwg.mxu0
        %1573 = vmatpush.msra.mxu0 %v747
        %1574 = vmatpush.msra.mxu0 %v721
        %1575 = vmatpush.msra.mxu0 %v695
        %1576 = vmatpush.msra.mxu0 %v669
        %1577 = vmatpush.msra.mxu0 %v643
        %1578 = vmatpush.msra.mxu0 %v617
        %1579 = vmatpush.msra.mxu0 %v591
        %1580 = vmatpush.msra.mxu0 %v565
        %1581 = vmatpush.msra.mxu0 %v539
        %1582 = vmatpush.msra.mxu0 %v513
        %1583 = vmatpush.msra.mxu0 %v487
        %1584 = vmatpush.msra.mxu0 %v461
        %1585 = vmatpush.msra.mxu0 %v435
        %1586 = vmatpush.msra.mxu0 %v409
        %1587 = vmatpush.msra.mxu0 %v383
        %1588 = vmatpush.msra.mxu0 %v357
        %1589 = vmatmul.f32.gmra.mxu0 %v310
        %v1590 = vpop.f32.mrf.mxu0
        %v1591 = vadd.f32 0.0, %v1590
        %1592 = vmatmul.f32.gmra.mxu0 %v313
        %v1593 = vpop.f32.mrf.mxu0
        %v1594 = vadd.f32 0.0, %v1593
        %1595 = vdwg.mxu0
        %1596 = vmatpush.msra.mxu0 0.0
        %1597 = vmatpush.msra.mxu0 0.0
        %1598 = vmatpush.msra.mxu0 0.0
        %1599 = vmatpush.msra.mxu0 0.0
        %1600 = vmatpush.msra.mxu0 0.0
        %1601 = vmatpush.msra.mxu0 0.0
        %1602 = vmatpush.msra.mxu0 0.0
        %1603 = vmatpush.msra.mxu0 0.0
        %1604 = vmatpush.msra.mxu0 %v955
        %1605 = vmatpush.msra.mxu0 %v929
        %1606 = vmatpush.msra.mxu0 %v903
        %1607 = vmatpush.msra.mxu0 %v877
        %1608 = vmatpush.msra.mxu0 %v851
        %1609 = vmatpush.msra.mxu0 %v825
        %1610 = vmatpush.msra.mxu0 %v799
        %1611 = vmatpush.msra.mxu0 %v773
        %1612 = vmatmul.f32.gmra.mxu0 %v970
        %v1613 = vpop.f32.mrf.mxu0
        %v1614 = vadd.f32 %v1591, %v1613
        %1615 = vmatmul.f32.gmra.mxu0 %v973
        %v1616 = vpop.f32.mrf.mxu0
        %v1617 = vadd.f32 %v1594, %v1616
        %1618 = vdwg.mxu0
        %1619 = vmatpush.msra.mxu0 %v748
        %1620 = vmatpush.msra.mxu0 %v722
        %1621 = vmatpush.msra.mxu0 %v696
        %1622 = vmatpush.msra.mxu0 %v670
        %1623 = vmatpush.msra.mxu0 %v644
        %1624 = vmatpush.msra.mxu0 %v618
        %1625 = vmatpush.msra.mxu0 %v592
        %1626 = vmatpush.msra.mxu0 %v566
        %1627 = vmatpush.msra.mxu0 %v540
        %1628 = vmatpush.msra.mxu0 %v514
        %1629 = vmatpush.msra.mxu0 %v488
        %1630 = vmatpush.msra.mxu0 %v462
        %1631 = vmatpush.msra.mxu0 %v436
        %1632 = vmatpush.msra.mxu0 %v410
        %1633 = vmatpush.msra.mxu0 %v384
        %1634 = vmatpush.msra.mxu0 %v358
        %1635 = vmatmul.f32.gmra.mxu0 %v310
        %v1636 = vpop.f32.mrf.mxu0
        %v1637 = vadd.f32 0.0, %v1636
        %1638 = vmatmul.f32.gmra.mxu0 %v313
        %v1639 = vpop.f32.mrf.mxu0
        %v1640 = vadd.f32 0.0, %v1639
        %1641 = vdwg.mxu0
        %1642 = vmatpush.msra.mxu0 0.0
        %1643 = vmatpush.msra.mxu0 0.0
        %1644 = vmatpush.msra.mxu0 0.0
        %1645 = vmatpush.msra.mxu0 0.0
        %1646 = vmatpush.msra.mxu0 0.0
        %1647 = vmatpush.msra.mxu0 0.0
        %1648 = vmatpush.msra.mxu0 0.0
        %1649 = vmatpush.msra.mxu0 0.0
        %1650 = vmatpush.msra.mxu0 %v956
        %1651 = vmatpush.msra.mxu0 %v930
        %1652 = vmatpush.msra.mxu0 %v904
        %1653 = vmatpush.msra.mxu0 %v878
        %1654 = vmatpush.msra.mxu0 %v852
        %1655 = vmatpush.msra.mxu0 %v826
        %1656 = vmatpush.msra.mxu0 %v800
        %1657 = vmatpush.msra.mxu0 %v774
        %1658 = vmatmul.f32.gmra.mxu0 %v970
        %v1659 = vpop.f32.mrf.mxu0
        %v1660 = vadd.f32 %v1637, %v1659
        %1661 = vmatmul.f32.gmra.mxu0 %v973
        %v1662 = vpop.f32.mrf.mxu0
        %v1663 = vadd.f32 %v1640, %v1662
        %1664 = vdwg.mxu0
        %1665 = vmatpush.msra.mxu0 %v749
        %1666 = vmatpush.msra.mxu0 %v723
        %1667 = vmatpush.msra.mxu0 %v697
        %1668 = vmatpush.msra.mxu0 %v671
        %1669 = vmatpush.msra.mxu0 %v645
        %1670 = vmatpush.msra.mxu0 %v619
        %1671 = vmatpush.msra.mxu0 %v593
        %1672 = vmatpush.msra.mxu0 %v567
        %1673 = vmatpush.msra.mxu0 %v541
        %1674 = vmatpush.msra.mxu0 %v515
        %1675 = vmatpush.msra.mxu0 %v489
        %1676 = vmatpush.msra.mxu0 %v463
        %1677 = vmatpush.msra.mxu0 %v437
        %1678 = vmatpush.msra.mxu0 %v411
        %1679 = vmatpush.msra.mxu0 %v385
        %1680 = vmatpush.msra.mxu0 %v359
        %1681 = vmatmul.f32.gmra.mxu0 %v310
        %v1682 = vpop.f32.mrf.mxu0
        %v1683 = vadd.f32 0.0, %v1682
        %1684 = vmatmul.f32.gmra.mxu0 %v313
        %v1685 = vpop.f32.mrf.mxu0
        %v1686 = vadd.f32 0.0, %v1685
        %1687 = vdwg.mxu0
        %1688 = vmatpush.msra.mxu0 0.0
        %1689 = vmatpush.msra.mxu0 0.0
        %1690 = vmatpush.msra.mxu0 0.0
        %1691 = vmatpush.msra.mxu0 0.0
        %1692 = vmatpush.msra.mxu0 0.0
        %1693 = vmatpush.msra.mxu0 0.0
        %1694 = vmatpush.msra.mxu0 0.0
        %1695 = vmatpush.msra.mxu0 0.0
        %1696 = vmatpush.msra.mxu0 %v957
        %1697 = vmatpush.msra.mxu0 %v931
        %1698 = vmatpush.msra.mxu0 %v905
        %1699 = vmatpush.msra.mxu0 %v879
        %1700 = vmatpush.msra.mxu0 %v853
        %1701 = vmatpush.msra.mxu0 %v827
        %1702 = vmatpush.msra.mxu0 %v801
        %1703 = vmatpush.msra.mxu0 %v775
        %1704 = vmatmul.f32.gmra.mxu0 %v970
        %v1705 = vpop.f32.mrf.mxu0
        %v1706 = vadd.f32 %v1683, %v1705
        %1707 = vmatmul.f32.gmra.mxu0 %v973
        %v1708 = vpop.f32.mrf.mxu0
        %v1709 = vadd.f32 %v1686, %v1708
        %1710 = vdwg.mxu0
        %1711 = vmatpush.msra.mxu0 %v750
        %1712 = vmatpush.msra.mxu0 %v724
        %1713 = vmatpush.msra.mxu0 %v698
        %1714 = vmatpush.msra.mxu0 %v672
        %1715 = vmatpush.msra.mxu0 %v646
        %1716 = vmatpush.msra.mxu0 %v620
        %1717 = vmatpush.msra.mxu0 %v594
        %1718 = vmatpush.msra.mxu0 %v568
        %1719 = vmatpush.msra.mxu0 %v542
        %1720 = vmatpush.msra.mxu0 %v516
        %1721 = vmatpush.msra.mxu0 %v490
        %1722 = vmatpush.msra.mxu0 %v464
        %1723 = vmatpush.msra.mxu0 %v438
        %1724 = vmatpush.msra.mxu0 %v412
        %1725 = vmatpush.msra.mxu0 %v386
        %1726 = vmatpush.msra.mxu0 %v360
        %1727 = vmatmul.f32.gmra.mxu0 %v310
        %v1728 = vpop.f32.mrf.mxu0
        %v1729 = vadd.f32 0.0, %v1728
        %1730 = vmatmul.f32.gmra.mxu0 %v313
        %v1731 = vpop.f32.mrf.mxu0
        %v1732 = vadd.f32 0.0, %v1731
        %1733 = vdwg.mxu0
        %1734 = vmatpush.msra.mxu0 0.0
        %1735 = vmatpush.msra.mxu0 0.0
        %1736 = vmatpush.msra.mxu0 0.0
        %1737 = vmatpush.msra.mxu0 0.0
        %1738 = vmatpush.msra.mxu0 0.0
        %1739 = vmatpush.msra.mxu0 0.0
        %1740 = vmatpush.msra.mxu0 0.0
        %1741 = vmatpush.msra.mxu0 0.0
        %1742 = vmatpush.msra.mxu0 %v958
        %1743 = vmatpush.msra.mxu0 %v932
        %1744 = vmatpush.msra.mxu0 %v906
        %1745 = vmatpush.msra.mxu0 %v880
        %1746 = vmatpush.msra.mxu0 %v854
        %1747 = vmatpush.msra.mxu0 %v828
        %1748 = vmatpush.msra.mxu0 %v802
        %1749 = vmatpush.msra.mxu0 %v776
        %1750 = vmatmul.f32.gmra.mxu0 %v970
        %v1751 = vpop.f32.mrf.mxu0
        %v1752 = vadd.f32 %v1729, %v1751
        %1753 = vmatmul.f32.gmra.mxu0 %v973
        %v1754 = vpop.f32.mrf.mxu0
        %v1755 = vadd.f32 %v1732, %v1754
        %1756 = vdwg.mxu0
        %1757 = vmatpush.msra.mxu0 %v751
        %1758 = vmatpush.msra.mxu0 %v725
        %1759 = vmatpush.msra.mxu0 %v699
        %1760 = vmatpush.msra.mxu0 %v673
        %1761 = vmatpush.msra.mxu0 %v647
        %1762 = vmatpush.msra.mxu0 %v621
        %1763 = vmatpush.msra.mxu0 %v595
        %1764 = vmatpush.msra.mxu0 %v569
        %1765 = vmatpush.msra.mxu0 %v543
        %1766 = vmatpush.msra.mxu0 %v517
        %1767 = vmatpush.msra.mxu0 %v491
        %1768 = vmatpush.msra.mxu0 %v465
        %1769 = vmatpush.msra.mxu0 %v439
        %1770 = vmatpush.msra.mxu0 %v413
        %1771 = vmatpush.msra.mxu0 %v387
        %1772 = vmatpush.msra.mxu0 %v361
        %1773 = vmatmul.f32.gmra.mxu0 %v310
        %v1774 = vpop.f32.mrf.mxu0
        %v1775 = vadd.f32 0.0, %v1774
        %1776 = vmatmul.f32.gmra.mxu0 %v313
        %v1777 = vpop.f32.mrf.mxu0
        %v1778 = vadd.f32 0.0, %v1777
        %1779 = vdwg.mxu0
        %1780 = vmatpush.msra.mxu0 0.0
        %1781 = vmatpush.msra.mxu0 0.0
        %1782 = vmatpush.msra.mxu0 0.0
        %1783 = vmatpush.msra.mxu0 0.0
        %1784 = vmatpush.msra.mxu0 0.0
        %1785 = vmatpush.msra.mxu0 0.0
        %1786 = vmatpush.msra.mxu0 0.0
        %1787 = vmatpush.msra.mxu0 0.0
        %1788 = vmatpush.msra.mxu0 %v959
        %1789 = vmatpush.msra.mxu0 %v933
        %1790 = vmatpush.msra.mxu0 %v907
        %1791 = vmatpush.msra.mxu0 %v881
        %1792 = vmatpush.msra.mxu0 %v855
        %1793 = vmatpush.msra.mxu0 %v829
        %1794 = vmatpush.msra.mxu0 %v803
        %1795 = vmatpush.msra.mxu0 %v777
        %1796 = vmatmul.f32.gmra.mxu0 %v970
        %v1797 = vpop.f32.mrf.mxu0
        %v1798 = vadd.f32 %v1775, %v1797
        %1799 = vmatmul.f32.gmra.mxu0 %v973
        %v1800 = vpop.f32.mrf.mxu0
        %v1801 = vadd.f32 %v1778, %v1800
        %1802 = vdwg.mxu0
        %1803 = vmatpush.msra.mxu0 %v752
        %1804 = vmatpush.msra.mxu0 %v726
        %1805 = vmatpush.msra.mxu0 %v700
        %1806 = vmatpush.msra.mxu0 %v674
        %1807 = vmatpush.msra.mxu0 %v648
        %1808 = vmatpush.msra.mxu0 %v622
        %1809 = vmatpush.msra.mxu0 %v596
        %1810 = vmatpush.msra.mxu0 %v570
        %1811 = vmatpush.msra.mxu0 %v544
        %1812 = vmatpush.msra.mxu0 %v518
        %1813 = vmatpush.msra.mxu0 %v492
        %1814 = vmatpush.msra.mxu0 %v466
        %1815 = vmatpush.msra.mxu0 %v440
        %1816 = vmatpush.msra.mxu0 %v414
        %1817 = vmatpush.msra.mxu0 %v388
        %1818 = vmatpush.msra.mxu0 %v362
        %1819 = vmatmul.f32.gmra.mxu0 %v310
        %v1820 = vpop.f32.mrf.mxu0
        %v1821 = vadd.f32 0.0, %v1820
        %1822 = vmatmul.f32.gmra.mxu0 %v313
        %v1823 = vpop.f32.mrf.mxu0
        %v1824 = vadd.f32 0.0, %v1823
        %1825 = vdwg.mxu0
        %1826 = vmatpush.msra.mxu0 0.0
        %1827 = vmatpush.msra.mxu0 0.0
        %1828 = vmatpush.msra.mxu0 0.0
        %1829 = vmatpush.msra.mxu0 0.0
        %1830 = vmatpush.msra.mxu0 0.0
        %1831 = vmatpush.msra.mxu0 0.0
        %1832 = vmatpush.msra.mxu0 0.0
        %1833 = vmatpush.msra.mxu0 0.0
        %1834 = vmatpush.msra.mxu0 %v960
        %1835 = vmatpush.msra.mxu0 %v934
        %1836 = vmatpush.msra.mxu0 %v908
        %1837 = vmatpush.msra.mxu0 %v882
        %1838 = vmatpush.msra.mxu0 %v856
        %1839 = vmatpush.msra.mxu0 %v830
        %1840 = vmatpush.msra.mxu0 %v804
        %1841 = vmatpush.msra.mxu0 %v778
        %1842 = vmatmul.f32.gmra.mxu0 %v970
        %v1843 = vpop.f32.mrf.mxu0
        %v1844 = vadd.f32 %v1821, %v1843
        %1845 = vmatmul.f32.gmra.mxu0 %v973
        %v1846 = vpop.f32.mrf.mxu0
        %v1847 = vadd.f32 %v1824, %v1846
        %1848 = vdwg.mxu0
        %1849 = vmatpush.msra.mxu0 %v753
        %1850 = vmatpush.msra.mxu0 %v727
        %1851 = vmatpush.msra.mxu0 %v701
        %1852 = vmatpush.msra.mxu0 %v675
        %1853 = vmatpush.msra.mxu0 %v649
        %1854 = vmatpush.msra.mxu0 %v623
        %1855 = vmatpush.msra.mxu0 %v597
        %1856 = vmatpush.msra.mxu0 %v571
        %1857 = vmatpush.msra.mxu0 %v545
        %1858 = vmatpush.msra.mxu0 %v519
        %1859 = vmatpush.msra.mxu0 %v493
        %1860 = vmatpush.msra.mxu0 %v467
        %1861 = vmatpush.msra.mxu0 %v441
        %1862 = vmatpush.msra.mxu0 %v415
        %1863 = vmatpush.msra.mxu0 %v389
        %1864 = vmatpush.msra.mxu0 %v363
        %1865 = vmatmul.f32.gmra.mxu0 %v310
        %v1866 = vpop.f32.mrf.mxu0
        %v1867 = vadd.f32 0.0, %v1866
        %1868 = vmatmul.f32.gmra.mxu0 %v313
        %v1869 = vpop.f32.mrf.mxu0
        %v1870 = vadd.f32 0.0, %v1869
        %1871 = vdwg.mxu0
        %1872 = vmatpush.msra.mxu0 0.0
        %1873 = vmatpush.msra.mxu0 0.0
        %1874 = vmatpush.msra.mxu0 0.0
        %1875 = vmatpush.msra.mxu0 0.0
        %1876 = vmatpush.msra.mxu0 0.0
        %1877 = vmatpush.msra.mxu0 0.0
        %1878 = vmatpush.msra.mxu0 0.0
        %1879 = vmatpush.msra.mxu0 0.0
        %1880 = vmatpush.msra.mxu0 %v961
        %1881 = vmatpush.msra.mxu0 %v935
        %1882 = vmatpush.msra.mxu0 %v909
        %1883 = vmatpush.msra.mxu0 %v883
        %1884 = vmatpush.msra.mxu0 %v857
        %1885 = vmatpush.msra.mxu0 %v831
        %1886 = vmatpush.msra.mxu0 %v805
        %1887 = vmatpush.msra.mxu0 %v779
        %1888 = vmatmul.f32.gmra.mxu0 %v970
        %v1889 = vpop.f32.mrf.mxu0
        %v1890 = vadd.f32 %v1867, %v1889
        %1891 = vmatmul.f32.gmra.mxu0 %v973
        %v1892 = vpop.f32.mrf.mxu0
        %v1893 = vadd.f32 %v1870, %v1892
        %1894 = vdwg.mxu0
        %1895 = vmatpush.msra.mxu0 %v754
        %1896 = vmatpush.msra.mxu0 %v728
        %1897 = vmatpush.msra.mxu0 %v702
        %1898 = vmatpush.msra.mxu0 %v676
        %1899 = vmatpush.msra.mxu0 %v650
        %1900 = vmatpush.msra.mxu0 %v624
        %1901 = vmatpush.msra.mxu0 %v598
        %1902 = vmatpush.msra.mxu0 %v572
        %1903 = vmatpush.msra.mxu0 %v546
        %1904 = vmatpush.msra.mxu0 %v520
        %1905 = vmatpush.msra.mxu0 %v494
        %1906 = vmatpush.msra.mxu0 %v468
        %1907 = vmatpush.msra.mxu0 %v442
        %1908 = vmatpush.msra.mxu0 %v416
        %1909 = vmatpush.msra.mxu0 %v390
        %1910 = vmatpush.msra.mxu0 %v364
        %1911 = vmatmul.f32.gmra.mxu0 %v310
        %v1912 = vpop.f32.mrf.mxu0
        %v1913 = vadd.f32 0.0, %v1912
        %1914 = vmatmul.f32.gmra.mxu0 %v313
        %v1915 = vpop.f32.mrf.mxu0
        %v1916 = vadd.f32 0.0, %v1915
        %1917 = vdwg.mxu0
        %1918 = vmatpush.msra.mxu0 0.0
        %1919 = vmatpush.msra.mxu0 0.0
        %1920 = vmatpush.msra.mxu0 0.0
        %1921 = vmatpush.msra.mxu0 0.0
        %1922 = vmatpush.msra.mxu0 0.0
        %1923 = vmatpush.msra.mxu0 0.0
        %1924 = vmatpush.msra.mxu0 0.0
        %1925 = vmatpush.msra.mxu0 0.0
        %1926 = vmatpush.msra.mxu0 %v962
        %1927 = vmatpush.msra.mxu0 %v936
        %1928 = vmatpush.msra.mxu0 %v910
        %1929 = vmatpush.msra.mxu0 %v884
        %1930 = vmatpush.msra.mxu0 %v858
        %1931 = vmatpush.msra.mxu0 %v832
        %1932 = vmatpush.msra.mxu0 %v806
        %1933 = vmatpush.msra.mxu0 %v780
        %1934 = vmatmul.f32.gmra.mxu0 %v970
        %v1935 = vpop.f32.mrf.mxu0
        %v1936 = vadd.f32 %v1913, %v1935
        %1937 = vmatmul.f32.gmra.mxu0 %v973
        %v1938 = vpop.f32.mrf.mxu0
        %v1939 = vadd.f32 %v1916, %v1938
        %1940 = vdwg.mxu0
        %1941 = vmatpush.msra.mxu0 %v755
        %1942 = vmatpush.msra.mxu0 %v729
        %1943 = vmatpush.msra.mxu0 %v703
        %1944 = vmatpush.msra.mxu0 %v677
        %1945 = vmatpush.msra.mxu0 %v651
        %1946 = vmatpush.msra.mxu0 %v625
        %1947 = vmatpush.msra.mxu0 %v599
        %1948 = vmatpush.msra.mxu0 %v573
        %1949 = vmatpush.msra.mxu0 %v547
        %1950 = vmatpush.msra.mxu0 %v521
        %1951 = vmatpush.msra.mxu0 %v495
        %1952 = vmatpush.msra.mxu0 %v469
        %1953 = vmatpush.msra.mxu0 %v443
        %1954 = vmatpush.msra.mxu0 %v417
        %1955 = vmatpush.msra.mxu0 %v391
        %1956 = vmatpush.msra.mxu0 %v365
        %1957 = vmatmul.f32.gmra.mxu0 %v310
        %v1958 = vpop.f32.mrf.mxu0
        %v1959 = vadd.f32 0.0, %v1958
        %1960 = vmatmul.f32.gmra.mxu0 %v313
        %v1961 = vpop.f32.mrf.mxu0
        %v1962 = vadd.f32 0.0, %v1961
        %1963 = vdwg.mxu0
        %1964 = vmatpush.msra.mxu0 0.0
        %1965 = vmatpush.msra.mxu0 0.0
        %1966 = vmatpush.msra.mxu0 0.0
        %1967 = vmatpush.msra.mxu0 0.0
        %1968 = vmatpush.msra.mxu0 0.0
        %1969 = vmatpush.msra.mxu0 0.0
        %1970 = vmatpush.msra.mxu0 0.0
        %1971 = vmatpush.msra.mxu0 0.0
        %1972 = vmatpush.msra.mxu0 %v963
        %1973 = vmatpush.msra.mxu0 %v937
        %1974 = vmatpush.msra.mxu0 %v911
        %1975 = vmatpush.msra.mxu0 %v885
        %1976 = vmatpush.msra.mxu0 %v859
        %1977 = vmatpush.msra.mxu0 %v833
        %1978 = vmatpush.msra.mxu0 %v807
        %1979 = vmatpush.msra.mxu0 %v781
        %1980 = vmatmul.f32.gmra.mxu0 %v970
        %v1981 = vpop.f32.mrf.mxu0
        %v1982 = vadd.f32 %v1959, %v1981
        %1983 = vmatmul.f32.gmra.mxu0 %v973
        %v1984 = vpop.f32.mrf.mxu0
        %v1985 = vadd.f32 %v1962, %v1984
        %1986 = vdwg.mxu0
        %1987 = vmatpush.msra.mxu0 %v756
        %1988 = vmatpush.msra.mxu0 %v730
        %1989 = vmatpush.msra.mxu0 %v704
        %1990 = vmatpush.msra.mxu0 %v678
        %1991 = vmatpush.msra.mxu0 %v652
        %1992 = vmatpush.msra.mxu0 %v626
        %1993 = vmatpush.msra.mxu0 %v600
        %1994 = vmatpush.msra.mxu0 %v574
        %1995 = vmatpush.msra.mxu0 %v548
        %1996 = vmatpush.msra.mxu0 %v522
        %1997 = vmatpush.msra.mxu0 %v496
        %1998 = vmatpush.msra.mxu0 %v470
        %1999 = vmatpush.msra.mxu0 %v444
        %2000 = vmatpush.msra.mxu0 %v418
        %2001 = vmatpush.msra.mxu0 %v392
        %2002 = vmatpush.msra.mxu0 %v366
        %2003 = vmatmul.f32.gmra.mxu0 %v310
        %v2004 = vpop.f32.mrf.mxu0
        %v2005 = vadd.f32 0.0, %v2004
        %2006 = vmatmul.f32.gmra.mxu0 %v313
        %v2007 = vpop.f32.mrf.mxu0
        %v2008 = vadd.f32 0.0, %v2007
        %2009 = vdwg.mxu0
        %2010 = vmatpush.msra.mxu0 0.0
        %2011 = vmatpush.msra.mxu0 0.0
        %2012 = vmatpush.msra.mxu0 0.0
        %2013 = vmatpush.msra.mxu0 0.0
        %2014 = vmatpush.msra.mxu0 0.0
        %2015 = vmatpush.msra.mxu0 0.0
        %2016 = vmatpush.msra.mxu0 0.0
        %2017 = vmatpush.msra.mxu0 0.0
        %2018 = vmatpush.msra.mxu0 %v964
        %2019 = vmatpush.msra.mxu0 %v938
        %2020 = vmatpush.msra.mxu0 %v912
        %2021 = vmatpush.msra.mxu0 %v886
        %2022 = vmatpush.msra.mxu0 %v860
        %2023 = vmatpush.msra.mxu0 %v834
        %2024 = vmatpush.msra.mxu0 %v808
        %2025 = vmatpush.msra.mxu0 %v782
        %2026 = vmatmul.f32.gmra.mxu0 %v970
        %v2027 = vpop.f32.mrf.mxu0
        %v2028 = vadd.f32 %v2005, %v2027
        %2029 = vmatmul.f32.gmra.mxu0 %v973
        %v2030 = vpop.f32.mrf.mxu0
        %v2031 = vadd.f32 %v2008, %v2030
        %2032 = vdwg.mxu0
        %2033 = vmatpush.msra.mxu0 %v757
        %2034 = vmatpush.msra.mxu0 %v731
        %2035 = vmatpush.msra.mxu0 %v705
        %2036 = vmatpush.msra.mxu0 %v679
        %2037 = vmatpush.msra.mxu0 %v653
        %2038 = vmatpush.msra.mxu0 %v627
        %2039 = vmatpush.msra.mxu0 %v601
        %2040 = vmatpush.msra.mxu0 %v575
        %2041 = vmatpush.msra.mxu0 %v549
        %2042 = vmatpush.msra.mxu0 %v523
        %2043 = vmatpush.msra.mxu0 %v497
        %2044 = vmatpush.msra.mxu0 %v471
        %2045 = vmatpush.msra.mxu0 %v445
        %2046 = vmatpush.msra.mxu0 %v419
        %2047 = vmatpush.msra.mxu0 %v393
        %2048 = vmatpush.msra.mxu0 %v367
        %2049 = vmatmul.f32.gmra.mxu0 %v310
        %v2050 = vpop.f32.mrf.mxu0
        %v2051 = vadd.f32 0.0, %v2050
        %2052 = vmatmul.f32.gmra.mxu0 %v313
        %v2053 = vpop.f32.mrf.mxu0
        %v2054 = vadd.f32 0.0, %v2053
        %2055 = vdwg.mxu0
        %2056 = vmatpush.msra.mxu0 0.0
        %2057 = vmatpush.msra.mxu0 0.0
        %2058 = vmatpush.msra.mxu0 0.0
        %2059 = vmatpush.msra.mxu0 0.0
        %2060 = vmatpush.msra.mxu0 0.0
        %2061 = vmatpush.msra.mxu0 0.0
        %2062 = vmatpush.msra.mxu0 0.0
        %2063 = vmatpush.msra.mxu0 0.0
        %2064 = vmatpush.msra.mxu0 %v965
        %2065 = vmatpush.msra.mxu0 %v939
        %2066 = vmatpush.msra.mxu0 %v913
        %2067 = vmatpush.msra.mxu0 %v887
        %2068 = vmatpush.msra.mxu0 %v861
        %2069 = vmatpush.msra.mxu0 %v835
        %2070 = vmatpush.msra.mxu0 %v809
        %2071 = vmatpush.msra.mxu0 %v783
        %2072 = vmatmul.f32.gmra.mxu0 %v970
        %v2073 = vpop.f32.mrf.mxu0
        %v2074 = vadd.f32 %v2051, %v2073
        %2075 = vmatmul.f32.gmra.mxu0 %v973
        %v2076 = vpop.f32.mrf.mxu0
        %v2077 = vadd.f32 %v2054, %v2076
        %2078 = vdwg.mxu0
        %2079 = vmatpush.msra.mxu0 %v758
        %2080 = vmatpush.msra.mxu0 %v732
        %2081 = vmatpush.msra.mxu0 %v706
        %2082 = vmatpush.msra.mxu0 %v680
        %2083 = vmatpush.msra.mxu0 %v654
        %2084 = vmatpush.msra.mxu0 %v628
        %2085 = vmatpush.msra.mxu0 %v602
        %2086 = vmatpush.msra.mxu0 %v576
        %2087 = vmatpush.msra.mxu0 %v550
        %2088 = vmatpush.msra.mxu0 %v524
        %2089 = vmatpush.msra.mxu0 %v498
        %2090 = vmatpush.msra.mxu0 %v472
        %2091 = vmatpush.msra.mxu0 %v446
        %2092 = vmatpush.msra.mxu0 %v420
        %2093 = vmatpush.msra.mxu0 %v394
        %2094 = vmatpush.msra.mxu0 %v368
        %2095 = vmatmul.f32.gmra.mxu0 %v310
        %v2096 = vpop.f32.mrf.mxu0
        %v2097 = vadd.f32 0.0, %v2096
        %2098 = vmatmul.f32.gmra.mxu0 %v313
        %v2099 = vpop.f32.mrf.mxu0
        %v2100 = vadd.f32 0.0, %v2099
        %2101 = vdwg.mxu0
        %2102 = vmatpush.msra.mxu0 0.0
        %2103 = vmatpush.msra.mxu0 0.0
        %2104 = vmatpush.msra.mxu0 0.0
        %2105 = vmatpush.msra.mxu0 0.0
        %2106 = vmatpush.msra.mxu0 0.0
        %2107 = vmatpush.msra.mxu0 0.0
        %2108 = vmatpush.msra.mxu0 0.0
        %2109 = vmatpush.msra.mxu0 0.0
        %2110 = vmatpush.msra.mxu0 %v966
        %2111 = vmatpush.msra.mxu0 %v940
        %2112 = vmatpush.msra.mxu0 %v914
        %2113 = vmatpush.msra.mxu0 %v888
        %2114 = vmatpush.msra.mxu0 %v862
        %2115 = vmatpush.msra.mxu0 %v836
        %2116 = vmatpush.msra.mxu0 %v810
        %2117 = vmatpush.msra.mxu0 %v784
        %2118 = vmatmul.f32.gmra.mxu0 %v970
        %v2119 = vpop.f32.mrf.mxu0
        %v2120 = vadd.f32 %v2097, %v2119
        %2121 = vmatmul.f32.gmra.mxu0 %v973
        %v2122 = vpop.f32.mrf.mxu0
        %v2123 = vadd.f32 %v2100, %v2122
        %2124 = vdwg.mxu0
        %2125 = vmatpush.msra.mxu0 %v759
        %2126 = vmatpush.msra.mxu0 %v733
        %2127 = vmatpush.msra.mxu0 %v707
        %2128 = vmatpush.msra.mxu0 %v681
        %2129 = vmatpush.msra.mxu0 %v655
        %2130 = vmatpush.msra.mxu0 %v629
        %2131 = vmatpush.msra.mxu0 %v603
        %2132 = vmatpush.msra.mxu0 %v577
        %2133 = vmatpush.msra.mxu0 %v551
        %2134 = vmatpush.msra.mxu0 %v525
        %2135 = vmatpush.msra.mxu0 %v499
        %2136 = vmatpush.msra.mxu0 %v473
        %2137 = vmatpush.msra.mxu0 %v447
        %2138 = vmatpush.msra.mxu0 %v421
        %2139 = vmatpush.msra.mxu0 %v395
        %2140 = vmatpush.msra.mxu0 %v369
        %2141 = vmatmul.f32.gmra.mxu0 %v310
        %v2142 = vpop.f32.mrf.mxu0
        %v2143 = vadd.f32 0.0, %v2142
        %2144 = vmatmul.f32.gmra.mxu0 %v313
        %v2145 = vpop.f32.mrf.mxu0
        %v2146 = vadd.f32 0.0, %v2145
        %2147 = vdwg.mxu0
        %2148 = vmatpush.msra.mxu0 0.0
        %2149 = vmatpush.msra.mxu0 0.0
        %2150 = vmatpush.msra.mxu0 0.0
        %2151 = vmatpush.msra.mxu0 0.0
        %2152 = vmatpush.msra.mxu0 0.0
        %2153 = vmatpush.msra.mxu0 0.0
        %2154 = vmatpush.msra.mxu0 0.0
        %2155 = vmatpush.msra.mxu0 0.0
        %2156 = vmatpush.msra.mxu0 %v967
        %2157 = vmatpush.msra.mxu0 %v941
        %2158 = vmatpush.msra.mxu0 %v915
        %2159 = vmatpush.msra.mxu0 %v889
        %2160 = vmatpush.msra.mxu0 %v863
        %2161 = vmatpush.msra.mxu0 %v837
        %2162 = vmatpush.msra.mxu0 %v811
        %2163 = vmatpush.msra.mxu0 %v785
        %2164 = vmatmul.f32.gmra.mxu0 %v970
        %v2165 = vpop.f32.mrf.mxu0
        %v2166 = vadd.f32 %v2143, %v2165
        %2167 = vmatmul.f32.gmra.mxu0 %v973
        %v2168 = vpop.f32.mrf.mxu0
        %v2169 = vadd.f32 %v2146, %v2168
        %2170 = vdwg.mxu0
        %2175 = vrot.lane.b32.xlu0 %v1062, 64
        %v2176 = vpop.permute.xlu0 %2175
        %2177 = vrot.lane.b32.xlu0 %v1108, 64
        %v2178 = vpop.permute.xlu0 %2177
        %2179 = vrot.lane.b32.xlu0 %v1065, 64
        %v2180 = vpop.permute.xlu0 %2179
        %2181 = vrot.lane.b32.xlu0 %v1111, 64
        %v2182 = vpop.permute.xlu0 %2181
        %v2183 = vsel %vm968, %v2176, %v2178
        %v2184 = vsel %vm968, %v2180, %v2182
        %2193 = vrot.lane.b32.xlu0 %v1200, 64
        %v2194 = vpop.permute.xlu0 %2193
        %2195 = vrot.lane.b32.xlu0 %v1246, 64
        %v2196 = vpop.permute.xlu0 %2195
        %2197 = vrot.lane.b32.xlu0 %v1203, 64
        %v2198 = vpop.permute.xlu0 %2197
        %2199 = vrot.lane.b32.xlu0 %v1249, 64
        %v2200 = vpop.permute.xlu0 %2199
        %v2201 = vsel %vm968, %v2194, %v2196
        %v2202 = vsel %vm968, %v2198, %v2200
        %2211 = vrot.lane.b32.xlu0 %v1338, 64
        %v2212 = vpop.permute.xlu0 %2211
        %2213 = vrot.lane.b32.xlu0 %v1384, 64
        %v2214 = vpop.permute.xlu0 %2213
        %2215 = vrot.lane.b32.xlu0 %v1341, 64
        %v2216 = vpop.permute.xlu0 %2215
        %2217 = vrot.lane.b32.xlu0 %v1387, 64
        %v2218 = vpop.permute.xlu0 %2217
        %v2219 = vsel %vm968, %v2212, %v2214
        %v2220 = vsel %vm968, %v2216, %v2218
        %2229 = vrot.lane.b32.xlu0 %v1476, 64
        %v2230 = vpop.permute.xlu0 %2229
        %2231 = vrot.lane.b32.xlu0 %v1522, 64
        %v2232 = vpop.permute.xlu0 %2231
        %2233 = vrot.lane.b32.xlu0 %v1479, 64
        %v2234 = vpop.permute.xlu0 %2233
        %2235 = vrot.lane.b32.xlu0 %v1525, 64
        %v2236 = vpop.permute.xlu0 %2235
        %v2237 = vsel %vm968, %v2230, %v2232
        %v2238 = vsel %vm968, %v2234, %v2236
        %2247 = vrot.lane.b32.xlu0 %v1614, 64
        %v2248 = vpop.permute.xlu0 %2247
        %2249 = vrot.lane.b32.xlu0 %v1660, 64
        %v2250 = vpop.permute.xlu0 %2249
        %2251 = vrot.lane.b32.xlu0 %v1617, 64
        %v2252 = vpop.permute.xlu0 %2251
        %2253 = vrot.lane.b32.xlu0 %v1663, 64
        %v2254 = vpop.permute.xlu0 %2253
        %v2255 = vsel %vm968, %v2248, %v2250
        %v2256 = vsel %vm968, %v2252, %v2254
        %2265 = vrot.lane.b32.xlu0 %v1752, 64
        %v2266 = vpop.permute.xlu0 %2265
        %2267 = vrot.lane.b32.xlu0 %v1798, 64
        %v2268 = vpop.permute.xlu0 %2267
        %2269 = vrot.lane.b32.xlu0 %v1755, 64
        %v2270 = vpop.permute.xlu0 %2269
        %2271 = vrot.lane.b32.xlu0 %v1801, 64
        %v2272 = vpop.permute.xlu0 %2271
        %v2273 = vsel %vm968, %v2266, %v2268
        %v2274 = vsel %vm968, %v2270, %v2272
        %2283 = vrot.lane.b32.xlu0 %v1890, 64
        %v2284 = vpop.permute.xlu0 %2283
        %2285 = vrot.lane.b32.xlu0 %v1936, 64
        %v2286 = vpop.permute.xlu0 %2285
        %2287 = vrot.lane.b32.xlu0 %v1893, 64
        %v2288 = vpop.permute.xlu0 %2287
        %2289 = vrot.lane.b32.xlu0 %v1939, 64
        %v2290 = vpop.permute.xlu0 %2289
        %v2291 = vsel %vm968, %v2284, %v2286
        %v2292 = vsel %vm968, %v2288, %v2290
        %2301 = vrot.lane.b32.xlu0 %v2028, 64
        %v2302 = vpop.permute.xlu0 %2301
        %2303 = vrot.lane.b32.xlu0 %v2074, 64
        %v2304 = vpop.permute.xlu0 %2303
        %2305 = vrot.lane.b32.xlu0 %v2031, 64
        %v2306 = vpop.permute.xlu0 %2305
        %2307 = vrot.lane.b32.xlu0 %v2077, 64
        %v2308 = vpop.permute.xlu0 %2307
        %v2309 = vsel %vm968, %v2302, %v2304
        %v2310 = vsel %vm968, %v2306, %v2308
        %v2315 = vrot.slane %v1154, 4
        %vm2316 = vcmask 1047556
        %v2317 = vsel %vm2316, %v2315, %v1016
        %v2318 = vrot.slane %v1016, 4
        %v2319 = vsel %vm2316, %v1154, %v2318
        %v2321 = vunpack.c.l.s4 1983009808
        %v2322 = vunpack.c.0.s8 %v2321
        %v2323 = vperm.slane %v2317, %v2322
        %v2325 = vunpack.c.l.s4 1983009808
        %v2326 = vunpack.c.0.s8 %v2325
        %v2327 = vperm.slane %v2319, %v2326
        %v2328 = vrot.slane %v2201, 4
        %v2329 = vsel %vm2316, %v2328, %v2183
        %v2330 = vrot.slane %v2183, 4
        %v2331 = vsel %vm2316, %v2201, %v2330
        %v2333 = vunpack.c.l.s4 1983009808
        %v2334 = vunpack.c.0.s8 %v2333
        %v2335 = vperm.slane %v2329, %v2334
        %v2337 = vunpack.c.l.s4 1983009808
        %v2338 = vunpack.c.0.s8 %v2337
        %v2339 = vperm.slane %v2331, %v2338
        %v2340 = vrot.slane %v1430, 4
        %v2341 = vsel %vm2316, %v2340, %v1292
        %v2342 = vrot.slane %v1292, 4
        %v2343 = vsel %vm2316, %v1430, %v2342
        %v2345 = vunpack.c.l.s4 1983009808
        %v2346 = vunpack.c.0.s8 %v2345
        %v2347 = vperm.slane %v2341, %v2346
        %v2349 = vunpack.c.l.s4 1983009808
        %v2350 = vunpack.c.0.s8 %v2349
        %v2351 = vperm.slane %v2343, %v2350
        %v2352 = vrot.slane %v2237, 4
        %v2353 = vsel %vm2316, %v2352, %v2219
        %v2354 = vrot.slane %v2219, 4
        %v2355 = vsel %vm2316, %v2237, %v2354
        %v2357 = vunpack.c.l.s4 1983009808
        %v2358 = vunpack.c.0.s8 %v2357
        %v2359 = vperm.slane %v2353, %v2358
        %v2361 = vunpack.c.l.s4 1983009808
        %v2362 = vunpack.c.0.s8 %v2361
        %v2363 = vperm.slane %v2355, %v2362
        %v2364 = vrot.slane %v2335, 4
        %v2365 = vsel %vm2316, %v2364, %v2323
        %v2366 = vrot.slane %v2323, 4
        %v2367 = vsel %vm2316, %v2335, %v2366
        %v2369 = vunpack.c.l.s4 1934713408
        %v2370 = vunpack.c.0.s8 %v2369
        %v2371 = vperm.slane %v2365, %v2370
        %v2373 = vunpack.c.l.s4 1934713408
        %v2374 = vunpack.c.0.s8 %v2373
        %v2375 = vperm.slane %v2367, %v2374
        %v2376 = vrot.slane %v2339, 4
        %v2377 = vsel %vm2316, %v2376, %v2327
        %v2378 = vrot.slane %v2327, 4
        %v2379 = vsel %vm2316, %v2339, %v2378
        %v2381 = vunpack.c.l.s4 1934713408
        %v2382 = vunpack.c.0.s8 %v2381
        %v2383 = vperm.slane %v2377, %v2382
        %v2385 = vunpack.c.l.s4 1934713408
        %v2386 = vunpack.c.0.s8 %v2385
        %v2387 = vperm.slane %v2379, %v2386
        %v2388 = vrot.slane %v2359, 4
        %v2389 = vsel %vm2316, %v2388, %v2347
        %v2390 = vrot.slane %v2347, 4
        %v2391 = vsel %vm2316, %v2359, %v2390
        %v2393 = vunpack.c.l.s4 1934713408
        %v2394 = vunpack.c.0.s8 %v2393
        %v2395 = vperm.slane %v2389, %v2394
        %v2397 = vunpack.c.l.s4 1934713408
        %v2398 = vunpack.c.0.s8 %v2397
        %v2399 = vperm.slane %v2391, %v2398
        %v2400 = vrot.slane %v2363, 4
        %v2401 = vsel %vm2316, %v2400, %v2351
        %v2402 = vrot.slane %v2351, 4
        %v2403 = vsel %vm2316, %v2363, %v2402
        %v2405 = vunpack.c.l.s4 1934713408
        %v2406 = vunpack.c.0.s8 %v2405
        %v2407 = vperm.slane %v2401, %v2406
        %v2409 = vunpack.c.l.s4 1934713408
        %v2410 = vunpack.c.0.s8 %v2409
        %v2411 = vperm.slane %v2403, %v2410
        %v2412 = vrot.slane %v2395, 4
        %v2413 = vsel %vm2316, %v2412, %v2371
        %v2414 = vrot.slane %v2371, 4
        %v2415 = vsel %vm2316, %v2395, %v2414
        %v2416 = vrot.slane %v2399, 4
        %v2417 = vsel %vm2316, %v2416, %v2375
        %v2418 = vrot.slane %v2375, 4
        %v2419 = vsel %vm2316, %v2399, %v2418
        %v2420 = vrot.slane %v2407, 4
        %v2421 = vsel %vm2316, %v2420, %v2383
        %v2422 = vrot.slane %v2383, 4
        %v2423 = vsel %vm2316, %v2407, %v2422
        %v2424 = vrot.slane %v2411, 4
        %v2425 = vsel %vm2316, %v2424, %v2387
        %v2426 = vrot.slane %v2387, 4
        %v2427 = vsel %vm2316, %v2411, %v2426
        %v2428 = vrot.slane %v1706, 4
        %v2429 = vsel %vm2316, %v2428, %v1568
        %v2430 = vrot.slane %v1568, 4
        %v2431 = vsel %vm2316, %v1706, %v2430
        %v2433 = vunpack.c.l.s4 1983009808
        %v2434 = vunpack.c.0.s8 %v2433
        %v2435 = vperm.slane %v2429, %v2434
        %v2437 = vunpack.c.l.s4 1983009808
        %v2438 = vunpack.c.0.s8 %v2437
        %v2439 = vperm.slane %v2431, %v2438
        %v2440 = vrot.slane %v2273, 4
        %v2441 = vsel %vm2316, %v2440, %v2255
        %v2442 = vrot.slane %v2255, 4
        %v2443 = vsel %vm2316, %v2273, %v2442
        %v2445 = vunpack.c.l.s4 1983009808
        %v2446 = vunpack.c.0.s8 %v2445
        %v2447 = vperm.slane %v2441, %v2446
        %v2449 = vunpack.c.l.s4 1983009808
        %v2450 = vunpack.c.0.s8 %v2449
        %v2451 = vperm.slane %v2443, %v2450
        %v2452 = vrot.slane %v1982, 4
        %v2453 = vsel %vm2316, %v2452, %v1844
        %v2454 = vrot.slane %v1844, 4
        %v2455 = vsel %vm2316, %v1982, %v2454
        %v2457 = vunpack.c.l.s4 1983009808
        %v2458 = vunpack.c.0.s8 %v2457
        %v2459 = vperm.slane %v2453, %v2458
        %v2461 = vunpack.c.l.s4 1983009808
        %v2462 = vunpack.c.0.s8 %v2461
        %v2463 = vperm.slane %v2455, %v2462
        %v2464 = vrot.slane %v2309, 4
        %v2465 = vsel %vm2316, %v2464, %v2291
        %v2466 = vrot.slane %v2291, 4
        %v2467 = vsel %vm2316, %v2309, %v2466
        %v2469 = vunpack.c.l.s4 1983009808
        %v2470 = vunpack.c.0.s8 %v2469
        %v2471 = vperm.slane %v2465, %v2470
        %v2473 = vunpack.c.l.s4 1983009808
        %v2474 = vunpack.c.0.s8 %v2473
        %v2475 = vperm.slane %v2467, %v2474
        %v2476 = vrot.slane %v2447, 4
        %v2477 = vsel %vm2316, %v2476, %v2435
        %v2478 = vrot.slane %v2435, 4
        %v2479 = vsel %vm2316, %v2447, %v2478
        %v2481 = vunpack.c.l.s4 1934713408
        %v2482 = vunpack.c.0.s8 %v2481
        %v2483 = vperm.slane %v2477, %v2482
        %v2485 = vunpack.c.l.s4 1934713408
        %v2486 = vunpack.c.0.s8 %v2485
        %v2487 = vperm.slane %v2479, %v2486
        %v2488 = vrot.slane %v2451, 4
        %v2489 = vsel %vm2316, %v2488, %v2439
        %v2490 = vrot.slane %v2439, 4
        %v2491 = vsel %vm2316, %v2451, %v2490
        %v2493 = vunpack.c.l.s4 1934713408
        %v2494 = vunpack.c.0.s8 %v2493
        %v2495 = vperm.slane %v2489, %v2494
        %v2497 = vunpack.c.l.s4 1934713408
        %v2498 = vunpack.c.0.s8 %v2497
        %v2499 = vperm.slane %v2491, %v2498
        %v2500 = vrot.slane %v2471, 4
        %v2501 = vsel %vm2316, %v2500, %v2459
        %v2502 = vrot.slane %v2459, 4
        %v2503 = vsel %vm2316, %v2471, %v2502
        %v2505 = vunpack.c.l.s4 1934713408
        %v2506 = vunpack.c.0.s8 %v2505
        %v2507 = vperm.slane %v2501, %v2506
        %v2509 = vunpack.c.l.s4 1934713408
        %v2510 = vunpack.c.0.s8 %v2509
        %v2511 = vperm.slane %v2503, %v2510
        %v2512 = vrot.slane %v2475, 4
        %v2513 = vsel %vm2316, %v2512, %v2463
        %v2514 = vrot.slane %v2463, 4
        %v2515 = vsel %vm2316, %v2475, %v2514
        %v2517 = vunpack.c.l.s4 1934713408
        %v2518 = vunpack.c.0.s8 %v2517
        %v2519 = vperm.slane %v2513, %v2518
        %v2521 = vunpack.c.l.s4 1934713408
        %v2522 = vunpack.c.0.s8 %v2521
        %v2523 = vperm.slane %v2515, %v2522
        %v2524 = vrot.slane %v2507, 4
        %v2525 = vsel %vm2316, %v2524, %v2483
        %v2526 = vrot.slane %v2483, 4
        %v2527 = vsel %vm2316, %v2507, %v2526
        %v2528 = vrot.slane %v2511, 4
        %v2529 = vsel %vm2316, %v2528, %v2487
        %v2530 = vrot.slane %v2487, 4
        %v2531 = vsel %vm2316, %v2511, %v2530
        %v2532 = vrot.slane %v2519, 4
        %v2533 = vsel %vm2316, %v2532, %v2495
        %v2534 = vrot.slane %v2495, 4
        %v2535 = vsel %vm2316, %v2519, %v2534
        %v2536 = vrot.slane %v2523, 4
        %v2537 = vsel %vm2316, %v2536, %v2499
        %v2538 = vrot.slane %v2499, 4
        %v2539 = vsel %vm2316, %v2523, %v2538
        %v2540 = vrot.slane %v2120, 4
        %v2541 = vsel %vm2316, 0.0, %v2540
        %v2543 = vunpack.c.l.s4 1983009808
        %v2544 = vunpack.c.0.s8 %v2543
        %v2545 = vperm.slane %v2120, %v2544
        %v2547 = vunpack.c.l.s4 1983009808
        %v2548 = vunpack.c.0.s8 %v2547
        %v2549 = vperm.slane %v2541, %v2548
        %v2550 = vrot.slane %v2545, 4
        %v2551 = vsel %vm2316, 0.0, %v2550
        %v2553 = vunpack.c.l.s4 1934713408
        %v2554 = vunpack.c.0.s8 %v2553
        %v2555 = vperm.slane %v2545, %v2554
        %v2557 = vunpack.c.l.s4 1934713408
        %v2558 = vunpack.c.0.s8 %v2557
        %v2559 = vperm.slane %v2551, %v2558
        %v2560 = vrot.slane %v2549, 4
        %v2561 = vsel %vm2316, 0.0, %v2560
        %v2563 = vunpack.c.l.s4 1934713408
        %v2564 = vunpack.c.0.s8 %v2563
        %v2565 = vperm.slane %v2549, %v2564
        %v2567 = vunpack.c.l.s4 1934713408
        %v2568 = vunpack.c.0.s8 %v2567
        %v2569 = vperm.slane %v2561, %v2568
        %v2570 = vrot.slane %v2555, 4
        %v2571 = vsel %vm2316, 0.0, %v2570
        %v2572 = vrot.slane %v2559, 4
        %v2573 = vsel %vm2316, 0.0, %v2572
        %v2574 = vrot.slane %v2565, 4
        %v2575 = vsel %vm2316, 0.0, %v2574
        %v2576 = vrot.slane %v2569, 4
        %v2577 = vsel %vm2316, 0.0, %v2576
        %v2578 = vrot.slane %v1157, 4
        %v2579 = vsel %vm2316, %v2578, %v1019
        %v2580 = vrot.slane %v1019, 4
        %v2581 = vsel %vm2316, %v1157, %v2580
        %v2583 = vunpack.c.l.s4 1983009808
        %v2584 = vunpack.c.0.s8 %v2583
        %v2585 = vperm.slane %v2579, %v2584
        %v2587 = vunpack.c.l.s4 1983009808
        %v2588 = vunpack.c.0.s8 %v2587
        %v2589 = vperm.slane %v2581, %v2588
        %v2590 = vrot.slane %v2202, 4
        %v2591 = vsel %vm2316, %v2590, %v2184
        %v2592 = vrot.slane %v2184, 4
        %v2593 = vsel %vm2316, %v2202, %v2592
        %v2595 = vunpack.c.l.s4 1983009808
        %v2596 = vunpack.c.0.s8 %v2595
        %v2597 = vperm.slane %v2591, %v2596
        %v2599 = vunpack.c.l.s4 1983009808
        %v2600 = vunpack.c.0.s8 %v2599
        %v2601 = vperm.slane %v2593, %v2600
        %v2602 = vrot.slane %v1433, 4
        %v2603 = vsel %vm2316, %v2602, %v1295
        %v2604 = vrot.slane %v1295, 4
        %v2605 = vsel %vm2316, %v1433, %v2604
        %v2607 = vunpack.c.l.s4 1983009808
        %v2608 = vunpack.c.0.s8 %v2607
        %v2609 = vperm.slane %v2603, %v2608
        %v2611 = vunpack.c.l.s4 1983009808
        %v2612 = vunpack.c.0.s8 %v2611
        %v2613 = vperm.slane %v2605, %v2612
        %v2614 = vrot.slane %v2238, 4
        %v2615 = vsel %vm2316, %v2614, %v2220
        %v2616 = vrot.slane %v2220, 4
        %v2617 = vsel %vm2316, %v2238, %v2616
        %v2619 = vunpack.c.l.s4 1983009808
        %v2620 = vunpack.c.0.s8 %v2619
        %v2621 = vperm.slane %v2615, %v2620
        %v2623 = vunpack.c.l.s4 1983009808
        %v2624 = vunpack.c.0.s8 %v2623
        %v2625 = vperm.slane %v2617, %v2624
        %v2626 = vrot.slane %v2597, 4
        %v2627 = vsel %vm2316, %v2626, %v2585
        %v2628 = vrot.slane %v2585, 4
        %v2629 = vsel %vm2316, %v2597, %v2628
        %v2631 = vunpack.c.l.s4 1934713408
        %v2632 = vunpack.c.0.s8 %v2631
        %v2633 = vperm.slane %v2627, %v2632
        %v2635 = vunpack.c.l.s4 1934713408
        %v2636 = vunpack.c.0.s8 %v2635
        %v2637 = vperm.slane %v2629, %v2636
        %v2638 = vrot.slane %v2601, 4
        %v2639 = vsel %vm2316, %v2638, %v2589
        %v2640 = vrot.slane %v2589, 4
        %v2641 = vsel %vm2316, %v2601, %v2640
        %v2643 = vunpack.c.l.s4 1934713408
        %v2644 = vunpack.c.0.s8 %v2643
        %v2645 = vperm.slane %v2639, %v2644
        %v2647 = vunpack.c.l.s4 1934713408
        %v2648 = vunpack.c.0.s8 %v2647
        %v2649 = vperm.slane %v2641, %v2648
        %v2650 = vrot.slane %v2621, 4
        %v2651 = vsel %vm2316, %v2650, %v2609
        %v2652 = vrot.slane %v2609, 4
        %v2653 = vsel %vm2316, %v2621, %v2652
        %v2655 = vunpack.c.l.s4 1934713408
        %v2656 = vunpack.c.0.s8 %v2655
        %v2657 = vperm.slane %v2651, %v2656
        %v2659 = vunpack.c.l.s4 1934713408
        %v2660 = vunpack.c.0.s8 %v2659
        %v2661 = vperm.slane %v2653, %v2660
        %v2662 = vrot.slane %v2625, 4
        %v2663 = vsel %vm2316, %v2662, %v2613
        %v2664 = vrot.slane %v2613, 4
        %v2665 = vsel %vm2316, %v2625, %v2664
        %v2667 = vunpack.c.l.s4 1934713408
        %v2668 = vunpack.c.0.s8 %v2667
        %v2669 = vperm.slane %v2663, %v2668
        %v2671 = vunpack.c.l.s4 1934713408
        %v2672 = vunpack.c.0.s8 %v2671
        %v2673 = vperm.slane %v2665, %v2672
        %v2674 = vrot.slane %v2657, 4
        %v2675 = vsel %vm2316, %v2674, %v2633
        %v2676 = vrot.slane %v2633, 4
        %v2677 = vsel %vm2316, %v2657, %v2676
        %v2678 = vrot.slane %v2661, 4
        %v2679 = vsel %vm2316, %v2678, %v2637
        %v2680 = vrot.slane %v2637, 4
        %v2681 = vsel %vm2316, %v2661, %v2680
        %v2682 = vrot.slane %v2669, 4
        %v2683 = vsel %vm2316, %v2682, %v2645
        %v2684 = vrot.slane %v2645, 4
        %v2685 = vsel %vm2316, %v2669, %v2684
        %v2686 = vrot.slane %v2673, 4
        %v2687 = vsel %vm2316, %v2686, %v2649
        %v2688 = vrot.slane %v2649, 4
        %v2689 = vsel %vm2316, %v2673, %v2688
        %v2690 = vrot.slane %v1709, 4
        %v2691 = vsel %vm2316, %v2690, %v1571
        %v2692 = vrot.slane %v1571, 4
        %v2693 = vsel %vm2316, %v1709, %v2692
        %v2695 = vunpack.c.l.s4 1983009808
        %v2696 = vunpack.c.0.s8 %v2695
        %v2697 = vperm.slane %v2691, %v2696
        %v2699 = vunpack.c.l.s4 1983009808
        %v2700 = vunpack.c.0.s8 %v2699
        %v2701 = vperm.slane %v2693, %v2700
        %v2702 = vrot.slane %v2274, 4
        %v2703 = vsel %vm2316, %v2702, %v2256
        %v2704 = vrot.slane %v2256, 4
        %v2705 = vsel %vm2316, %v2274, %v2704
        %v2707 = vunpack.c.l.s4 1983009808
        %v2708 = vunpack.c.0.s8 %v2707
        %v2709 = vperm.slane %v2703, %v2708
        %v2711 = vunpack.c.l.s4 1983009808
        %v2712 = vunpack.c.0.s8 %v2711
        %v2713 = vperm.slane %v2705, %v2712
        %v2714 = vrot.slane %v1985, 4
        %v2715 = vsel %vm2316, %v2714, %v1847
        %v2716 = vrot.slane %v1847, 4
        %v2717 = vsel %vm2316, %v1985, %v2716
        %v2719 = vunpack.c.l.s4 1983009808
        %v2720 = vunpack.c.0.s8 %v2719
        %v2721 = vperm.slane %v2715, %v2720
        %v2723 = vunpack.c.l.s4 1983009808
        %v2724 = vunpack.c.0.s8 %v2723
        %v2725 = vperm.slane %v2717, %v2724
        %v2726 = vrot.slane %v2310, 4
        %v2727 = vsel %vm2316, %v2726, %v2292
        %v2728 = vrot.slane %v2292, 4
        %v2729 = vsel %vm2316, %v2310, %v2728
        %v2731 = vunpack.c.l.s4 1983009808
        %v2732 = vunpack.c.0.s8 %v2731
        %v2733 = vperm.slane %v2727, %v2732
        %v2735 = vunpack.c.l.s4 1983009808
        %v2736 = vunpack.c.0.s8 %v2735
        %v2737 = vperm.slane %v2729, %v2736
        %v2738 = vrot.slane %v2709, 4
        %v2739 = vsel %vm2316, %v2738, %v2697
        %v2740 = vrot.slane %v2697, 4
        %v2741 = vsel %vm2316, %v2709, %v2740
        %v2743 = vunpack.c.l.s4 1934713408
        %v2744 = vunpack.c.0.s8 %v2743
        %v2745 = vperm.slane %v2739, %v2744
        %v2747 = vunpack.c.l.s4 1934713408
        %v2748 = vunpack.c.0.s8 %v2747
        %v2749 = vperm.slane %v2741, %v2748
        %v2750 = vrot.slane %v2713, 4
        %v2751 = vsel %vm2316, %v2750, %v2701
        %v2752 = vrot.slane %v2701, 4
        %v2753 = vsel %vm2316, %v2713, %v2752
        %v2755 = vunpack.c.l.s4 1934713408
        %v2756 = vunpack.c.0.s8 %v2755
        %v2757 = vperm.slane %v2751, %v2756
        %v2759 = vunpack.c.l.s4 1934713408
        %v2760 = vunpack.c.0.s8 %v2759
        %v2761 = vperm.slane %v2753, %v2760
        %v2762 = vrot.slane %v2733, 4
        %v2763 = vsel %vm2316, %v2762, %v2721
        %v2764 = vrot.slane %v2721, 4
        %v2765 = vsel %vm2316, %v2733, %v2764
        %v2767 = vunpack.c.l.s4 1934713408
        %v2768 = vunpack.c.0.s8 %v2767
        %v2769 = vperm.slane %v2763, %v2768
        %v2771 = vunpack.c.l.s4 1934713408
        %v2772 = vunpack.c.0.s8 %v2771
        %v2773 = vperm.slane %v2765, %v2772
        %v2774 = vrot.slane %v2737, 4
        %v2775 = vsel %vm2316, %v2774, %v2725
        %v2776 = vrot.slane %v2725, 4
        %v2777 = vsel %vm2316, %v2737, %v2776
        %v2779 = vunpack.c.l.s4 1934713408
        %v2780 = vunpack.c.0.s8 %v2779
        %v2781 = vperm.slane %v2775, %v2780
        %v2783 = vunpack.c.l.s4 1934713408
        %v2784 = vunpack.c.0.s8 %v2783
        %v2785 = vperm.slane %v2777, %v2784
        %v2786 = vrot.slane %v2769, 4
        %v2787 = vsel %vm2316, %v2786, %v2745
        %v2788 = vrot.slane %v2745, 4
        %v2789 = vsel %vm2316, %v2769, %v2788
        %v2790 = vrot.slane %v2773, 4
        %v2791 = vsel %vm2316, %v2790, %v2749
        %v2792 = vrot.slane %v2749, 4
        %v2793 = vsel %vm2316, %v2773, %v2792
        %v2794 = vrot.slane %v2781, 4
        %v2795 = vsel %vm2316, %v2794, %v2757
        %v2796 = vrot.slane %v2757, 4
        %v2797 = vsel %vm2316, %v2781, %v2796
        %v2798 = vrot.slane %v2785, 4
        %v2799 = vsel %vm2316, %v2798, %v2761
        %v2800 = vrot.slane %v2761, 4
        %v2801 = vsel %vm2316, %v2785, %v2800
        %v2802 = vrot.slane %v2123, 4
        %v2803 = vsel %vm2316, 0.0, %v2802
        %v2805 = vunpack.c.l.s4 1983009808
        %v2806 = vunpack.c.0.s8 %v2805
        %v2807 = vperm.slane %v2123, %v2806
        %v2809 = vunpack.c.l.s4 1983009808
        %v2810 = vunpack.c.0.s8 %v2809
        %v2811 = vperm.slane %v2803, %v2810
        %v2812 = vrot.slane %v2807, 4
        %v2813 = vsel %vm2316, 0.0, %v2812
        %v2815 = vunpack.c.l.s4 1934713408
        %v2816 = vunpack.c.0.s8 %v2815
        %v2817 = vperm.slane %v2807, %v2816
        %v2819 = vunpack.c.l.s4 1934713408
        %v2820 = vunpack.c.0.s8 %v2819
        %v2821 = vperm.slane %v2813, %v2820
        %v2822 = vrot.slane %v2811, 4
        %v2823 = vsel %vm2316, 0.0, %v2822
        %v2825 = vunpack.c.l.s4 1934713408
        %v2826 = vunpack.c.0.s8 %v2825
        %v2827 = vperm.slane %v2811, %v2826
        %v2829 = vunpack.c.l.s4 1934713408
        %v2830 = vunpack.c.0.s8 %v2829
        %v2831 = vperm.slane %v2823, %v2830
        %v2832 = vrot.slane %v2817, 4
        %v2833 = vsel %vm2316, 0.0, %v2832
        %v2834 = vrot.slane %v2821, 4
        %v2835 = vsel %vm2316, 0.0, %v2834
        %v2836 = vrot.slane %v2827, 4
        %v2837 = vsel %vm2316, 0.0, %v2836
        %v2838 = vrot.slane %v2831, 4
        %v2839 = vsel %vm2316, 0.0, %v2838
        %v2840 = vrot.slane %v1200, 4
        %v2841 = vsel %vm2316, %v2840, %v1062
        %v2842 = vrot.slane %v1062, 4
        %v2843 = vsel %vm2316, %v1200, %v2842
        %v2845 = vunpack.c.l.s4 1983009808
        %v2846 = vunpack.c.0.s8 %v2845
        %v2847 = vperm.slane %v2841, %v2846
        %v2849 = vunpack.c.l.s4 1983009808
        %v2850 = vunpack.c.0.s8 %v2849
        %v2851 = vperm.slane %v2843, %v2850
        %v2852 = vrot.slane %v2196, 4
        %v2853 = vsel %vm2316, %v2852, %v2178
        %v2854 = vrot.slane %v2178, 4
        %v2855 = vsel %vm2316, %v2196, %v2854
        %v2857 = vunpack.c.l.s4 1983009808
        %v2858 = vunpack.c.0.s8 %v2857
        %v2859 = vperm.slane %v2853, %v2858
        %v2861 = vunpack.c.l.s4 1983009808
        %v2862 = vunpack.c.0.s8 %v2861
        %v2863 = vperm.slane %v2855, %v2862
        %v2864 = vrot.slane %v1476, 4
        %v2865 = vsel %vm2316, %v2864, %v1338
        %v2866 = vrot.slane %v1338, 4
        %v2867 = vsel %vm2316, %v1476, %v2866
        %v2869 = vunpack.c.l.s4 1983009808
        %v2870 = vunpack.c.0.s8 %v2869
        %v2871 = vperm.slane %v2865, %v2870
        %v2873 = vunpack.c.l.s4 1983009808
        %v2874 = vunpack.c.0.s8 %v2873
        %v2875 = vperm.slane %v2867, %v2874
        %v2876 = vrot.slane %v2232, 4
        %v2877 = vsel %vm2316, %v2876, %v2214
        %v2878 = vrot.slane %v2214, 4
        %v2879 = vsel %vm2316, %v2232, %v2878
        %v2881 = vunpack.c.l.s4 1983009808
        %v2882 = vunpack.c.0.s8 %v2881
        %v2883 = vperm.slane %v2877, %v2882
        %v2885 = vunpack.c.l.s4 1983009808
        %v2886 = vunpack.c.0.s8 %v2885
        %v2887 = vperm.slane %v2879, %v2886
        %v2888 = vrot.slane %v2859, 4
        %v2889 = vsel %vm2316, %v2888, %v2847
        %v2890 = vrot.slane %v2847, 4
        %v2891 = vsel %vm2316, %v2859, %v2890
        %v2893 = vunpack.c.l.s4 1934713408
        %v2894 = vunpack.c.0.s8 %v2893
        %v2895 = vperm.slane %v2889, %v2894
        %v2897 = vunpack.c.l.s4 1934713408
        %v2898 = vunpack.c.0.s8 %v2897
        %v2899 = vperm.slane %v2891, %v2898
        %v2900 = vrot.slane %v2863, 4
        %v2901 = vsel %vm2316, %v2900, %v2851
        %v2902 = vrot.slane %v2851, 4
        %v2903 = vsel %vm2316, %v2863, %v2902
        %v2905 = vunpack.c.l.s4 1934713408
        %v2906 = vunpack.c.0.s8 %v2905
        %v2907 = vperm.slane %v2901, %v2906
        %v2909 = vunpack.c.l.s4 1934713408
        %v2910 = vunpack.c.0.s8 %v2909
        %v2911 = vperm.slane %v2903, %v2910
        %v2912 = vrot.slane %v2883, 4
        %v2913 = vsel %vm2316, %v2912, %v2871
        %v2914 = vrot.slane %v2871, 4
        %v2915 = vsel %vm2316, %v2883, %v2914
        %v2917 = vunpack.c.l.s4 1934713408
        %v2918 = vunpack.c.0.s8 %v2917
        %v2919 = vperm.slane %v2913, %v2918
        %v2921 = vunpack.c.l.s4 1934713408
        %v2922 = vunpack.c.0.s8 %v2921
        %v2923 = vperm.slane %v2915, %v2922
        %v2924 = vrot.slane %v2887, 4
        %v2925 = vsel %vm2316, %v2924, %v2875
        %v2926 = vrot.slane %v2875, 4
        %v2927 = vsel %vm2316, %v2887, %v2926
        %v2929 = vunpack.c.l.s4 1934713408
        %v2930 = vunpack.c.0.s8 %v2929
        %v2931 = vperm.slane %v2925, %v2930
        %v2933 = vunpack.c.l.s4 1934713408
        %v2934 = vunpack.c.0.s8 %v2933
        %v2935 = vperm.slane %v2927, %v2934
        %v2936 = vrot.slane %v2919, 4
        %v2937 = vsel %vm2316, %v2936, %v2895
        %v2938 = vrot.slane %v2895, 4
        %v2939 = vsel %vm2316, %v2919, %v2938
        %v2940 = vrot.slane %v2923, 4
        %v2941 = vsel %vm2316, %v2940, %v2899
        %v2942 = vrot.slane %v2899, 4
        %v2943 = vsel %vm2316, %v2923, %v2942
        %v2944 = vrot.slane %v2931, 4
        %v2945 = vsel %vm2316, %v2944, %v2907
        %v2946 = vrot.slane %v2907, 4
        %v2947 = vsel %vm2316, %v2931, %v2946
        %v2948 = vrot.slane %v2935, 4
        %v2949 = vsel %vm2316, %v2948, %v2911
        %v2950 = vrot.slane %v2911, 4
        %v2951 = vsel %vm2316, %v2935, %v2950
        %v2952 = vrot.slane %v1752, 4
        %v2953 = vsel %vm2316, %v2952, %v1614
        %v2954 = vrot.slane %v1614, 4
        %v2955 = vsel %vm2316, %v1752, %v2954
        %v2957 = vunpack.c.l.s4 1983009808
        %v2958 = vunpack.c.0.s8 %v2957
        %v2959 = vperm.slane %v2953, %v2958
        %v2961 = vunpack.c.l.s4 1983009808
        %v2962 = vunpack.c.0.s8 %v2961
        %v2963 = vperm.slane %v2955, %v2962
        %v2964 = vrot.slane %v2268, 4
        %v2965 = vsel %vm2316, %v2964, %v2250
        %v2966 = vrot.slane %v2250, 4
        %v2967 = vsel %vm2316, %v2268, %v2966
        %v2969 = vunpack.c.l.s4 1983009808
        %v2970 = vunpack.c.0.s8 %v2969
        %v2971 = vperm.slane %v2965, %v2970
        %v2973 = vunpack.c.l.s4 1983009808
        %v2974 = vunpack.c.0.s8 %v2973
        %v2975 = vperm.slane %v2967, %v2974
        %v2976 = vrot.slane %v2028, 4
        %v2977 = vsel %vm2316, %v2976, %v1890
        %v2978 = vrot.slane %v1890, 4
        %v2979 = vsel %vm2316, %v2028, %v2978
        %v2981 = vunpack.c.l.s4 1983009808
        %v2982 = vunpack.c.0.s8 %v2981
        %v2983 = vperm.slane %v2977, %v2982
        %v2985 = vunpack.c.l.s4 1983009808
        %v2986 = vunpack.c.0.s8 %v2985
        %v2987 = vperm.slane %v2979, %v2986
        %v2988 = vrot.slane %v2304, 4
        %v2989 = vsel %vm2316, %v2988, %v2286
        %v2990 = vrot.slane %v2286, 4
        %v2991 = vsel %vm2316, %v2304, %v2990
        %v2993 = vunpack.c.l.s4 1983009808
        %v2994 = vunpack.c.0.s8 %v2993
        %v2995 = vperm.slane %v2989, %v2994
        %v2997 = vunpack.c.l.s4 1983009808
        %v2998 = vunpack.c.0.s8 %v2997
        %v2999 = vperm.slane %v2991, %v2998
        %v3000 = vrot.slane %v2971, 4
        %v3001 = vsel %vm2316, %v3000, %v2959
        %v3002 = vrot.slane %v2959, 4
        %v3003 = vsel %vm2316, %v2971, %v3002
        %v3005 = vunpack.c.l.s4 1934713408
        %v3006 = vunpack.c.0.s8 %v3005
        %v3007 = vperm.slane %v3001, %v3006
        %v3009 = vunpack.c.l.s4 1934713408
        %v3010 = vunpack.c.0.s8 %v3009
        %v3011 = vperm.slane %v3003, %v3010
        %v3012 = vrot.slane %v2975, 4
        %v3013 = vsel %vm2316, %v3012, %v2963
        %v3014 = vrot.slane %v2963, 4
        %v3015 = vsel %vm2316, %v2975, %v3014
        %v3017 = vunpack.c.l.s4 1934713408
        %v3018 = vunpack.c.0.s8 %v3017
        %v3019 = vperm.slane %v3013, %v3018
        %v3021 = vunpack.c.l.s4 1934713408
        %v3022 = vunpack.c.0.s8 %v3021
        %v3023 = vperm.slane %v3015, %v3022
        %v3024 = vrot.slane %v2995, 4
        %v3025 = vsel %vm2316, %v3024, %v2983
        %v3026 = vrot.slane %v2983, 4
        %v3027 = vsel %vm2316, %v2995, %v3026
        %v3029 = vunpack.c.l.s4 1934713408
        %v3030 = vunpack.c.0.s8 %v3029
        %v3031 = vperm.slane %v3025, %v3030
        %v3033 = vunpack.c.l.s4 1934713408
        %v3034 = vunpack.c.0.s8 %v3033
        %v3035 = vperm.slane %v3027, %v3034
        %v3036 = vrot.slane %v2999, 4
        %v3037 = vsel %vm2316, %v3036, %v2987
        %v3038 = vrot.slane %v2987, 4
        %v3039 = vsel %vm2316, %v2999, %v3038
        %v3041 = vunpack.c.l.s4 1934713408
        %v3042 = vunpack.c.0.s8 %v3041
        %v3043 = vperm.slane %v3037, %v3042
        %v3045 = vunpack.c.l.s4 1934713408
        %v3046 = vunpack.c.0.s8 %v3045
        %v3047 = vperm.slane %v3039, %v3046
        %v3048 = vrot.slane %v3031, 4
        %v3049 = vsel %vm2316, %v3048, %v3007
        %v3050 = vrot.slane %v3007, 4
        %v3051 = vsel %vm2316, %v3031, %v3050
        %v3052 = vrot.slane %v3035, 4
        %v3053 = vsel %vm2316, %v3052, %v3011
        %v3054 = vrot.slane %v3011, 4
        %v3055 = vsel %vm2316, %v3035, %v3054
        %v3056 = vrot.slane %v3043, 4
        %v3057 = vsel %vm2316, %v3056, %v3019
        %v3058 = vrot.slane %v3019, 4
        %v3059 = vsel %vm2316, %v3043, %v3058
        %v3060 = vrot.slane %v3047, 4
        %v3061 = vsel %vm2316, %v3060, %v3023
        %v3062 = vrot.slane %v3023, 4
        %v3063 = vsel %vm2316, %v3047, %v3062
        %v3064 = vrot.slane %v2166, 4
        %v3065 = vsel %vm2316, 0.0, %v3064
        %v3067 = vunpack.c.l.s4 1983009808
        %v3068 = vunpack.c.0.s8 %v3067
        %v3069 = vperm.slane %v2166, %v3068
        %v3071 = vunpack.c.l.s4 1983009808
        %v3072 = vunpack.c.0.s8 %v3071
        %v3073 = vperm.slane %v3065, %v3072
        %v3074 = vrot.slane %v3069, 4
        %v3075 = vsel %vm2316, 0.0, %v3074
        %v3077 = vunpack.c.l.s4 1934713408
        %v3078 = vunpack.c.0.s8 %v3077
        %v3079 = vperm.slane %v3069, %v3078
        %v3081 = vunpack.c.l.s4 1934713408
        %v3082 = vunpack.c.0.s8 %v3081
        %v3083 = vperm.slane %v3075, %v3082
        %v3084 = vrot.slane %v3073, 4
        %v3085 = vsel %vm2316, 0.0, %v3084
        %v3087 = vunpack.c.l.s4 1934713408
        %v3088 = vunpack.c.0.s8 %v3087
        %v3089 = vperm.slane %v3073, %v3088
        %v3091 = vunpack.c.l.s4 1934713408
        %v3092 = vunpack.c.0.s8 %v3091
        %v3093 = vperm.slane %v3085, %v3092
        %v3094 = vrot.slane %v3079, 4
        %v3095 = vsel %vm2316, 0.0, %v3094
        %v3096 = vrot.slane %v3083, 4
        %v3097 = vsel %vm2316, 0.0, %v3096
        %v3098 = vrot.slane %v3089, 4
        %v3099 = vsel %vm2316, 0.0, %v3098
        %v3100 = vrot.slane %v3093, 4
        %v3101 = vsel %vm2316, 0.0, %v3100
        %v3102 = vrot.slane %v1203, 4
        %v3103 = vsel %vm2316, %v3102, %v1065
        %v3104 = vrot.slane %v1065, 4
        %v3105 = vsel %vm2316, %v1203, %v3104
        %v3107 = vunpack.c.l.s4 1983009808
        %v3108 = vunpack.c.0.s8 %v3107
        %v3109 = vperm.slane %v3103, %v3108
        %v3111 = vunpack.c.l.s4 1983009808
        %v3112 = vunpack.c.0.s8 %v3111
        %v3113 = vperm.slane %v3105, %v3112
        %v3114 = vrot.slane %v2200, 4
        %v3115 = vsel %vm2316, %v3114, %v2182
        %v3116 = vrot.slane %v2182, 4
        %v3117 = vsel %vm2316, %v2200, %v3116
        %v3119 = vunpack.c.l.s4 1983009808
        %v3120 = vunpack.c.0.s8 %v3119
        %v3121 = vperm.slane %v3115, %v3120
        %v3123 = vunpack.c.l.s4 1983009808
        %v3124 = vunpack.c.0.s8 %v3123
        %v3125 = vperm.slane %v3117, %v3124
        %v3126 = vrot.slane %v1479, 4
        %v3127 = vsel %vm2316, %v3126, %v1341
        %v3128 = vrot.slane %v1341, 4
        %v3129 = vsel %vm2316, %v1479, %v3128
        %v3131 = vunpack.c.l.s4 1983009808
        %v3132 = vunpack.c.0.s8 %v3131
        %v3133 = vperm.slane %v3127, %v3132
        %v3135 = vunpack.c.l.s4 1983009808
        %v3136 = vunpack.c.0.s8 %v3135
        %v3137 = vperm.slane %v3129, %v3136
        %v3138 = vrot.slane %v2236, 4
        %v3139 = vsel %vm2316, %v3138, %v2218
        %v3140 = vrot.slane %v2218, 4
        %v3141 = vsel %vm2316, %v2236, %v3140
        %v3143 = vunpack.c.l.s4 1983009808
        %v3144 = vunpack.c.0.s8 %v3143
        %v3145 = vperm.slane %v3139, %v3144
        %v3147 = vunpack.c.l.s4 1983009808
        %v3148 = vunpack.c.0.s8 %v3147
        %v3149 = vperm.slane %v3141, %v3148
        %v3150 = vrot.slane %v3121, 4
        %v3151 = vsel %vm2316, %v3150, %v3109
        %v3152 = vrot.slane %v3109, 4
        %v3153 = vsel %vm2316, %v3121, %v3152
        %v3155 = vunpack.c.l.s4 1934713408
        %v3156 = vunpack.c.0.s8 %v3155
        %v3157 = vperm.slane %v3151, %v3156
        %v3159 = vunpack.c.l.s4 1934713408
        %v3160 = vunpack.c.0.s8 %v3159
        %v3161 = vperm.slane %v3153, %v3160
        %v3162 = vrot.slane %v3125, 4
        %v3163 = vsel %vm2316, %v3162, %v3113
        %v3164 = vrot.slane %v3113, 4
        %v3165 = vsel %vm2316, %v3125, %v3164
        %v3167 = vunpack.c.l.s4 1934713408
        %v3168 = vunpack.c.0.s8 %v3167
        %v3169 = vperm.slane %v3163, %v3168
        %v3171 = vunpack.c.l.s4 1934713408
        %v3172 = vunpack.c.0.s8 %v3171
        %v3173 = vperm.slane %v3165, %v3172
        %v3174 = vrot.slane %v3145, 4
        %v3175 = vsel %vm2316, %v3174, %v3133
        %v3176 = vrot.slane %v3133, 4
        %v3177 = vsel %vm2316, %v3145, %v3176
        %v3179 = vunpack.c.l.s4 1934713408
        %v3180 = vunpack.c.0.s8 %v3179
        %v3181 = vperm.slane %v3175, %v3180
        %v3183 = vunpack.c.l.s4 1934713408
        %v3184 = vunpack.c.0.s8 %v3183
        %v3185 = vperm.slane %v3177, %v3184
        %v3186 = vrot.slane %v3149, 4
        %v3187 = vsel %vm2316, %v3186, %v3137
        %v3188 = vrot.slane %v3137, 4
        %v3189 = vsel %vm2316, %v3149, %v3188
        %v3191 = vunpack.c.l.s4 1934713408
        %v3192 = vunpack.c.0.s8 %v3191
        %v3193 = vperm.slane %v3187, %v3192
        %v3195 = vunpack.c.l.s4 1934713408
        %v3196 = vunpack.c.0.s8 %v3195
        %v3197 = vperm.slane %v3189, %v3196
        %v3198 = vrot.slane %v3181, 4
        %v3199 = vsel %vm2316, %v3198, %v3157
        %v3200 = vrot.slane %v3157, 4
        %v3201 = vsel %vm2316, %v3181, %v3200
        %v3202 = vrot.slane %v3185, 4
        %v3203 = vsel %vm2316, %v3202, %v3161
        %v3204 = vrot.slane %v3161, 4
        %v3205 = vsel %vm2316, %v3185, %v3204
        %v3206 = vrot.slane %v3193, 4
        %v3207 = vsel %vm2316, %v3206, %v3169
        %v3208 = vrot.slane %v3169, 4
        %v3209 = vsel %vm2316, %v3193, %v3208
        %v3210 = vrot.slane %v3197, 4
        %v3211 = vsel %vm2316, %v3210, %v3173
        %v3212 = vrot.slane %v3173, 4
        %v3213 = vsel %vm2316, %v3197, %v3212
        %v3214 = vrot.slane %v1755, 4
        %v3215 = vsel %vm2316, %v3214, %v1617
        %v3216 = vrot.slane %v1617, 4
        %v3217 = vsel %vm2316, %v1755, %v3216
        %v3219 = vunpack.c.l.s4 1983009808
        %v3220 = vunpack.c.0.s8 %v3219
        %v3221 = vperm.slane %v3215, %v3220
        %v3223 = vunpack.c.l.s4 1983009808
        %v3224 = vunpack.c.0.s8 %v3223
        %v3225 = vperm.slane %v3217, %v3224
        %v3226 = vrot.slane %v2272, 4
        %v3227 = vsel %vm2316, %v3226, %v2254
        %v3228 = vrot.slane %v2254, 4
        %v3229 = vsel %vm2316, %v2272, %v3228
        %v3231 = vunpack.c.l.s4 1983009808
        %v3232 = vunpack.c.0.s8 %v3231
        %v3233 = vperm.slane %v3227, %v3232
        %v3235 = vunpack.c.l.s4 1983009808
        %v3236 = vunpack.c.0.s8 %v3235
        %v3237 = vperm.slane %v3229, %v3236
        %v3238 = vrot.slane %v2031, 4
        %v3239 = vsel %vm2316, %v3238, %v1893
        %v3240 = vrot.slane %v1893, 4
        %v3241 = vsel %vm2316, %v2031, %v3240
        %v3243 = vunpack.c.l.s4 1983009808
        %v3244 = vunpack.c.0.s8 %v3243
        %v3245 = vperm.slane %v3239, %v3244
        %v3247 = vunpack.c.l.s4 1983009808
        %v3248 = vunpack.c.0.s8 %v3247
        %v3249 = vperm.slane %v3241, %v3248
        %v3250 = vrot.slane %v2308, 4
        %v3251 = vsel %vm2316, %v3250, %v2290
        %v3252 = vrot.slane %v2290, 4
        %v3253 = vsel %vm2316, %v2308, %v3252
        %v3255 = vunpack.c.l.s4 1983009808
        %v3256 = vunpack.c.0.s8 %v3255
        %v3257 = vperm.slane %v3251, %v3256
        %v3259 = vunpack.c.l.s4 1983009808
        %v3260 = vunpack.c.0.s8 %v3259
        %v3261 = vperm.slane %v3253, %v3260
        %v3262 = vrot.slane %v3233, 4
        %v3263 = vsel %vm2316, %v3262, %v3221
        %v3264 = vrot.slane %v3221, 4
        %v3265 = vsel %vm2316, %v3233, %v3264
        %v3267 = vunpack.c.l.s4 1934713408
        %v3268 = vunpack.c.0.s8 %v3267
        %v3269 = vperm.slane %v3263, %v3268
        %v3271 = vunpack.c.l.s4 1934713408
        %v3272 = vunpack.c.0.s8 %v3271
        %v3273 = vperm.slane %v3265, %v3272
        %v3274 = vrot.slane %v3237, 4
        %v3275 = vsel %vm2316, %v3274, %v3225
        %v3276 = vrot.slane %v3225, 4
        %v3277 = vsel %vm2316, %v3237, %v3276
        %v3279 = vunpack.c.l.s4 1934713408
        %v3280 = vunpack.c.0.s8 %v3279
        %v3281 = vperm.slane %v3275, %v3280
        %v3283 = vunpack.c.l.s4 1934713408
        %v3284 = vunpack.c.0.s8 %v3283
        %v3285 = vperm.slane %v3277, %v3284
        %v3286 = vrot.slane %v3257, 4
        %v3287 = vsel %vm2316, %v3286, %v3245
        %v3288 = vrot.slane %v3245, 4
        %v3289 = vsel %vm2316, %v3257, %v3288
        %v3291 = vunpack.c.l.s4 1934713408
        %v3292 = vunpack.c.0.s8 %v3291
        %v3293 = vperm.slane %v3287, %v3292
        %v3295 = vunpack.c.l.s4 1934713408
        %v3296 = vunpack.c.0.s8 %v3295
        %v3297 = vperm.slane %v3289, %v3296
        %v3298 = vrot.slane %v3261, 4
        %v3299 = vsel %vm2316, %v3298, %v3249
        %v3300 = vrot.slane %v3249, 4
        %v3301 = vsel %vm2316, %v3261, %v3300
        %v3303 = vunpack.c.l.s4 1934713408
        %v3304 = vunpack.c.0.s8 %v3303
        %v3305 = vperm.slane %v3299, %v3304
        %v3307 = vunpack.c.l.s4 1934713408
        %v3308 = vunpack.c.0.s8 %v3307
        %v3309 = vperm.slane %v3301, %v3308
        %v3310 = vrot.slane %v3293, 4
        %v3311 = vsel %vm2316, %v3310, %v3269
        %v3312 = vrot.slane %v3269, 4
        %v3313 = vsel %vm2316, %v3293, %v3312
        %v3314 = vrot.slane %v3297, 4
        %v3315 = vsel %vm2316, %v3314, %v3273
        %v3316 = vrot.slane %v3273, 4
        %v3317 = vsel %vm2316, %v3297, %v3316
        %v3318 = vrot.slane %v3305, 4
        %v3319 = vsel %vm2316, %v3318, %v3281
        %v3320 = vrot.slane %v3281, 4
        %v3321 = vsel %vm2316, %v3305, %v3320
        %v3322 = vrot.slane %v3309, 4
        %v3323 = vsel %vm2316, %v3322, %v3285
        %v3324 = vrot.slane %v3285, 4
        %v3325 = vsel %vm2316, %v3309, %v3324
        %v3326 = vrot.slane %v2169, 4
        %v3327 = vsel %vm2316, 0.0, %v3326
        %v3329 = vunpack.c.l.s4 1983009808
        %v3330 = vunpack.c.0.s8 %v3329
        %v3331 = vperm.slane %v2169, %v3330
        %v3333 = vunpack.c.l.s4 1983009808
        %v3334 = vunpack.c.0.s8 %v3333
        %v3335 = vperm.slane %v3327, %v3334
        %v3336 = vrot.slane %v3331, 4
        %v3337 = vsel %vm2316, 0.0, %v3336
        %v3339 = vunpack.c.l.s4 1934713408
        %v3340 = vunpack.c.0.s8 %v3339
        %v3341 = vperm.slane %v3331, %v3340
        %v3343 = vunpack.c.l.s4 1934713408
        %v3344 = vunpack.c.0.s8 %v3343
        %v3345 = vperm.slane %v3337, %v3344
        %v3346 = vrot.slane %v3335, 4
        %v3347 = vsel %vm2316, 0.0, %v3346
        %v3349 = vunpack.c.l.s4 1934713408
        %v3350 = vunpack.c.0.s8 %v3349
        %v3351 = vperm.slane %v3335, %v3350
        %v3353 = vunpack.c.l.s4 1934713408
        %v3354 = vunpack.c.0.s8 %v3353
        %v3355 = vperm.slane %v3347, %v3354
        %v3356 = vrot.slane %v3341, 4
        %v3357 = vsel %vm2316, 0.0, %v3356
        %v3358 = vrot.slane %v3345, 4
        %v3359 = vsel %vm2316, 0.0, %v3358
        %v3360 = vrot.slane %v3351, 4
        %v3361 = vsel %vm2316, 0.0, %v3360
        %v3362 = vrot.slane %v3355, 4
        %v3363 = vsel %vm2316, 0.0, %v3362
        %v3364 = vld [vmem:[%s246] sm:$0xff]
        %v3365 = vld [vmem:[%s246 + $0x8] sm:$0xff]
        %v3366 = vld [vmem:[%s246 + $0x10] sm:$0xff]
        %v3367 = vld [vmem:[%s246 + $0x18] sm:$0xff]
        %v3368 = vld [vmem:[%s246 + $0x20] sm:$0x1]
        %v3369 = vld [vmem:[%s246 + $0x28] sm:$0x1]
        %v3370 = vadd.f32 %v2413, %v3364
        %v3371 = vadd.f32 %v2937, %v3365
        %v3372 = vadd.f32 %v2525, %v3366
        %v3373 = vadd.f32 %v3049, %v3367
        %v3374 = vadd.f32 %v2555, %v3368
        %v3375 = vadd.f32 %v3079, %v3369
        %v3376 = vperm.slane %v304, 0
        %v3377 = vperm.slane %v333, 0
        %v3378 = vmul.f32 %v3376, %v3370
        %v3379 = vmul.f32 %v3377, %v3371
        %v3380 = vmul.f32 %v3376, %v3372
        %v3381 = vmul.f32 %v3377, %v3373
        %v3382 = vmul.f32 %v3376, %v3374
        %v3383 = vmul.f32 %v3377, %v3375
        %s3384 = scalar_lea.vmem %s246, 48
        %v3385 = vld [vmem:[%s3384] sm:$0xff]
        %v3386 = vld [vmem:[%s3384 + $0x8] sm:$0xff]
        %v3387 = vld [vmem:[%s3384 + $0x10] sm:$0xff]
        %v3388 = vld [vmem:[%s3384 + $0x18] sm:$0xff]
        %v3389 = vld [vmem:[%s3384 + $0x20] sm:$0x1]
        %v3390 = vld [vmem:[%s3384 + $0x28] sm:$0x1]
        %v3391 = vadd.f32 %v2415, %v3385
        %v3392 = vadd.f32 %v2939, %v3386
        %v3393 = vadd.f32 %v2527, %v3387
        %v3394 = vadd.f32 %v3051, %v3388
        %v3395 = vadd.f32 %v2571, %v3389
        %v3396 = vadd.f32 %v3095, %v3390
        %v3397 = vperm.slane %v304, 1
        %v3398 = vperm.slane %v333, 1
        %v3399 = vmul.f32 %v3397, %v3391
        %v3400 = vmul.f32 %v3398, %v3392
        %v3401 = vmul.f32 %v3397, %v3393
        %v3402 = vmul.f32 %v3398, %v3394
        %v3403 = vmul.f32 %v3397, %v3395
        %v3404 = vmul.f32 %v3398, %v3396
        %v3405 = vadd.f32 %v3378, %v3399
        %v3406 = vadd.f32 %v3379, %v3400
        %v3407 = vadd.f32 %v3380, %v3401
        %v3408 = vadd.f32 %v3381, %v3402
        %v3409 = vadd.f32 %v3382, %v3403
        %v3410 = vadd.f32 %v3383, %v3404
        %s3411 = scalar_lea.vmem %s246, 96
        %v3412 = vld [vmem:[%s3411] sm:$0xff]
        %v3413 = vld [vmem:[%s3411 + $0x8] sm:$0xff]
        %v3414 = vld [vmem:[%s3411 + $0x10] sm:$0xff]
        %v3415 = vld [vmem:[%s3411 + $0x18] sm:$0xff]
        %v3416 = vld [vmem:[%s3411 + $0x20] sm:$0x1]
        %v3417 = vld [vmem:[%s3411 + $0x28] sm:$0x1]
        %v3418 = vadd.f32 %v2417, %v3412
        %v3419 = vadd.f32 %v2941, %v3413
        %v3420 = vadd.f32 %v2529, %v3414
        %v3421 = vadd.f32 %v3053, %v3415
        %v3422 = vadd.f32 %v2559, %v3416
        %v3423 = vadd.f32 %v3083, %v3417
        %v3424 = vperm.slane %v304, 2
        %v3425 = vperm.slane %v333, 2
        %v3426 = vmul.f32 %v3424, %v3418
        %v3427 = vmul.f32 %v3425, %v3419
        %v3428 = vmul.f32 %v3424, %v3420
        %v3429 = vmul.f32 %v3425, %v3421
        %v3430 = vmul.f32 %v3424, %v3422
        %v3431 = vmul.f32 %v3425, %v3423
        %v3432 = vadd.f32 %v3405, %v3426
        %v3433 = vadd.f32 %v3406, %v3427
        %v3434 = vadd.f32 %v3407, %v3428
        %v3435 = vadd.f32 %v3408, %v3429
        %v3436 = vadd.f32 %v3409, %v3430
        %v3437 = vadd.f32 %v3410, %v3431
        %s3438 = scalar_lea.vmem %s246, 144
        %v3439 = vld [vmem:[%s3438] sm:$0xff]
        %v3440 = vld [vmem:[%s3438 + $0x8] sm:$0xff]
        %v3441 = vld [vmem:[%s3438 + $0x10] sm:$0xff]
        %v3442 = vld [vmem:[%s3438 + $0x18] sm:$0xff]
        %v3443 = vld [vmem:[%s3438 + $0x20] sm:$0x1]
        %v3444 = vld [vmem:[%s3438 + $0x28] sm:$0x1]
        %v3445 = vadd.f32 %v2419, %v3439
        %v3446 = vadd.f32 %v2943, %v3440
        %v3447 = vadd.f32 %v2531, %v3441
        %v3448 = vadd.f32 %v3055, %v3442
        %v3449 = vadd.f32 %v2573, %v3443
        %v3450 = vadd.f32 %v3097, %v3444
        %v3451 = vperm.slane %v304, 3
        %v3452 = vperm.slane %v333, 3
        %v3453 = vmul.f32 %v3451, %v3445
        %v3454 = vmul.f32 %v3452, %v3446
        %v3455 = vmul.f32 %v3451, %v3447
        %v3456 = vmul.f32 %v3452, %v3448
        %v3457 = vmul.f32 %v3451, %v3449
        %v3458 = vmul.f32 %v3452, %v3450
        %v3459 = vadd.f32 %v3432, %v3453
        %v3460 = vadd.f32 %v3433, %v3454
        %v3461 = vadd.f32 %v3434, %v3455
        %v3462 = vadd.f32 %v3435, %v3456
        %v3463 = vadd.f32 %v3436, %v3457
        %v3464 = vadd.f32 %v3437, %v3458
        %s3465 = scalar_lea.vmem %s246, 192
        %v3466 = vld [vmem:[%s3465] sm:$0xff]
        %v3467 = vld [vmem:[%s3465 + $0x8] sm:$0xff]
        %v3468 = vld [vmem:[%s3465 + $0x10] sm:$0xff]
        %v3469 = vld [vmem:[%s3465 + $0x18] sm:$0xff]
        %v3470 = vld [vmem:[%s3465 + $0x20] sm:$0x1]
        %v3471 = vld [vmem:[%s3465 + $0x28] sm:$0x1]
        %v3472 = vadd.f32 %v2421, %v3466
        %v3473 = vadd.f32 %v2945, %v3467
        %v3474 = vadd.f32 %v2533, %v3468
        %v3475 = vadd.f32 %v3057, %v3469
        %v3476 = vadd.f32 %v2565, %v3470
        %v3477 = vadd.f32 %v3089, %v3471
        %v3478 = vperm.slane %v304, 4
        %v3479 = vperm.slane %v333, 4
        %v3480 = vmul.f32 %v3478, %v3472
        %v3481 = vmul.f32 %v3479, %v3473
        %v3482 = vmul.f32 %v3478, %v3474
        %v3483 = vmul.f32 %v3479, %v3475
        %v3484 = vmul.f32 %v3478, %v3476
        %v3485 = vmul.f32 %v3479, %v3477
        %v3486 = vadd.f32 %v3459, %v3480
        %v3487 = vadd.f32 %v3460, %v3481
        %v3488 = vadd.f32 %v3461, %v3482
        %v3489 = vadd.f32 %v3462, %v3483
        %v3490 = vadd.f32 %v3463, %v3484
        %v3491 = vadd.f32 %v3464, %v3485
        %s3492 = scalar_lea.vmem %s246, 240
        %v3493 = vld [vmem:[%s3492] sm:$0xff]
        %v3494 = vld [vmem:[%s3492 + $0x8] sm:$0xff]
        %v3495 = vld [vmem:[%s3492 + $0x10] sm:$0xff]
        %v3496 = vld [vmem:[%s3492 + $0x18] sm:$0xff]
        %v3497 = vld [vmem:[%s3492 + $0x20] sm:$0x1]
        %v3498 = vld [vmem:[%s3492 + $0x28] sm:$0x1]
        %v3499 = vadd.f32 %v2423, %v3493
        %v3500 = vadd.f32 %v2947, %v3494
        %v3501 = vadd.f32 %v2535, %v3495
        %v3502 = vadd.f32 %v3059, %v3496
        %v3503 = vadd.f32 %v2575, %v3497
        %v3504 = vadd.f32 %v3099, %v3498
        %v3505 = vperm.slane %v304, 5
        %v3506 = vperm.slane %v333, 5
        %v3507 = vmul.f32 %v3505, %v3499
        %v3508 = vmul.f32 %v3506, %v3500
        %v3509 = vmul.f32 %v3505, %v3501
        %v3510 = vmul.f32 %v3506, %v3502
        %v3511 = vmul.f32 %v3505, %v3503
        %v3512 = vmul.f32 %v3506, %v3504
        %v3513 = vadd.f32 %v3486, %v3507
        %v3514 = vadd.f32 %v3487, %v3508
        %v3515 = vadd.f32 %v3488, %v3509
        %v3516 = vadd.f32 %v3489, %v3510
        %v3517 = vadd.f32 %v3490, %v3511
        %v3518 = vadd.f32 %v3491, %v3512
        %s3519 = scalar_lea.vmem %s246, 288
        %v3520 = vld [vmem:[%s3519] sm:$0xff]
        %v3521 = vld [vmem:[%s3519 + $0x8] sm:$0xff]
        %v3522 = vld [vmem:[%s3519 + $0x10] sm:$0xff]
        %v3523 = vld [vmem:[%s3519 + $0x18] sm:$0xff]
        %v3524 = vld [vmem:[%s3519 + $0x20] sm:$0x1]
        %v3525 = vld [vmem:[%s3519 + $0x28] sm:$0x1]
        %v3526 = vadd.f32 %v2425, %v3520
        %v3527 = vadd.f32 %v2949, %v3521
        %v3528 = vadd.f32 %v2537, %v3522
        %v3529 = vadd.f32 %v3061, %v3523
        %v3530 = vadd.f32 %v2569, %v3524
        %v3531 = vadd.f32 %v3093, %v3525
        %v3532 = vperm.slane %v304, 6
        %v3533 = vperm.slane %v333, 6
        %v3534 = vmul.f32 %v3532, %v3526
        %v3535 = vmul.f32 %v3533, %v3527
        %v3536 = vmul.f32 %v3532, %v3528
        %v3537 = vmul.f32 %v3533, %v3529
        %v3538 = vmul.f32 %v3532, %v3530
        %v3539 = vmul.f32 %v3533, %v3531
        %v3540 = vadd.f32 %v3513, %v3534
        %v3541 = vadd.f32 %v3514, %v3535
        %v3542 = vadd.f32 %v3515, %v3536
        %v3543 = vadd.f32 %v3516, %v3537
        %v3544 = vadd.f32 %v3517, %v3538
        %v3545 = vadd.f32 %v3518, %v3539
        %s3546 = scalar_lea.vmem %s246, 336
        %v3547 = vld [vmem:[%s3546] sm:$0xff]
        %v3548 = vld [vmem:[%s3546 + $0x8] sm:$0xff]
        %v3549 = vld [vmem:[%s3546 + $0x10] sm:$0xff]
        %v3550 = vld [vmem:[%s3546 + $0x18] sm:$0xff]
        %v3551 = vld [vmem:[%s3546 + $0x20] sm:$0x1]
        %v3552 = vld [vmem:[%s3546 + $0x28] sm:$0x1]
        %v3553 = vadd.f32 %v2427, %v3547
        %v3554 = vadd.f32 %v2951, %v3548
        %v3555 = vadd.f32 %v2539, %v3549
        %v3556 = vadd.f32 %v3063, %v3550
        %v3557 = vadd.f32 %v2577, %v3551
        %v3558 = vadd.f32 %v3101, %v3552
        %v3559 = vperm.slane %v304, 7
        %v3560 = vperm.slane %v333, 7
        %v3561 = vmul.f32 %v3559, %v3553
        %v3562 = vmul.f32 %v3560, %v3554
        %v3563 = vmul.f32 %v3559, %v3555
        %v3564 = vmul.f32 %v3560, %v3556
        %v3565 = vmul.f32 %v3559, %v3557
        %v3566 = vmul.f32 %v3560, %v3558
        %v3567 = vadd.f32 %v3540, %v3561
        %v3568 = vadd.f32 %v3541, %v3562
        %v3569 = vadd.f32 %v3542, %v3563
        %v3570 = vadd.f32 %v3543, %v3564
        %v3571 = vadd.f32 %v3544, %v3565
        %v3572 = vadd.f32 %v3545, %v3566
        %v3573 = vsel %vm279, %v3571, -inf
        %v3574 = vmax.f32 %v3567, %v3573
        %v3575 = vmax.f32 %v3574, %v3569
        %v3576 = vrot.slane %v3575, 4
        %v3577 = vmax.f32 %v3575, %v3576
        %v3578 = vrot.slane %v3577, 2
        %v3579 = vmax.f32 %v3577, %v3578
        %v3580 = vrot.slane %v3579, 1
        %v3581 = vmax.f32 %v3579, %v3580
        %v3582 = vsel %vm968, %v3568, -inf
        %v3583 = vsel %vm968, %v3570, -inf
        %vm3584 = vcmask 516096
        %v3585 = vsel %vm3584, %v3572, -inf
        %v3586 = vmax.f32 %v3582, %v3585
        %v3587 = vmax.f32 %v3586, %v3583
        %v3588 = vrot.slane %v3587, 4
        %v3589 = vmax.f32 %v3587, %v3588
        %v3590 = vrot.slane %v3589, 2
        %v3591 = vmax.f32 %v3589, %v3590
        %v3592 = vrot.slane %v3591, 1
        %v3593 = vmax.f32 %v3591, %v3592
        %v3594 = vsub.f32 %v3567, %v3581
        %v3595 = vsub.f32 %v3568, %v3593
        %v3596 = vsub.f32 %v3569, %v3581
        %v3597 = vsub.f32 %v3570, %v3593
        %v3598 = vsub.f32 %v3571, %v3581
        %v3599 = vsub.f32 %v3572, %v3593
        %v3600 = vmul.f32 %v3594, 1.442695
        %v3601 = vpow.pop %v3600
        %v3602 = vmul.f32 %v3595, 1.442695
        %v3603 = vpow.pop %v3602
        %v3604 = vmul.f32 %v3596, 1.442695
        %v3605 = vpow.pop %v3604
        %v3606 = vmul.f32 %v3597, 1.442695
        %v3607 = vpow.pop %v3606
        %v3608 = vmul.f32 %v3598, 1.442695
        %v3609 = vpow.pop %v3608
        %v3610 = vmul.f32 %v3599, 1.442695
        %v3611 = vpow.pop %v3610
        %v3612 = vadd.f32 %v3601, %v3605
        %v3613 = vsel %vm279, %v3609, 0.0
        %v3614 = vadd.f32 %v3612, %v3613
        %v3615 = vrot.slane %v3614, 4
        %v3616 = vadd.f32 %v3614, %v3615
        %v3617 = vrot.slane %v3616, 2
        %v3618 = vadd.f32 %v3616, %v3617
        %v3619 = vrot.slane %v3618, 1
        %v3620 = vadd.f32 %v3618, %v3619
        %v3621 = vsel %vm968, %v3603, 0.0
        %v3622 = vsel %vm968, %v3607, 0.0
        %v3623 = vadd.f32 %v3621, %v3622
        %v3624 = vsel %vm3584, %v3611, 0.0
        %v3625 = vadd.f32 %v3623, %v3624
        %v3626 = vrot.slane %v3625, 4
        %v3627 = vadd.f32 %v3625, %v3626
        %v3628 = vrot.slane %v3627, 2
        %v3629 = vadd.f32 %v3627, %v3628
        %v3630 = vrot.slane %v3629, 1
        %v3631 = vadd.f32 %v3629, %v3630
        %v3632 = vrcp.pop %v3620
        %v3633 = vmul.f32 %v3620, %v3632
        %v3634 = vsub.f32 1.0, %v3633
        %v3635 = vmul.f32 %v3632, %v3634
        %v3636 = vadd.f32 %v3632, %v3635
        %vm3637 = vweird.f32 %v3620
        %vm3638 = vweird.f32 %v3632
        %vm3639 = vmor %vm3637, %vm3638
        %v3640 = vsel %vm3639, %v3632, %v3636
        %v3641 = vand.u32 2147483647, %v3620
        %vm3642 = vcmp.eq.f32.partialorder %v3641, 8.507059e+37
        %v3643 = vand.u32 %v3620, 2147483648
        %v3644 = vor.u32 1.1754944e-38, %v3643
        %v3645 = vsel %vm3642, %v3644, %v3640
        %v3646 = vrcp.pop %v3631
        %v3647 = vmul.f32 %v3631, %v3646
        %v3648 = vsub.f32 1.0, %v3647
        %v3649 = vmul.f32 %v3646, %v3648
        %v3650 = vadd.f32 %v3646, %v3649
        %vm3651 = vweird.f32 %v3631
        %vm3652 = vweird.f32 %v3646
        %vm3653 = vmor %vm3651, %vm3652
        %v3654 = vsel %vm3653, %v3646, %v3650
        %v3655 = vand.u32 2147483647, %v3631
        %vm3656 = vcmp.eq.f32.partialorder %v3655, 8.507059e+37
        %v3657 = vand.u32 %v3631, 2147483648
        %v3658 = vor.u32 1.1754944e-38, %v3657
        %v3659 = vsel %vm3656, %v3658, %v3654
        %v3660 = vmul.f32 %v3601, %v3645
        %v3661 = vmul.f32 %v3603, %v3659
        %v3662 = vmul.f32 %v3605, %v3645
        %v3663 = vmul.f32 %v3607, %v3659
        %v3664 = vmul.f32 %v3609, %v3645
        %v3665 = vmul.f32 %v3611, %v3659
        %3666 = vst [vmem:[%s251] sm:$0xff] %v3660
        %3667 = vst.msk [vmem:[%s251 + $0x8] sm:$0xff] %vm968, %v3661
        %3668 = vst [vmem:[%s251 + $0x10] sm:$0xff] %v3662
        %3669 = vst.msk [vmem:[%s251 + $0x18] sm:$0xff] %vm968, %v3663
        %3670 = vst [vmem:[%s251 + $0x20] sm:$0x1] %v3664
        %3671 = vst.msk [vmem:[%s251 + $0x28] sm:$0x1] %vm3584, %v3665
        %s3672 = scalar_lea.vmem %s246, 384
        %v3673 = vld [vmem:[%s3672] sm:$0xff]
        %v3674 = vld [vmem:[%s3672 + $0x8] sm:$0xff]
        %v3675 = vld [vmem:[%s3672 + $0x10] sm:$0xff]
        %v3676 = vld [vmem:[%s3672 + $0x18] sm:$0xff]
        %v3677 = vld [vmem:[%s3672 + $0x20] sm:$0x1]
        %v3678 = vld [vmem:[%s3672 + $0x28] sm:$0x1]
        %v3679 = vadd.f32 %v2675, %v3673
        %v3680 = vadd.f32 %v3199, %v3674
        %v3681 = vadd.f32 %v2787, %v3675
        %v3682 = vadd.f32 %v3311, %v3676
        %v3683 = vadd.f32 %v2817, %v3677
        %v3684 = vadd.f32 %v3341, %v3678
        %v3685 = vperm.slane %v307, 0
        %v3686 = vperm.slane %v336, 0
        %v3687 = vmul.f32 %v3685, %v3679
        %v3688 = vmul.f32 %v3686, %v3680
        %v3689 = vmul.f32 %v3685, %v3681
        %v3690 = vmul.f32 %v3686, %v3682
        %v3691 = vmul.f32 %v3685, %v3683
        %v3692 = vmul.f32 %v3686, %v3684
        %s3693 = scalar_lea.vmem %s246, 432
        %v3694 = vld [vmem:[%s3693] sm:$0xff]
        %v3695 = vld [vmem:[%s3693 + $0x8] sm:$0xff]
        %v3696 = vld [vmem:[%s3693 + $0x10] sm:$0xff]
        %v3697 = vld [vmem:[%s3693 + $0x18] sm:$0xff]
        %v3698 = vld [vmem:[%s3693 + $0x20] sm:$0x1]
        %v3699 = vld [vmem:[%s3693 + $0x28] sm:$0x1]
        %v3700 = vadd.f32 %v2677, %v3694
        %v3701 = vadd.f32 %v3201, %v3695
        %v3702 = vadd.f32 %v2789, %v3696
        %v3703 = vadd.f32 %v3313, %v3697
        %v3704 = vadd.f32 %v2833, %v3698
        %v3705 = vadd.f32 %v3357, %v3699
        %v3706 = vperm.slane %v307, 1
        %v3707 = vperm.slane %v336, 1
        %v3708 = vmul.f32 %v3706, %v3700
        %v3709 = vmul.f32 %v3707, %v3701
        %v3710 = vmul.f32 %v3706, %v3702
        %v3711 = vmul.f32 %v3707, %v3703
        %v3712 = vmul.f32 %v3706, %v3704
        %v3713 = vmul.f32 %v3707, %v3705
        %v3714 = vadd.f32 %v3687, %v3708
        %v3715 = vadd.f32 %v3688, %v3709
        %v3716 = vadd.f32 %v3689, %v3710
        %v3717 = vadd.f32 %v3690, %v3711
        %v3718 = vadd.f32 %v3691, %v3712
        %v3719 = vadd.f32 %v3692, %v3713
        %s3720 = scalar_lea.vmem %s246, 480
        %v3721 = vld [vmem:[%s3720] sm:$0xff]
        %v3722 = vld [vmem:[%s3720 + $0x8] sm:$0xff]
        %v3723 = vld [vmem:[%s3720 + $0x10] sm:$0xff]
        %v3724 = vld [vmem:[%s3720 + $0x18] sm:$0xff]
        %v3725 = vld [vmem:[%s3720 + $0x20] sm:$0x1]
        %v3726 = vld [vmem:[%s3720 + $0x28] sm:$0x1]
        %v3727 = vadd.f32 %v2679, %v3721
        %v3728 = vadd.f32 %v3203, %v3722
        %v3729 = vadd.f32 %v2791, %v3723
        %v3730 = vadd.f32 %v3315, %v3724
        %v3731 = vadd.f32 %v2821, %v3725
        %v3732 = vadd.f32 %v3345, %v3726
        %v3733 = vperm.slane %v307, 2
        %v3734 = vperm.slane %v336, 2
        %v3735 = vmul.f32 %v3733, %v3727
        %v3736 = vmul.f32 %v3734, %v3728
        %v3737 = vmul.f32 %v3733, %v3729
        %v3738 = vmul.f32 %v3734, %v3730
        %v3739 = vmul.f32 %v3733, %v3731
        %v3740 = vmul.f32 %v3734, %v3732
        %v3741 = vadd.f32 %v3714, %v3735
        %v3742 = vadd.f32 %v3715, %v3736
        %v3743 = vadd.f32 %v3716, %v3737
        %v3744 = vadd.f32 %v3717, %v3738
        %v3745 = vadd.f32 %v3718, %v3739
        %v3746 = vadd.f32 %v3719, %v3740
        %s3747 = scalar_lea.vmem %s246, 528
        %v3748 = vld [vmem:[%s3747] sm:$0xff]
        %v3749 = vld [vmem:[%s3747 + $0x8] sm:$0xff]
        %v3750 = vld [vmem:[%s3747 + $0x10] sm:$0xff]
        %v3751 = vld [vmem:[%s3747 + $0x18] sm:$0xff]
        %v3752 = vld [vmem:[%s3747 + $0x20] sm:$0x1]
        %v3753 = vld [vmem:[%s3747 + $0x28] sm:$0x1]
        %v3754 = vadd.f32 %v2681, %v3748
        %v3755 = vadd.f32 %v3205, %v3749
        %v3756 = vadd.f32 %v2793, %v3750
        %v3757 = vadd.f32 %v3317, %v3751
        %v3758 = vadd.f32 %v2835, %v3752
        %v3759 = vadd.f32 %v3359, %v3753
        %v3760 = vperm.slane %v307, 3
        %v3761 = vperm.slane %v336, 3
        %v3762 = vmul.f32 %v3760, %v3754
        %v3763 = vmul.f32 %v3761, %v3755
        %v3764 = vmul.f32 %v3760, %v3756
        %v3765 = vmul.f32 %v3761, %v3757
        %v3766 = vmul.f32 %v3760, %v3758
        %v3767 = vmul.f32 %v3761, %v3759
        %v3768 = vadd.f32 %v3741, %v3762
        %v3769 = vadd.f32 %v3742, %v3763
        %v3770 = vadd.f32 %v3743, %v3764
        %v3771 = vadd.f32 %v3744, %v3765
        %v3772 = vadd.f32 %v3745, %v3766
        %v3773 = vadd.f32 %v3746, %v3767
        %s3774 = scalar_lea.vmem %s246, 576
        %v3775 = vld [vmem:[%s3774] sm:$0xff]
        %v3776 = vld [vmem:[%s3774 + $0x8] sm:$0xff]
        %v3777 = vld [vmem:[%s3774 + $0x10] sm:$0xff]
        %v3778 = vld [vmem:[%s3774 + $0x18] sm:$0xff]
        %v3779 = vld [vmem:[%s3774 + $0x20] sm:$0x1]
        %v3780 = vld [vmem:[%s3774 + $0x28] sm:$0x1]
        %v3781 = vadd.f32 %v2683, %v3775
        %v3782 = vadd.f32 %v3207, %v3776
        %v3783 = vadd.f32 %v2795, %v3777
        %v3784 = vadd.f32 %v3319, %v3778
        %v3785 = vadd.f32 %v2827, %v3779
        %v3786 = vadd.f32 %v3351, %v3780
        %v3787 = vperm.slane %v307, 4
        %v3788 = vperm.slane %v336, 4
        %v3789 = vmul.f32 %v3787, %v3781
        %v3790 = vmul.f32 %v3788, %v3782
        %v3791 = vmul.f32 %v3787, %v3783
        %v3792 = vmul.f32 %v3788, %v3784
        %v3793 = vmul.f32 %v3787, %v3785
        %v3794 = vmul.f32 %v3788, %v3786
        %v3795 = vadd.f32 %v3768, %v3789
        %v3796 = vadd.f32 %v3769, %v3790
        %v3797 = vadd.f32 %v3770, %v3791
        %v3798 = vadd.f32 %v3771, %v3792
        %v3799 = vadd.f32 %v3772, %v3793
        %v3800 = vadd.f32 %v3773, %v3794
        %s3801 = scalar_lea.vmem %s246, 624
        %v3802 = vld [vmem:[%s3801] sm:$0xff]
        %v3803 = vld [vmem:[%s3801 + $0x8] sm:$0xff]
        %v3804 = vld [vmem:[%s3801 + $0x10] sm:$0xff]
        %v3805 = vld [vmem:[%s3801 + $0x18] sm:$0xff]
        %v3806 = vld [vmem:[%s3801 + $0x20] sm:$0x1]
        %v3807 = vld [vmem:[%s3801 + $0x28] sm:$0x1]
        %v3808 = vadd.f32 %v2685, %v3802
        %v3809 = vadd.f32 %v3209, %v3803
        %v3810 = vadd.f32 %v2797, %v3804
        %v3811 = vadd.f32 %v3321, %v3805
        %v3812 = vadd.f32 %v2837, %v3806
        %v3813 = vadd.f32 %v3361, %v3807
        %v3814 = vperm.slane %v307, 5
        %v3815 = vperm.slane %v336, 5
        %v3816 = vmul.f32 %v3814, %v3808
        %v3817 = vmul.f32 %v3815, %v3809
        %v3818 = vmul.f32 %v3814, %v3810
        %v3819 = vmul.f32 %v3815, %v3811
        %v3820 = vmul.f32 %v3814, %v3812
        %v3821 = vmul.f32 %v3815, %v3813
        %v3822 = vadd.f32 %v3795, %v3816
        %v3823 = vadd.f32 %v3796, %v3817
        %v3824 = vadd.f32 %v3797, %v3818
        %v3825 = vadd.f32 %v3798, %v3819
        %v3826 = vadd.f32 %v3799, %v3820
        %v3827 = vadd.f32 %v3800, %v3821
        %s3828 = scalar_lea.vmem %s246, 672
        %v3829 = vld [vmem:[%s3828] sm:$0xff]
        %v3830 = vld [vmem:[%s3828 + $0x8] sm:$0xff]
        %v3831 = vld [vmem:[%s3828 + $0x10] sm:$0xff]
        %v3832 = vld [vmem:[%s3828 + $0x18] sm:$0xff]
        %v3833 = vld [vmem:[%s3828 + $0x20] sm:$0x1]
        %v3834 = vld [vmem:[%s3828 + $0x28] sm:$0x1]
        %v3835 = vadd.f32 %v2687, %v3829
        %v3836 = vadd.f32 %v3211, %v3830
        %v3837 = vadd.f32 %v2799, %v3831
        %v3838 = vadd.f32 %v3323, %v3832
        %v3839 = vadd.f32 %v2831, %v3833
        %v3840 = vadd.f32 %v3355, %v3834
        %v3841 = vperm.slane %v307, 6
        %v3842 = vperm.slane %v336, 6
        %v3843 = vmul.f32 %v3841, %v3835
        %v3844 = vmul.f32 %v3842, %v3836
        %v3845 = vmul.f32 %v3841, %v3837
        %v3846 = vmul.f32 %v3842, %v3838
        %v3847 = vmul.f32 %v3841, %v3839
        %v3848 = vmul.f32 %v3842, %v3840
        %v3849 = vadd.f32 %v3822, %v3843
        %v3850 = vadd.f32 %v3823, %v3844
        %v3851 = vadd.f32 %v3824, %v3845
        %v3852 = vadd.f32 %v3825, %v3846
        %v3853 = vadd.f32 %v3826, %v3847
        %v3854 = vadd.f32 %v3827, %v3848
        %s3855 = scalar_lea.vmem %s246, 720
        %v3856 = vld [vmem:[%s3855] sm:$0xff]
        %v3857 = vld [vmem:[%s3855 + $0x8] sm:$0xff]
        %v3858 = vld [vmem:[%s3855 + $0x10] sm:$0xff]
        %v3859 = vld [vmem:[%s3855 + $0x18] sm:$0xff]
        %v3860 = vld [vmem:[%s3855 + $0x20] sm:$0x1]
        %v3861 = vld [vmem:[%s3855 + $0x28] sm:$0x1]
        %v3862 = vadd.f32 %v2689, %v3856
        %v3863 = vadd.f32 %v3213, %v3857
        %v3864 = vadd.f32 %v2801, %v3858
        %v3865 = vadd.f32 %v3325, %v3859
        %v3866 = vadd.f32 %v2839, %v3860
        %v3867 = vadd.f32 %v3363, %v3861
        %v3868 = vperm.slane %v307, 7
        %v3869 = vperm.slane %v336, 7
        %v3870 = vmul.f32 %v3868, %v3862
        %v3871 = vmul.f32 %v3869, %v3863
        %v3872 = vmul.f32 %v3868, %v3864
        %v3873 = vmul.f32 %v3869, %v3865
        %v3874 = vmul.f32 %v3868, %v3866
        %v3875 = vmul.f32 %v3869, %v3867
        %v3876 = vadd.f32 %v3849, %v3870
        %v3877 = vadd.f32 %v3850, %v3871
        %v3878 = vadd.f32 %v3851, %v3872
        %v3879 = vadd.f32 %v3852, %v3873
        %v3880 = vadd.f32 %v3853, %v3874
        %v3881 = vadd.f32 %v3854, %v3875
        %v3882 = vsel %vm279, %v3880, -inf
        %v3883 = vmax.f32 %v3876, %v3882
        %v3884 = vmax.f32 %v3883, %v3878
        %v3885 = vrot.slane %v3884, 4
        %v3886 = vmax.f32 %v3884, %v3885
        %v3887 = vrot.slane %v3886, 2
        %v3888 = vmax.f32 %v3886, %v3887
        %v3889 = vrot.slane %v3888, 1
        %v3890 = vmax.f32 %v3888, %v3889
        %v3891 = vsel %vm968, %v3877, -inf
        %v3892 = vsel %vm968, %v3879, -inf
        %v3893 = vsel %vm3584, %v3881, -inf
        %v3894 = vmax.f32 %v3891, %v3893
        %v3895 = vmax.f32 %v3894, %v3892
        %v3896 = vrot.slane %v3895, 4
        %v3897 = vmax.f32 %v3895, %v3896
        %v3898 = vrot.slane %v3897, 2
        %v3899 = vmax.f32 %v3897, %v3898
        %v3900 = vrot.slane %v3899, 1
        %v3901 = vmax.f32 %v3899, %v3900
        %v3902 = vsub.f32 %v3876, %v3890
        %v3903 = vsub.f32 %v3877, %v3901
        %v3904 = vsub.f32 %v3878, %v3890
        %v3905 = vsub.f32 %v3879, %v3901
        %v3906 = vsub.f32 %v3880, %v3890
        %v3907 = vsub.f32 %v3881, %v3901
        %v3908 = vmul.f32 %v3902, 1.442695
        %v3909 = vpow.pop %v3908
        %v3910 = vmul.f32 %v3903, 1.442695
        %v3911 = vpow.pop %v3910
        %v3912 = vmul.f32 %v3904, 1.442695
        %v3913 = vpow.pop %v3912
        %v3914 = vmul.f32 %v3905, 1.442695
        %v3915 = vpow.pop %v3914
        %v3916 = vmul.f32 %v3906, 1.442695
        %v3917 = vpow.pop %v3916
        %v3918 = vmul.f32 %v3907, 1.442695
        %v3919 = vpow.pop %v3918
        %v3920 = vadd.f32 %v3909, %v3913
        %v3921 = vsel %vm279, %v3917, 0.0
        %v3922 = vadd.f32 %v3920, %v3921
        %v3923 = vrot.slane %v3922, 4
        %v3924 = vadd.f32 %v3922, %v3923
        %v3925 = vrot.slane %v3924, 2
        %v3926 = vadd.f32 %v3924, %v3925
        %v3927 = vrot.slane %v3926, 1
        %v3928 = vadd.f32 %v3926, %v3927
        %v3929 = vsel %vm968, %v3911, 0.0
        %v3930 = vsel %vm968, %v3915, 0.0
        %v3931 = vadd.f32 %v3929, %v3930
        %v3932 = vsel %vm3584, %v3919, 0.0
        %v3933 = vadd.f32 %v3931, %v3932
        %v3934 = vrot.slane %v3933, 4
        %v3935 = vadd.f32 %v3933, %v3934
        %v3936 = vrot.slane %v3935, 2
        %v3937 = vadd.f32 %v3935, %v3936
        %v3938 = vrot.slane %v3937, 1
        %v3939 = vadd.f32 %v3937, %v3938
        %v3940 = vrcp.pop %v3928
        %v3941 = vmul.f32 %v3928, %v3940
        %v3942 = vsub.f32 1.0, %v3941
        %v3943 = vmul.f32 %v3940, %v3942
        %v3944 = vadd.f32 %v3940, %v3943
        %vm3945 = vweird.f32 %v3928
        %vm3946 = vweird.f32 %v3940
        %vm3947 = vmor %vm3945, %vm3946
        %v3948 = vsel %vm3947, %v3940, %v3944
        %v3949 = vand.u32 2147483647, %v3928
        %vm3950 = vcmp.eq.f32.partialorder %v3949, 8.507059e+37
        %v3951 = vand.u32 %v3928, 2147483648
        %v3952 = vor.u32 1.1754944e-38, %v3951
        %v3953 = vsel %vm3950, %v3952, %v3948
        %v3954 = vrcp.pop %v3939
        %v3955 = vmul.f32 %v3939, %v3954
        %v3956 = vsub.f32 1.0, %v3955
        %v3957 = vmul.f32 %v3954, %v3956
        %v3958 = vadd.f32 %v3954, %v3957
        %vm3959 = vweird.f32 %v3939
        %vm3960 = vweird.f32 %v3954
        %vm3961 = vmor %vm3959, %vm3960
        %v3962 = vsel %vm3961, %v3954, %v3958
        %v3963 = vand.u32 2147483647, %v3939
        %vm3964 = vcmp.eq.f32.partialorder %v3963, 8.507059e+37
        %v3965 = vand.u32 %v3939, 2147483648
        %v3966 = vor.u32 1.1754944e-38, %v3965
        %v3967 = vsel %vm3964, %v3966, %v3962
        %v3968 = vmul.f32 %v3909, %v3953
        %v3969 = vmul.f32 %v3911, %v3967
        %v3970 = vmul.f32 %v3913, %v3953
        %v3971 = vmul.f32 %v3915, %v3967
        %v3972 = vmul.f32 %v3917, %v3953
        %v3973 = vmul.f32 %v3919, %v3967
        %s3974 = scalar_lea.vmem %s251, 48
        %3975 = vst [vmem:[%s3974] sm:$0xff] %v3968
        %3976 = vst.msk [vmem:[%s3974 + $0x8] sm:$0xff] %vm968, %v3969
        %3977 = vst [vmem:[%s3974 + $0x10] sm:$0xff] %v3970
        %3978 = vst.msk [vmem:[%s3974 + $0x18] sm:$0xff] %vm968, %v3971
        %3979 = vst [vmem:[%s3974 + $0x20] sm:$0x1] %v3972
        %3980 = vst.msk [vmem:[%s3974 + $0x28] sm:$0x1] %vm3584, %v3973
        %p3981 = scmp.lt.s32.totalorder %s17, 1
        %s3982 = scalar_select %p3981, %s17, 1
        %s3983 = smul.addr %s3982, 12
        %s3984 = smul.addr %s3983, 8
        %s3985 = scalar_lea.vmem %s4, %s3984
        // Predicated region
        $region45: #{tpu_custom_call.1} parent=35 // pred_check
          %p3986 = pneg %p129
        $region46: #{tpu_custom_call.1} parent=35 // pred_check_branch
          %3988 = sbr.rel (%p3986) target = $region48
        $region47: #{tpu_custom_call.1} parent=35 // pred_region
          _
        $region48: #{tpu_custom_call.1} parent=35 // pred_fallthru
          _
      $region36: #{tpu_custom_call.1} parent=5 // pred_fallthru
        _
      %p3989 = scmp.le.s32.totalorder 2, %s12
      // Predicated region
      $region49: #{tpu_custom_call.1} parent=5 // pred_check
        %p3990 = pneg %p3989
      $region50: #{tpu_custom_call.1} parent=5 // pred_check_branch
        %3992 = sbr.rel (%p3990) target = $region52
      $region51: #{tpu_custom_call.1} parent=5 // pred_region
        %s3993 = ssub.s32 %s12, 2
        // Predicated region
        $region53: #{tpu_custom_call.1} parent=51 // pred_check
          %p3994 = pneg %p135
        $region54: #{tpu_custom_call.1} parent=51 // pred_check_branch
          %3996 = sbr.rel (%p3994) target = $region56
        $region55: #{tpu_custom_call.1} parent=51 // pred_region
          %p3997 = scmp.lt.s32.totalorder %s18, 1
          %s3998 = scalar_select %p3997, %s18, 1
          %s3999 = smul.addr %s3998, 12
          %s4000 = smul.addr %s3999, 8
          %s4001 = scalar_lea.vmem %s4, %s4000
        $region56: #{tpu_custom_call.1} parent=51 // pred_fallthru
          _
      $region52: #{tpu_custom_call.1} parent=5 // pred_fallthru
        _
    $region6: #{tpu_custom_call.1} parent=1 // loop_footer
      %s16 = sadd.s32 1, %s12
    $region7: #{tpu_custom_call.1} parent=1 // loop_footer_branch
      %11 = sbr.rel target = $region3
    $region8: #{tpu_custom_call.1} parent=1 // loop_exit
      _
    %4002 = vsyncpa [#allocation3], 1
    %s4003 = scalar_lea.sflag [#allocation3], 1
    %4004 = vsyncpa %s4003, 1
    %4005 = vsyncpa [#allocation5], 1

</llo_original>
